<compile_context>
chip_gen: v7x
topology: tpu7x:2x2x1
jax: 0.10.0
libtpu: 0.0.40
codegen_flags: <defaults>
</compile_context>

<pallas_src>
import functools

import jax
import jax.numpy as jnp
from jax.experimental import pallas as pl
from jax.experimental.pallas import tpu as pltpu

LANES = 128  # TPU lane width.


def _basic_block_kernel(x_ref, w1_ref, s1_ref, b1_ref, w2_ref, s2_ref, b2_ref,
                        out_ref, pad_scr):
    """One image per grid step (grid axis = batch, marked 'parallel').

    x_ref   : (1, H, W, Cin)      f32   unpadded input tile
    w1_ref  : (Kd, CP)            bf16  conv1 weights, dense im2col rows
                                        (row = (kw, kh, cin)), zero-padded
    s1_ref  : (1, CP)             f32   folded BN1 scale  (gamma / sqrt(var+eps))
    b1_ref  : (1, CP)             f32   folded BN1 bias   ((conv_b-mean)*scale+beta)
    w2_ref  : (Kd, CP)            bf16  conv2 weights
    s2_ref, b2_ref                f32   folded BN2 scale / bias
    out_ref : (1, H, W, CP)       f32   lane-dense output (channels padded to CP)
    pad_scr : (H+2, W+2, Cin)     bf16  spatially padded buffer (reused for conv2)
    """
    H, W, CP = out_ref.shape[1], out_ref.shape[2], out_ref.shape[3]
    Cin = x_ref.shape[3]
    M = H * W
    Kd = w1_ref.shape[0]          # dense im2col K, rounded up to a lane tile
    Kfill = Kd - 9 * Cin          # zero filler lanes (static)
    f32 = jnp.float32
    bf16 = jnp.bfloat16

    def conv3x3(w_ref):
        # Dense im2col: 3 unaligned kw strips; each strip's 3 kh shifts are
        # free major-axis slices.  Patch is (M, 9*Cin [+ zero filler]) bf16,
        # contracted in ONE MXU dot with f32 accumulation.
        pieces = []
        for kw in range(3):
            strip = pad_scr[:, kw:kw + W, :]          # (H+2, W, Cin) bf16
            for kh in range(3):
                pieces.append(strip[kh:kh + H])        # (H, W, Cin), free slice
        if Kfill > 0:
            pieces.append(jnp.zeros((H, W, Kfill), bf16))
        patch = jnp.concatenate(pieces, axis=-1).reshape(M, Kd)   # (M, Kd) bf16
        return jnp.dot(patch, w_ref[...],
                       preferred_element_type=f32)                 # (M, CP) f32

    # ---- in-kernel zero padding (no host-side jnp.pad) --------------------
    # Border zeroed EVERY step (megacore-safe); interior is fully overwritten.
    zrow = jnp.zeros((1, W + 2, Cin), bf16)
    zcol = jnp.zeros((H, 1, Cin), bf16)
    pad_scr[0:1, :, :] = zrow
    pad_scr[H + 1:H + 2, :, :] = zrow
    pad_scr[1:H + 1, 0:1, :] = zcol
    pad_scr[1:H + 1, W + 1:W + 2, :] = zcol

    # Interior: x cast once to bf16 (MXU operand precision); no lane padding
    # needed since the scratch holds exactly Cin channels (lane-dense store).
    pad_scr[1:H + 1, 1:W + 1, :] = x_ref[0].astype(bf16)

    # ---- conv1 -> folded BN1 -> ReLU  (f32 on the VPU) ---------------------
    h1 = jnp.maximum(conv3x3(w1_ref) * s1_ref[...] + b1_ref[...], 0.0)  # (M,CP)

    # Only the first Cin output channels are real (padded weight/scale/bias
    # lanes are zero -> h1[:, Cin:] == 0), so write only those back (bf16).
    pad_scr[1:H + 1, 1:W + 1, :] = (
        h1[:, :Cin].astype(bf16).reshape(H, W, Cin))

    # ---- conv2 -> folded BN2 (reuse padded scratch; border already zero) ---
    h2 = conv3x3(w2_ref) * s2_ref[...] + b2_ref[...]                    # (M,CP)

    # ---- residual add + ReLU ------------------------------------------------
    # Residual re-read late from x_ref (exact f32, never bf16-rounded); padded
    # channels of h2 are zero so zero-extending the residual keeps them zero.
    res = x_ref[0].reshape(M, Cin)
    if Cin < CP:
        res = jnp.concatenate([res, jnp.zeros((M, CP - Cin), f32)], axis=-1)
    out = jnp.maximum(h2 + res, 0.0)
    out_ref[...] = out.reshape(1, H, W, CP).astype(out_ref.dtype)


def _fold_bn(conv_bias, gamma, beta, mean, var, eps):
    scale = gamma / jnp.sqrt(var + eps)
    bias = (conv_bias - mean) * scale + beta
    return scale, bias


def _pack_conv_weights(w, cp, kd):
    """(3, 3, cin, cout) HWIO -> dense (kd, cp) bf16 im2col matrix.

    Row ordering matches the kernel's patch lane ordering: (kw, kh, cin).
    Only the first 9*cin rows / cout columns are nonzero.
    """
    kh, kw, cin, cout = w.shape
    rows = jnp.transpose(w, (1, 0, 2, 3)).reshape(kh * kw * cin, cout)
    wp = jnp.zeros((kd, cp), jnp.float32).at[:kh * kw * cin, :cout].set(rows)
    return wp.astype(jnp.bfloat16)


@functools.partial(jax.jit, static_argnames=("eps",))
def basic_block_pallas(x_nhwc, w1, cb1, g1, be1, m1, v1,
                       w2, cb2, g2, be2, m2, v2, eps=1e-5):
    """BasicBlock forward (stride=1, dilation=1, downsample=None), NHWC."""
    N, H, W, Cin = x_nhwc.shape
    planes = w1.shape[-1]
    if Cin != planes:
        # With downsample=None the residual add requires inplanes == planes.
        raise NotImplementedError(
            "Pallas BasicBlock kernel requires inplanes == planes "
            "(downsample=None path).")
    CP = max(LANES, -(-planes // LANES) * LANES)     # lane-padded out channels
    Kd = -(-(9 * planes) // LANES) * LANES           # dense im2col K (lane tile)

    s1, b1 = _fold_bn(cb1, g1, be1, m1, v1, eps)
    s2, b2 = _fold_bn(cb2, g2, be2, m2, v2, eps)

    def pad_vec(v):
        return jnp.zeros((1, CP), jnp.float32).at[0, :planes].set(v)

    w1m = _pack_conv_weights(w1, CP, Kd)     # bf16, dense K: tiny weight DMA
    w2m = _pack_conv_weights(w2, CP, Kd)
    s1p, b1p, s2p, b2p = pad_vec(s1), pad_vec(b1), pad_vec(s2), pad_vec(b2)

    grid_spec = pltpu.PrefetchScalarGridSpec(
        num_scalar_prefetch=0,
        grid=(N,),   # one image per step; 'parallel' => v7x's 2 TCs split it
        in_specs=[
            pl.BlockSpec((1, H, W, Cin), lambda n: (n, 0, 0, 0)),
            pl.BlockSpec((Kd, CP), lambda n: (0, 0)),
            pl.BlockSpec((1, CP), lambda n: (0, 0)),
            pl.BlockSpec((1, CP), lambda n: (0, 0)),
            pl.BlockSpec((Kd, CP), lambda n: (0, 0)),
            pl.BlockSpec((1, CP), lambda n: (0, 0)),
            pl.BlockSpec((1, CP), lambda n: (0, 0)),
        ],
        out_specs=pl.BlockSpec((1, H, W, CP), lambda n: (n, 0, 0, 0)),
        scratch_shapes=[pltpu.VMEM((H + 2, W + 2, Cin), jnp.bfloat16)],
    )

    out_padded = pl.pallas_call(
        _basic_block_kernel,
        out_shape=jax.ShapeDtypeStruct((N, H, W, CP), x_nhwc.dtype),
        grid_spec=grid_spec,
        compiler_params=pltpu.CompilerParams(
            dimension_semantics=("parallel",),
            # Per-step footprint (dense weights + bf16 scratch + lane-dense
            # blocks + the small dense patch) is well under 1 MiB here.
            vmem_limit_bytes=32 * 1024 * 1024),
    )(x_nhwc, w1m, s1p, b1p, w2m, s2p, b2p)

    # Drop the lane padding (cheap slice of a tiny array).  When chaining
    # blocks, keep the padded layout instead (see TODO at top).
    return out_padded[..., :planes]


def reference_basic_block(x, w1, cb1, g1, be1, m1, v1,
                          w2, cb2, g2, be2, m2, v2,
                          eps=1e-5, matmul_dtype=jnp.float32):
    """Pure-JAX reference (NHWC / HWIO), eval-mode BatchNorm.

    matmul_dtype=jnp.bfloat16 mirrors the kernel's MXU operand rounding
    (accumulation and all elementwise math stay f32).
    """
    def conv(x, w, b):
        xq = x.astype(matmul_dtype).astype(jnp.float32)
        wq = w.astype(matmul_dtype).astype(jnp.float32)
        y = jax.lax.conv_general_dilated(
            xq, wq, window_strides=(1, 1), padding=((1, 1), (1, 1)),
            dimension_numbers=("NHWC", "HWIO", "NHWC"))
        return y + b

    def bn(x, g, be, m, v):
        return (x - m) / jnp.sqrt(v + eps) * g + be

    out = jax.nn.relu(bn(conv(x, w1, cb1), g1, be1, m1, v1))
    out = bn(conv(out, w2, cb2), g2, be2, m2, v2)
    return jax.nn.relu(out + x)


if __name__ == "__main__":
    N, C, H, W = 2, 4, 16, 16      # inplanes == planes == 4, stride=1
    eps = 1e-5

    key = jax.random.PRNGKey(0)
    ks = jax.random.split(key, 12)

    # PyTorch input is NCHW [2, 4, 16, 16]; the kernel works in NHWC.
    x_nchw = jax.random.normal(ks[0], (N, C, H, W), jnp.float32)
    x = jnp.transpose(x_nchw, (0, 2, 3, 1))  # NHWC

    # Deterministic synthetic parameters (conv3x3 has bias=True by default).
    w1 = jax.random.normal(ks[1], (3, 3, C, C), jnp.float32) * 0.1   # HWIO
    cb1 = jax.random.normal(ks[2], (C,), jnp.float32) * 0.1
    g1 = 1.0 + 0.1 * jax.random.normal(ks[3], (C,), jnp.float32)
    be1 = 0.1 * jax.random.normal(ks[4], (C,), jnp.float32)
    m1 = 0.1 * jax.random.normal(ks[5], (C,), jnp.float32)
    v1 = 1.0 + 0.1 * jax.random.uniform(ks[6], (C,), jnp.float32)

    w2 = jax.random.normal(ks[7], (3, 3, C, C), jnp.float32) * 0.1
    cb2 = jax.random.normal(ks[8], (C,), jnp.float32) * 0.1
    g2 = 1.0 + 0.1 * jax.random.normal(ks[9], (C,), jnp.float32)
    be2 = 0.1 * jax.random.normal(ks[10], (C,), jnp.float32)
    m2 = 0.1 * jax.random.normal(ks[11], (C,), jnp.float32)
    v2 = 1.0 + 0.1 * jax.random.uniform(key, (C,), jnp.float32)

    out = basic_block_pallas(x, w1, cb1, g1, be1, m1, v1,
                             w2, cb2, g2, be2, m2, v2, eps=eps)
    out = jax.block_until_ready(out)
    assert out.shape == (N, H, W, C)

    # Check vs a reference with identical bf16 MXU operand rounding.
    ref_bf16 = reference_basic_block(x, w1, cb1, g1, be1, m1, v1,
                                     w2, cb2, g2, be2, m2, v2,
                                     eps=eps, matmul_dtype=jnp.bfloat16)
    ref_bf16 = jax.block_until_ready(ref_bf16)
    assert jnp.allclose(out, ref_bf16, atol=5e-3, rtol=5e-3), (
        float(jnp.max(jnp.abs(out - ref_bf16))))

    # Sanity check vs the pure-f32 reference (difference = bf16 rounding only).
    ref_f32 = reference_basic_block(x, w1, cb1, g1, be1, m1, v1,
                                    w2, cb2, g2, be2, m2, v2, eps=eps)
    ref_f32 = jax.block_until_ready(ref_f32)
    assert jnp.allclose(out, ref_f32, atol=1e-1, rtol=1e-1), (
        float(jnp.max(jnp.abs(out - ref_f32))))

    print("KERNEL_OK")
</pallas_src>

<mosaic_0001>
module attributes {stable_mosaic.version = 11 : i64} {
  func.func @_basic_block_kernel(%arg0: i32, %arg1: memref<1x16x16x4xf32, #tpu.memory_space<vmem>>, %arg2: memref<128x128xbf16, #tpu.memory_space<vmem>>, %arg3: memref<1x128xf32, #tpu.memory_space<vmem>>, %arg4: memref<1x128xf32, #tpu.memory_space<vmem>>, %arg5: memref<128x128xbf16, #tpu.memory_space<vmem>>, %arg6: memref<1x128xf32, #tpu.memory_space<vmem>>, %arg7: memref<1x128xf32, #tpu.memory_space<vmem>>, %arg8: memref<1x16x16x128xf32, #tpu.memory_space<vmem>>, %arg9: memref<18x18x4xbf16, #tpu.memory_space<vmem>>) attributes {dimension_semantics = [#tpu.dimension_semantics<parallel>], iteration_bounds = array<i64: 2>, scalar_prefetch = 0 : i64, scratch_operands = 1 : i64, tpu.core_type = #tpu.core_type<tc>, window_params = [{transform_indices = @transform_0, window_bounds = array<i64: 1, 16, 16, 4>}, {pipeline_mode = #tpu.pipeline_mode<synchronous>, transform_indices = @transform_1, window_bounds = array<i64: 128, 128>}, {pipeline_mode = #tpu.pipeline_mode<synchronous>, transform_indices = @transform_2, window_bounds = array<i64: 1, 128>}, {pipeline_mode = #tpu.pipeline_mode<synchronous>, transform_indices = @transform_3, window_bounds = array<i64: 1, 128>}, {pipeline_mode = #tpu.pipeline_mode<synchronous>, transform_indices = @transform_4, window_bounds = array<i64: 128, 128>}, {pipeline_mode = #tpu.pipeline_mode<synchronous>, transform_indices = @transform_5, window_bounds = array<i64: 1, 128>}, {pipeline_mode = #tpu.pipeline_mode<synchronous>, transform_indices = @transform_6, window_bounds = array<i64: 1, 128>}, {transform_indices = @transform_7, window_bounds = array<i64: 1, 16, 16, 128>}]} {
    %cst = arith.constant 0.000000e+00 : bf16
    %0 = vector.broadcast %cst : bf16 to vector<1x18x4xbf16>
    %cst_0 = arith.constant 0.000000e+00 : bf16
    %1 = vector.broadcast %cst_0 : bf16 to vector<16x1x4xbf16>
    %c0 = arith.constant 0 : index
    %c0_1 = arith.constant 0 : index
    %c0_2 = arith.constant 0 : index
    %2 = vector.load %arg9[%c0, %c0_1, %c0_2] : memref<18x18x4xbf16, #tpu.memory_space<vmem>>, vector<1x18x4xbf16>
    tpu.vector_store %arg9[%c0, %c0_1, %c0_2], %0 {strides = array<i32>} : memref<18x18x4xbf16, #tpu.memory_space<vmem>>, vector<1x18x4xbf16>,
    %c17 = arith.constant 17 : index
    %c0_3 = arith.constant 0 : index
    %c0_4 = arith.constant 0 : index
    %3 = vector.load %arg9[%c17, %c0_3, %c0_4] : memref<18x18x4xbf16, #tpu.memory_space<vmem>>, vector<1x18x4xbf16>
    tpu.vector_store %arg9[%c17, %c0_3, %c0_4], %0 {strides = array<i32>} : memref<18x18x4xbf16, #tpu.memory_space<vmem>>, vector<1x18x4xbf16>,
    %c1 = arith.constant 1 : index
    %c0_5 = arith.constant 0 : index
    %c0_6 = arith.constant 0 : index
    %4 = vector.load %arg9[%c1, %c0_5, %c0_6] : memref<18x18x4xbf16, #tpu.memory_space<vmem>>, vector<16x1x4xbf16>
    tpu.vector_store %arg9[%c1, %c0_5, %c0_6], %1 {strides = array<i32>} : memref<18x18x4xbf16, #tpu.memory_space<vmem>>, vector<16x1x4xbf16>,
    %c1_7 = arith.constant 1 : index
    %c17_8 = arith.constant 17 : index
    %c0_9 = arith.constant 0 : index
    %5 = vector.load %arg9[%c1_7, %c17_8, %c0_9] : memref<18x18x4xbf16, #tpu.memory_space<vmem>>, vector<16x1x4xbf16>
    tpu.vector_store %arg9[%c1_7, %c17_8, %c0_9], %1 {strides = array<i32>} : memref<18x18x4xbf16, #tpu.memory_space<vmem>>, vector<16x1x4xbf16>,
    %c0_10 = arith.constant 0 : index
    %c0_11 = arith.constant 0 : index
    %c0_12 = arith.constant 0 : index
    %c0_13 = arith.constant 0 : index
    %6 = vector.load %arg1[%c0_10, %c0_11, %c0_12, %c0_13] : memref<1x16x16x4xf32, #tpu.memory_space<vmem>>, vector<1x16x16x4xf32>
    %7 = vector.shape_cast %6 : vector<1x16x16x4xf32> to vector<16x16x4xf32>
    %8 = arith.truncf %7 : vector<16x16x4xf32> to vector<16x16x4xbf16>
    %c1_14 = arith.constant 1 : index
    %c1_15 = arith.constant 1 : index
    %c0_16 = arith.constant 0 : index
    %9 = vector.load %arg9[%c1_14, %c1_15, %c0_16] : memref<18x18x4xbf16, #tpu.memory_space<vmem>>, vector<16x16x4xbf16>
    tpu.vector_store %arg9[%c1_14, %c1_15, %c0_16], %8 {strides = array<i32>} : memref<18x18x4xbf16, #tpu.memory_space<vmem>>, vector<16x16x4xbf16>,
    %c0_17 = arith.constant 0 : index
    %c0_18 = arith.constant 0 : index
    %c0_19 = arith.constant 0 : index
    %10 = vector.load %arg9[%c0_17, %c0_18, %c0_19] : memref<18x18x4xbf16, #tpu.memory_space<vmem>>, vector<18x16x4xbf16>
    %11 = vector.extract_strided_slice %10 {offsets = [0, 0, 0], sizes = [16, 16, 4], strides = [1, 1, 1]} : vector<18x16x4xbf16> to vector<16x16x4xbf16>
    %12 = vector.extract_strided_slice %10 {offsets = [1, 0, 0], sizes = [16, 16, 4], strides = [1, 1, 1]} : vector<18x16x4xbf16> to vector<16x16x4xbf16>
    %13 = vector.extract_strided_slice %10 {offsets = [2, 0, 0], sizes = [16, 16, 4], strides = [1, 1, 1]} : vector<18x16x4xbf16> to vector<16x16x4xbf16>
    %c0_20 = arith.constant 0 : index
    %c1_21 = arith.constant 1 : index
    %c0_22 = arith.constant 0 : index
    %14 = vector.load %arg9[%c0_20, %c1_21, %c0_22] : memref<18x18x4xbf16, #tpu.memory_space<vmem>>, vector<18x16x4xbf16>
    %15 = vector.extract_strided_slice %14 {offsets = [0, 0, 0], sizes = [16, 16, 4], strides = [1, 1, 1]} : vector<18x16x4xbf16> to vector<16x16x4xbf16>
    %16 = vector.extract_strided_slice %14 {offsets = [1, 0, 0], sizes = [16, 16, 4], strides = [1, 1, 1]} : vector<18x16x4xbf16> to vector<16x16x4xbf16>
    %17 = vector.extract_strided_slice %14 {offsets = [2, 0, 0], sizes = [16, 16, 4], strides = [1, 1, 1]} : vector<18x16x4xbf16> to vector<16x16x4xbf16>
    %c0_23 = arith.constant 0 : index
    %c2 = arith.constant 2 : index
    %c0_24 = arith.constant 0 : index
    %18 = vector.load %arg9[%c0_23, %c2, %c0_24] : memref<18x18x4xbf16, #tpu.memory_space<vmem>>, vector<18x16x4xbf16>
    %19 = vector.extract_strided_slice %18 {offsets = [0, 0, 0], sizes = [16, 16, 4], strides = [1, 1, 1]} : vector<18x16x4xbf16> to vector<16x16x4xbf16>
    %20 = vector.extract_strided_slice %18 {offsets = [1, 0, 0], sizes = [16, 16, 4], strides = [1, 1, 1]} : vector<18x16x4xbf16> to vector<16x16x4xbf16>
    %21 = vector.extract_strided_slice %18 {offsets = [2, 0, 0], sizes = [16, 16, 4], strides = [1, 1, 1]} : vector<18x16x4xbf16> to vector<16x16x4xbf16>
    %cst_25 = arith.constant 0.000000e+00 : bf16
    %22 = vector.broadcast %cst_25 : bf16 to vector<16x16x92xbf16>
    %23 = tpu.concatenate %11, %12, %13, %15, %16, %17, %19, %20, %21, %22 in 2 : vector<16x16x4xbf16>, vector<16x16x4xbf16>, vector<16x16x4xbf16>, vector<16x16x4xbf16>, vector<16x16x4xbf16>, vector<16x16x4xbf16>, vector<16x16x4xbf16>, vector<16x16x4xbf16>, vector<16x16x4xbf16>, vector<16x16x92xbf16> -> vector<16x16x128xbf16>
    %24 = vector.shape_cast %23 : vector<16x16x128xbf16> to vector<256x128xbf16>
    %c0_26 = arith.constant 0 : index
    %c0_27 = arith.constant 0 : index
    %25 = vector.load %arg2[%c0_26, %c0_27] : memref<128x128xbf16, #tpu.memory_space<vmem>>, vector<128x128xbf16>
    %cst_28 = arith.constant dense<0.000000e+00> : vector<256x128xf32>
    %26 = tpu.matmul %24, %25, %cst_28 {dimension_numbers = #tpu.dot_dimension_numbers<[1], [0], [0], [1], [0, 0, 1, 1], [], []>} : vector<256x128xbf16>, vector<128x128xbf16>, vector<256x128xf32> -> vector<256x128xf32>
    %c0_29 = arith.constant 0 : index
    %c0_30 = arith.constant 0 : index
    %27 = vector.load %arg3[%c0_29, %c0_30] : memref<1x128xf32, #tpu.memory_space<vmem>>, vector<1x128xf32>
    %28 = vector.broadcast %27 : vector<1x128xf32> to vector<256x128xf32>
    %29 = arith.mulf %26, %28 : vector<256x128xf32>
    %c0_31 = arith.constant 0 : index
    %c0_32 = arith.constant 0 : index
    %30 = vector.load %arg4[%c0_31, %c0_32] : memref<1x128xf32, #tpu.memory_space<vmem>>, vector<1x128xf32>
    %31 = vector.broadcast %30 : vector<1x128xf32> to vector<256x128xf32>
    %32 = arith.addf %29, %31 : vector<256x128xf32>
    %cst_33 = arith.constant 0.000000e+00 : f32
    %33 = vector.broadcast %cst_33 : f32 to vector<256x128xf32>
    %34 = arith.maximumf %32, %33 : vector<256x128xf32>
    %35 = vector.extract_strided_slice %34 {offsets = [0, 0], sizes = [256, 4], strides = [1, 1]} : vector<256x128xf32> to vector<256x4xf32>
    %36 = arith.truncf %35 : vector<256x4xf32> to vector<256x4xbf16>
    %37 = vector.shape_cast %36 : vector<256x4xbf16> to vector<16x16x4xbf16>
    %c1_34 = arith.constant 1 : index
    %c1_35 = arith.constant 1 : index
    %c0_36 = arith.constant 0 : index
    %38 = vector.load %arg9[%c1_34, %c1_35, %c0_36] : memref<18x18x4xbf16, #tpu.memory_space<vmem>>, vector<16x16x4xbf16>
    tpu.vector_store %arg9[%c1_34, %c1_35, %c0_36], %37 {strides = array<i32>} : memref<18x18x4xbf16, #tpu.memory_space<vmem>>, vector<16x16x4xbf16>,
    %c0_37 = arith.constant 0 : index
    %c0_38 = arith.constant 0 : index
    %c0_39 = arith.constant 0 : index
    %39 = vector.load %arg9[%c0_37, %c0_38, %c0_39] : memref<18x18x4xbf16, #tpu.memory_space<vmem>>, vector<18x16x4xbf16>
    %40 = vector.extract_strided_slice %39 {offsets = [0, 0, 0], sizes = [16, 16, 4], strides = [1, 1, 1]} : vector<18x16x4xbf16> to vector<16x16x4xbf16>
    %41 = vector.extract_strided_slice %39 {offsets = [1, 0, 0], sizes = [16, 16, 4], strides = [1, 1, 1]} : vector<18x16x4xbf16> to vector<16x16x4xbf16>
    %42 = vector.extract_strided_slice %39 {offsets = [2, 0, 0], sizes = [16, 16, 4], strides = [1, 1, 1]} : vector<18x16x4xbf16> to vector<16x16x4xbf16>
    %c0_40 = arith.constant 0 : index
    %c1_41 = arith.constant 1 : index
    %c0_42 = arith.constant 0 : index
    %43 = vector.load %arg9[%c0_40, %c1_41, %c0_42] : memref<18x18x4xbf16, #tpu.memory_space<vmem>>, vector<18x16x4xbf16>
    %44 = vector.extract_strided_slice %43 {offsets = [0, 0, 0], sizes = [16, 16, 4], strides = [1, 1, 1]} : vector<18x16x4xbf16> to vector<16x16x4xbf16>
    %45 = vector.extract_strided_slice %43 {offsets = [1, 0, 0], sizes = [16, 16, 4], strides = [1, 1, 1]} : vector<18x16x4xbf16> to vector<16x16x4xbf16>
    %46 = vector.extract_strided_slice %43 {offsets = [2, 0, 0], sizes = [16, 16, 4], strides = [1, 1, 1]} : vector<18x16x4xbf16> to vector<16x16x4xbf16>
    %c0_43 = arith.constant 0 : index
    %c2_44 = arith.constant 2 : index
    %c0_45 = arith.constant 0 : index
    %47 = vector.load %arg9[%c0_43, %c2_44, %c0_45] : memref<18x18x4xbf16, #tpu.memory_space<vmem>>, vector<18x16x4xbf16>
    %48 = vector.extract_strided_slice %47 {offsets = [0, 0, 0], sizes = [16, 16, 4], strides = [1, 1, 1]} : vector<18x16x4xbf16> to vector<16x16x4xbf16>
    %49 = vector.extract_strided_slice %47 {offsets = [1, 0, 0], sizes = [16, 16, 4], strides = [1, 1, 1]} : vector<18x16x4xbf16> to vector<16x16x4xbf16>
    %50 = vector.extract_strided_slice %47 {offsets = [2, 0, 0], sizes = [16, 16, 4], strides = [1, 1, 1]} : vector<18x16x4xbf16> to vector<16x16x4xbf16>
    %cst_46 = arith.constant 0.000000e+00 : bf16
    %51 = vector.broadcast %cst_46 : bf16 to vector<16x16x92xbf16>
    %52 = tpu.concatenate %40, %41, %42, %44, %45, %46, %48, %49, %50, %51 in 2 : vector<16x16x4xbf16>, vector<16x16x4xbf16>, vector<16x16x4xbf16>, vector<16x16x4xbf16>, vector<16x16x4xbf16>, vector<16x16x4xbf16>, vector<16x16x4xbf16>, vector<16x16x4xbf16>, vector<16x16x4xbf16>, vector<16x16x92xbf16> -> vector<16x16x128xbf16>
    %53 = vector.shape_cast %52 : vector<16x16x128xbf16> to vector<256x128xbf16>
    %c0_47 = arith.constant 0 : index
    %c0_48 = arith.constant 0 : index
    %54 = vector.load %arg5[%c0_47, %c0_48] : memref<128x128xbf16, #tpu.memory_space<vmem>>, vector<128x128xbf16>
    %cst_49 = arith.constant dense<0.000000e+00> : vector<256x128xf32>
    %55 = tpu.matmul %53, %54, %cst_49 {dimension_numbers = #tpu.dot_dimension_numbers<[1], [0], [0], [1], [0, 0, 1, 1], [], []>} : vector<256x128xbf16>, vector<128x128xbf16>, vector<256x128xf32> -> vector<256x128xf32>
    %c0_50 = arith.constant 0 : index
    %c0_51 = arith.constant 0 : index
    %56 = vector.load %arg6[%c0_50, %c0_51] : memref<1x128xf32, #tpu.memory_space<vmem>>, vector<1x128xf32>
    %57 = vector.broadcast %56 : vector<1x128xf32> to vector<256x128xf32>
    %58 = arith.mulf %55, %57 : vector<256x128xf32>
    %c0_52 = arith.constant 0 : index
    %c0_53 = arith.constant 0 : index
    %59 = vector.load %arg7[%c0_52, %c0_53] : memref<1x128xf32, #tpu.memory_space<vmem>>, vector<1x128xf32>
    %60 = vector.broadcast %59 : vector<1x128xf32> to vector<256x128xf32>
    %61 = arith.addf %58, %60 : vector<256x128xf32>
    %c0_54 = arith.constant 0 : index
    %c0_55 = arith.constant 0 : index
    %c0_56 = arith.constant 0 : index
    %c0_57 = arith.constant 0 : index
    %62 = vector.load %arg1[%c0_54, %c0_55, %c0_56, %c0_57] : memref<1x16x16x4xf32, #tpu.memory_space<vmem>>, vector<1x16x16x4xf32>
    %63 = vector.shape_cast %62 : vector<1x16x16x4xf32> to vector<16x16x4xf32>
    %64 = vector.shape_cast %63 : vector<16x16x4xf32> to vector<256x4xf32>
    %cst_58 = arith.constant 0.000000e+00 : f32
    %65 = vector.broadcast %cst_58 : f32 to vector<256x124xf32>
    %66 = tpu.concatenate %64, %65 in 1 : vector<256x4xf32>, vector<256x124xf32> -> vector<256x128xf32>
    %67 = arith.addf %61, %66 : vector<256x128xf32>
    %cst_59 = arith.constant 0.000000e+00 : f32
    %68 = vector.broadcast %cst_59 : f32 to vector<256x128xf32>
    %69 = arith.maximumf %67, %68 : vector<256x128xf32>
    %70 = vector.shape_cast %69 : vector<256x128xf32> to vector<1x16x16x128xf32>
    %c0_60 = arith.constant 0 : index
    %c0_61 = arith.constant 0 : index
    %c0_62 = arith.constant 0 : index
    %c0_63 = arith.constant 0 : index
    %71 = vector.load %arg8[%c0_60, %c0_61, %c0_62, %c0_63] : memref<1x16x16x128xf32, #tpu.memory_space<vmem>>, vector<1x16x16x128xf32>
    tpu.vector_store %arg8[%c0_60, %c0_61, %c0_62, %c0_63], %70 {strides = array<i32>} : memref<1x16x16x128xf32, #tpu.memory_space<vmem>>, vector<1x16x16x128xf32>,
    return
  }
  func.func @transform_0(%arg0: i32) -> (i32, i32, i32, i32) {
    %c0_i32 = arith.constant 0 : i32
    %c0_i32_0 = arith.constant 0 : i32
    %c0_i32_1 = arith.constant 0 : i32
    %c0_i32_2 = arith.constant 0 : i32
    return %arg0, %c0_i32, %c0_i32_0, %c0_i32_1 : i32, i32, i32, i32
  }
  func.func @transform_1(%arg0: i32) -> (i32, i32) {
    %c0_i32 = arith.constant 0 : i32
    %c0_i32_0 = arith.constant 0 : i32
    %c0_i32_1 = arith.constant 0 : i32
    return %c0_i32, %c0_i32_0 : i32, i32
  }
  func.func @transform_2(%arg0: i32) -> (i32, i32) {
    %c0_i32 = arith.constant 0 : i32
    %c0_i32_0 = arith.constant 0 : i32
    %c0_i32_1 = arith.constant 0 : i32
    return %c0_i32, %c0_i32_0 : i32, i32
  }
  func.func @transform_3(%arg0: i32) -> (i32, i32) {
    %c0_i32 = arith.constant 0 : i32
    %c0_i32_0 = arith.constant 0 : i32
    %c0_i32_1 = arith.constant 0 : i32
    return %c0_i32, %c0_i32_0 : i32, i32
  }
  func.func @transform_4(%arg0: i32) -> (i32, i32) {
    %c0_i32 = arith.constant 0 : i32
    %c0_i32_0 = arith.constant 0 : i32
    %c0_i32_1 = arith.constant 0 : i32
    return %c0_i32, %c0_i32_0 : i32, i32
  }
  func.func @transform_5(%arg0: i32) -> (i32, i32) {
    %c0_i32 = arith.constant 0 : i32
    %c0_i32_0 = arith.constant 0 : i32
    %c0_i32_1 = arith.constant 0 : i32
    return %c0_i32, %c0_i32_0 : i32, i32
  }
  func.func @transform_6(%arg0: i32) -> (i32, i32) {
    %c0_i32 = arith.constant 0 : i32
    %c0_i32_0 = arith.constant 0 : i32
    %c0_i32_1 = arith.constant 0 : i32
    return %c0_i32, %c0_i32_0 : i32, i32
  }
  func.func @transform_7(%arg0: i32) -> (i32, i32, i32, i32) {
    %c0_i32 = arith.constant 0 : i32
    %c0_i32_0 = arith.constant 0 : i32
    %c0_i32_1 = arith.constant 0 : i32
    %c0_i32_2 = arith.constant 0 : i32
    return %arg0, %c0_i32, %c0_i32_0, %c0_i32_1 : i32, i32, i32, i32
  }
}

</mosaic_0001>

<llo_original>
// kernel: basic_block_pallas.1
$region0: #{basic_block_pallas.1}
  #allocation0 [shape = 'u32[]', space=smem, size = 0x4, offset = 0x4, fixed_abs, tag = 'smem constant byte address 0x4 - core index']
  #allocation1 [shape = 'u32[144,128]{1,0:T(1,128)}', space=vmem, size = 0x12000, scoped, tag = 'internal scratch']
  #allocation2 [shape = 'bf16[18,18,4]{2,1,0:T(8,128)(2,1)}', space=vmem, size = 0x1b000, scoped, tag = 'scratch operand']
  %s0 = inlined_call_operand.vmem [shape: f32[2,16,16,4], index: 0, kind: input, shape index: {}]
  %s1 = inlined_call_operand.vmem [shape: bf16[128,128], index: 1, kind: input, shape index: {}]
  %s2 = inlined_call_operand.vmem [shape: f32[1,128], index: 2, kind: input, shape index: {}]
  %s3 = inlined_call_operand.vmem [shape: f32[1,128], index: 3, kind: input, shape index: {}]
  %s4 = inlined_call_operand.vmem [shape: bf16[128,128], index: 4, kind: input, shape index: {}]
  %s5 = inlined_call_operand.vmem [shape: f32[1,128], index: 5, kind: input, shape index: {}]
  %s6 = inlined_call_operand.vmem [shape: f32[1,128], index: 6, kind: input, shape index: {}]
  %s7 = inlined_call_operand.vmem [shape: f32[2,16,16,128], index: 7, kind: output, shape index: {}]
  %s8 = sld [smem:[#allocation0]]
  $region61: #{basic_block_pallas.1} parent=0
    _
  %s10 = ssub.s32 1, %s8
  %s11 = scalar_select 0, %s10, %s8
  loop: start=0, step=1, limit=4
  $region2: #{basic_block_pallas.1} parent=0 // loop_pre_header
    _
  $region3: #{basic_block_pallas.1} parent=0 // loop_header
    %s13 = sphi 0, %s17
    %p14 = scmp.ge.s32.totalorder %s13, 4
    %s23 = sphi 0, %s25
    %s26 = sphi 0, %s23
    %s27 = sphi 0, %s26
    %s43 = sphi 0, %s27
    %s47 = sphi 0, %s47
    %s49 = sphi 0, %s47
    %s50 = sphi 0, %s49
    %s64 = sphi 0, %s50
    %s68 = sphi 0, %s68
    %s70 = sphi 0, %s68
    %s71 = sphi 0, %s70
    %s85 = sphi 0, %s71
    %s89 = sphi 0, %s89
    %s91 = sphi 0, %s89
    %s92 = sphi 0, %s91
    %s106 = sphi 0, %s92
    %s110 = sphi 0, %s110
    %s112 = sphi 0, %s110
    %s113 = sphi 0, %s112
    %s127 = sphi 0, %s113
    %s131 = sphi 0, %s131
    %s133 = sphi 0, %s131
    %s134 = sphi 0, %s133
    %s148 = sphi 0, %s134
    %s152 = sphi 0, %s152
    %s154 = sphi 0, %s152
    %s155 = sphi 0, %s154
    %s169 = sphi 0, %s155
    %s175 = sphi 0, %s177
    %s178 = sphi 0, %s175
    %s179 = sphi 0, %s178
    %s195 = sphi 0, %s179
  $region4: #{basic_block_pallas.1} parent=0 // loop_header_branch
    %16 = sbr.rel (%p14) target = $region8
  $region5: #{basic_block_pallas.1} parent=0 // loop_body
    %s18 = ssub.s32 %s13, 1
    %s19 = ssub.s32 %s13, 2
    %s20 = sadd.s32 %s13, 1
    %s21 = ssub.s32 %s13, %s20
    %p22 = scmp.eq.s32.totalorder %s21, 0
    %s24 = sadd.s32 %s23, 1
    %s25 = scalar_select %p22, %s23, %s24
    %p28 = pneg %p22
    %p29 = scmp.eq.s32.totalorder %s13, 1
    %p30 = por %p28, %p29
    %p31 = scmp.ne.s32.totalorder %s23, %s26
    %p32 = scmp.eq.s32.totalorder %s13, 0
    %p33 = por %p31, %p32
    %p34 = scmp.ne.s32.totalorder %s23, %s26
    %p35 = scmp.eq.s32.totalorder %s18, 1
    %p36 = por %p34, %p35
    %p37 = scmp.ne.s32.totalorder %s26, %s27
    %p38 = scmp.eq.s32.totalorder %s18, 0
    %p39 = por %p37, %p38
    %p40 = scmp.ne.s32.totalorder %s26, %s27
    %p41 = scmp.eq.s32.totalorder %s19, 1
    %p42 = por %p40, %p41
    %p44 = scmp.ne.s32.totalorder %s27, %s43
    %p45 = scmp.eq.s32.totalorder %s19, 0
    %p46 = por %p44, %p45
    %s48 = sadd.s32 %s47, 1
    %p51 = scmp.eq.s32.totalorder %s13, 1
    %p52 = scmp.ne.s32.totalorder %s47, %s49
    %p53 = scmp.eq.s32.totalorder %s13, 0
    %p54 = por %p52, %p53
    %p55 = scmp.ne.s32.totalorder %s47, %s49
    %p56 = scmp.eq.s32.totalorder %s18, 1
    %p57 = por %p55, %p56
    %p58 = scmp.ne.s32.totalorder %s49, %s50
    %p59 = scmp.eq.s32.totalorder %s18, 0
    %p60 = por %p58, %p59
    %p61 = scmp.ne.s32.totalorder %s49, %s50
    %p62 = scmp.eq.s32.totalorder %s19, 1
    %p63 = por %p61, %p62
    %p65 = scmp.ne.s32.totalorder %s50, %s64
    %p66 = scmp.eq.s32.totalorder %s19, 0
    %p67 = por %p65, %p66
    %s69 = sadd.s32 %s68, 1
    %p72 = scmp.eq.s32.totalorder %s13, 1
    %p73 = scmp.ne.s32.totalorder %s68, %s70
    %p74 = scmp.eq.s32.totalorder %s13, 0
    %p75 = por %p73, %p74
    %p76 = scmp.ne.s32.totalorder %s68, %s70
    %p77 = scmp.eq.s32.totalorder %s18, 1
    %p78 = por %p76, %p77
    %p79 = scmp.ne.s32.totalorder %s70, %s71
    %p80 = scmp.eq.s32.totalorder %s18, 0
    %p81 = por %p79, %p80
    %p82 = scmp.ne.s32.totalorder %s70, %s71
    %p83 = scmp.eq.s32.totalorder %s19, 1
    %p84 = por %p82, %p83
    %p86 = scmp.ne.s32.totalorder %s71, %s85
    %p87 = scmp.eq.s32.totalorder %s19, 0
    %p88 = por %p86, %p87
    %s90 = sadd.s32 %s89, 1
    %p93 = scmp.eq.s32.totalorder %s13, 1
    %p94 = scmp.ne.s32.totalorder %s89, %s91
    %p95 = scmp.eq.s32.totalorder %s13, 0
    %p96 = por %p94, %p95
    %p97 = scmp.ne.s32.totalorder %s89, %s91
    %p98 = scmp.eq.s32.totalorder %s18, 1
    %p99 = por %p97, %p98
    %p100 = scmp.ne.s32.totalorder %s91, %s92
    %p101 = scmp.eq.s32.totalorder %s18, 0
    %p102 = por %p100, %p101
    %p103 = scmp.ne.s32.totalorder %s91, %s92
    %p104 = scmp.eq.s32.totalorder %s19, 1
    %p105 = por %p103, %p104
    %p107 = scmp.ne.s32.totalorder %s92, %s106
    %p108 = scmp.eq.s32.totalorder %s19, 0
    %p109 = por %p107, %p108
    %s111 = sadd.s32 %s110, 1
    %p114 = scmp.eq.s32.totalorder %s13, 1
    %p115 = scmp.ne.s32.totalorder %s110, %s112
    %p116 = scmp.eq.s32.totalorder %s13, 0
    %p117 = por %p115, %p116
    %p118 = scmp.ne.s32.totalorder %s110, %s112
    %p119 = scmp.eq.s32.totalorder %s18, 1
    %p120 = por %p118, %p119
    %p121 = scmp.ne.s32.totalorder %s112, %s113
    %p122 = scmp.eq.s32.totalorder %s18, 0
    %p123 = por %p121, %p122
    %p124 = scmp.ne.s32.totalorder %s112, %s113
    %p125 = scmp.eq.s32.totalorder %s19, 1
    %p126 = por %p124, %p125
    %p128 = scmp.ne.s32.totalorder %s113, %s127
    %p129 = scmp.eq.s32.totalorder %s19, 0
    %p130 = por %p128, %p129
    %s132 = sadd.s32 %s131, 1
    %p135 = scmp.eq.s32.totalorder %s13, 1
    %p136 = scmp.ne.s32.totalorder %s131, %s133
    %p137 = scmp.eq.s32.totalorder %s13, 0
    %p138 = por %p136, %p137
    %p139 = scmp.ne.s32.totalorder %s131, %s133
    %p140 = scmp.eq.s32.totalorder %s18, 1
    %p141 = por %p139, %p140
    %p142 = scmp.ne.s32.totalorder %s133, %s134
    %p143 = scmp.eq.s32.totalorder %s18, 0
    %p144 = por %p142, %p143
    %p145 = scmp.ne.s32.totalorder %s133, %s134
    %p146 = scmp.eq.s32.totalorder %s19, 1
    %p147 = por %p145, %p146
    %p149 = scmp.ne.s32.totalorder %s134, %s148
    %p150 = scmp.eq.s32.totalorder %s19, 0
    %p151 = por %p149, %p150
    %s153 = sadd.s32 %s152, 1
    %p156 = scmp.eq.s32.totalorder %s13, 1
    %p157 = scmp.ne.s32.totalorder %s152, %s154
    %p158 = scmp.eq.s32.totalorder %s13, 0
    %p159 = por %p157, %p158
    %p160 = scmp.ne.s32.totalorder %s152, %s154
    %p161 = scmp.eq.s32.totalorder %s18, 1
    %p162 = por %p160, %p161
    %p163 = scmp.ne.s32.totalorder %s154, %s155
    %p164 = scmp.eq.s32.totalorder %s18, 0
    %p165 = por %p163, %p164
    %p166 = scmp.ne.s32.totalorder %s154, %s155
    %p167 = scmp.eq.s32.totalorder %s19, 1
    %p168 = por %p166, %p167
    %p170 = scmp.ne.s32.totalorder %s155, %s169
    %p171 = scmp.eq.s32.totalorder %s19, 0
    %p172 = por %p170, %p171
    %s173 = ssub.s32 %s13, %s20
    %p174 = scmp.eq.s32.totalorder %s173, 0
    %s176 = sadd.s32 %s175, 1
    %s177 = scalar_select %p174, %s175, %s176
    %p180 = pneg %p174
    %p181 = scmp.eq.s32.totalorder %s13, 1
    %p182 = por %p180, %p181
    %p183 = scmp.ne.s32.totalorder %s175, %s178
    %p184 = scmp.eq.s32.totalorder %s13, 0
    %p185 = por %p183, %p184
    %p186 = scmp.ne.s32.totalorder %s175, %s178
    %p187 = scmp.eq.s32.totalorder %s18, 1
    %p188 = por %p186, %p187
    %p189 = scmp.ne.s32.totalorder %s178, %s179
    %p190 = scmp.eq.s32.totalorder %s18, 0
    %p191 = por %p189, %p190
    %p192 = scmp.ne.s32.totalorder %s178, %s179
    %p193 = scmp.eq.s32.totalorder %s19, 1
    %p194 = por %p192, %p193
    %p196 = scmp.ne.s32.totalorder %s179, %s195
    %p197 = scmp.eq.s32.totalorder %s19, 0
    %p198 = por %p196, %p197
    %p199 = scmp.le.s32.totalorder 1, %s13
    %p200 = scmp.lt.s32.totalorder %s13, 3
    %p201 = pnand %p199, %p200
    %p202 = pneg %p201
    // Predicated region
    $region9: #{basic_block_pallas.1} parent=5 // pred_check
      _
    $region10: #{basic_block_pallas.1} parent=5 // pred_check_branch
      %204 = sbr.rel (%p201) target = $region12
    $region11: #{basic_block_pallas.1} parent=5 // pred_region
      %s205 = ssub.s32 %s13, 1
      // Predicated region
      $region13: #{basic_block_pallas.1} parent=11 // pred_check
        %p206 = pneg %p60
      $region14: #{basic_block_pallas.1} parent=11 // pred_check_branch
        %208 = sbr.rel (%p206) target = $region16
      $region15: #{basic_block_pallas.1} parent=11 // pred_region
        _
      $region16: #{basic_block_pallas.1} parent=11 // pred_fallthru
        _
      // Predicated region
      $region17: #{basic_block_pallas.1} parent=11 // pred_check
        %p209 = pneg %p81
      $region18: #{basic_block_pallas.1} parent=11 // pred_check_branch
        %211 = sbr.rel (%p209) target = $region20
      $region19: #{basic_block_pallas.1} parent=11 // pred_region
        _
      $region20: #{basic_block_pallas.1} parent=11 // pred_fallthru
        _
      // Predicated region
      $region21: #{basic_block_pallas.1} parent=11 // pred_check
        %p212 = pneg %p102
      $region22: #{basic_block_pallas.1} parent=11 // pred_check_branch
        %214 = sbr.rel (%p212) target = $region24
      $region23: #{basic_block_pallas.1} parent=11 // pred_region
        _
      $region24: #{basic_block_pallas.1} parent=11 // pred_fallthru
        _
      // Predicated region
      $region25: #{basic_block_pallas.1} parent=11 // pred_check
        %p215 = pneg %p123
      $region26: #{basic_block_pallas.1} parent=11 // pred_check_branch
        %217 = sbr.rel (%p215) target = $region28
      $region27: #{basic_block_pallas.1} parent=11 // pred_region
        _
      $region28: #{basic_block_pallas.1} parent=11 // pred_fallthru
        _
      // Predicated region
      $region29: #{basic_block_pallas.1} parent=11 // pred_check
        %p218 = pneg %p144
      $region30: #{basic_block_pallas.1} parent=11 // pred_check_branch
        %220 = sbr.rel (%p218) target = $region32
      $region31: #{basic_block_pallas.1} parent=11 // pred_region
        _
      $region32: #{basic_block_pallas.1} parent=11 // pred_fallthru
        _
      // Predicated region
      $region33: #{basic_block_pallas.1} parent=11 // pred_check
        %p221 = pneg %p165
      $region34: #{basic_block_pallas.1} parent=11 // pred_check_branch
        %223 = sbr.rel (%p221) target = $region36
      $region35: #{basic_block_pallas.1} parent=11 // pred_region
        _
      $region36: #{basic_block_pallas.1} parent=11 // pred_fallthru
        _
    $region12: #{basic_block_pallas.1} parent=5 // pred_fallthru
      _
    %p224 = scmp.lt.s32.totalorder %s13, 2
    // Predicated region
    $region37: #{basic_block_pallas.1} parent=5 // pred_check
      %p225 = pneg %p224
    $region38: #{basic_block_pallas.1} parent=5 // pred_check_branch
      %227 = sbr.rel (%p225) target = $region40
    $region39: #{basic_block_pallas.1} parent=5 // pred_region
      // Predicated region
      $region41: #{basic_block_pallas.1} parent=39 // pred_check
        %p228 = pneg %p33
      $region42: #{basic_block_pallas.1} parent=39 // pred_check_branch
        %230 = sbr.rel (%p228) target = $region44
      $region43: #{basic_block_pallas.1} parent=39 // pred_region
        %p231 = scmp.lt.s32.totalorder %s13, 1
        %s232 = scalar_select %p231, %s13, 1
        %s233 = smul.addr %s232, 32
        %s234 = smul.addr %s233, 8
        %s235 = scalar_lea.vmem %s0, %s234
      $region44: #{basic_block_pallas.1} parent=39 // pred_fallthru
        _
    $region40: #{basic_block_pallas.1} parent=5 // pred_fallthru
      _
    %p236 = scmp.le.s32.totalorder 1, %s13
    %p237 = scmp.lt.s32.totalorder %s13, 3
    %p238 = pnand %p236, %p237
    %p239 = pneg %p238
    // Predicated region
    $region45: #{basic_block_pallas.1} parent=5 // pred_check
      _
    $region46: #{basic_block_pallas.1} parent=5 // pred_check_branch
      %241 = sbr.rel (%p238) target = $region48
    $region47: #{basic_block_pallas.1} parent=5 // pred_region
      %s242 = ssub.s32 %s13, 1
      %p243 = scmp.lt.s32.totalorder %s18, 1
      %s244 = scalar_select %p243, %s18, 1
      %s245 = smul.addr %s244, 32
      %s246 = smul.addr %s245, 8
      %s247 = scalar_lea.vmem %s0, %s246
      %p248 = pneg %p39
      %p249 = pneg %p36
      %p250 = pneg %p60
      %p251 = pneg %p57
      %p252 = pneg %p81
      %p253 = pneg %p78
      %p254 = pneg %p102
      %p255 = pneg %p99
      %p256 = pneg %p123
      %p257 = pneg %p120
      %p258 = pneg %p144
      %p259 = pneg %p141
      %p260 = pneg %p165
      %p261 = pneg %p162
      %p262 = pneg %p191
      %p263 = pneg %p188
      %p264 = scmp.lt.s32.totalorder %s18, 1
      %s265 = scalar_select %p264, %s18, 1
      %s266 = smul.addr %s265, 32
      %s267 = smul.addr %s266, 8
      %s268 = scalar_lea.vmem %s7, %s267
      %p269 = scmp.lt.s32.totalorder %s18, 1
      %s270 = scalar_select %p269, %s18, 1
      %s271 = smul.addr %s270, 32
      %s272 = smul.addr %s271, 8
      %s273 = scalar_lea.vmem %s0, %s272
      %p274 = scmp.lt.s32.totalorder %s18, 1
      %s275 = scalar_select %p274, %s18, 1
      %s276 = smul.addr %s275, 32
      %s277 = smul.addr %s276, 8
      %s278 = scalar_lea.vmem %s7, %s277
      %vm280 = vcmask 27648
      %281 = vst.msk [vmem:[#allocation2] sm:$0xf] %vm280, 0
      %282 = vst.msk [vmem:[#allocation2 + $0x4] sm:$0xf] %vm280, 0
      %vm283 = vcmask 24576
      %284 = vst.msk [vmem:[#allocation2 + $0x8] sm:$0x1] %vm283, 0
      %s285 = scalar_lea.vmem [#allocation2], 204
      %286 = vst.msk [vmem:[%s285] sm:$0xf] %vm280, 0
      %287 = vst.msk [vmem:[%s285 + $0x4] sm:$0xf] %vm280, 0
      %288 = vst.msk [vmem:[%s285 + $0x8] sm:$0x1] %vm283, 0
      %s289 = scalar_lea.vmem [#allocation2], 12
      %vm290 = vcmask 24576
      %vm291 = vsmask.f32 256
      %vm292 = vmand %vm290, %vm291
      %v293 = vld [vmem:[%s289] sm:$0x1]
      %v294 = vsel %vm292, 0, %v293
      %295 = vst [vmem:[%s289] sm:$0x1] %v294
      %v296 = vld [vmem:[%s289 + $0xc] sm:$0x1]
      %v297 = vsel %vm292, 0, %v296
      %298 = vst [vmem:[%s289 + $0xc] sm:$0x1] %v297
      %v299 = vld [vmem:[%s289 + $0x18] sm:$0x1]
      %v300 = vsel %vm292, 0, %v299
      %301 = vst [vmem:[%s289 + $0x18] sm:$0x1] %v300
      %v302 = vld [vmem:[%s289 + $0x24] sm:$0x1]
      %v303 = vsel %vm292, 0, %v302
      %304 = vst [vmem:[%s289 + $0x24] sm:$0x1] %v303
      %v305 = vld [vmem:[%s289 + $0x30] sm:$0x1]
      %v306 = vsel %vm292, 0, %v305
      %307 = vst [vmem:[%s289 + $0x30] sm:$0x1] %v306
      %v308 = vld [vmem:[%s289 + $0x3c] sm:$0x1]
      %v309 = vsel %vm292, 0, %v308
      %310 = vst [vmem:[%s289 + $0x3c] sm:$0x1] %v309
      %v311 = vld [vmem:[%s289 + $0x48] sm:$0x1]
      %v312 = vsel %vm292, 0, %v311
      %313 = vst [vmem:[%s289 + $0x48] sm:$0x1] %v312
      %v314 = vld [vmem:[%s289 + $0x54] sm:$0x1]
      %v315 = vsel %vm292, 0, %v314
      %316 = vst [vmem:[%s289 + $0x54] sm:$0x1] %v315
      %v317 = vld [vmem:[%s289 + $0x60] sm:$0x1]
      %v318 = vsel %vm292, 0, %v317
      %319 = vst [vmem:[%s289 + $0x60] sm:$0x1] %v318
      %v320 = vld [vmem:[%s289 + $0x6c] sm:$0x1]
      %v321 = vsel %vm292, 0, %v320
      %322 = vst [vmem:[%s289 + $0x6c] sm:$0x1] %v321
      %v323 = vld [vmem:[%s289 + $0x78] sm:$0x1]
      %v324 = vsel %vm292, 0, %v323
      %325 = vst [vmem:[%s289 + $0x78] sm:$0x1] %v324
      %v326 = vld [vmem:[%s289 + $0x84] sm:$0x1]
      %v327 = vsel %vm292, 0, %v326
      %328 = vst [vmem:[%s289 + $0x84] sm:$0x1] %v327
      %v329 = vld [vmem:[%s289 + $0x90] sm:$0x1]
      %v330 = vsel %vm292, 0, %v329
      %331 = vst [vmem:[%s289 + $0x90] sm:$0x1] %v330
      %v332 = vld [vmem:[%s289 + $0x9c] sm:$0x1]
      %v333 = vsel %vm292, 0, %v332
      %334 = vst [vmem:[%s289 + $0x9c] sm:$0x1] %v333
      %v335 = vld [vmem:[%s289 + $0xa8] sm:$0x1]
      %v336 = vsel %vm292, 0, %v335
      %337 = vst [vmem:[%s289 + $0xa8] sm:$0x1] %v336
      %v338 = vld [vmem:[%s289 + $0xb4] sm:$0x1]
      %v339 = vsel %vm292, 0, %v338
      %340 = vst [vmem:[%s289 + $0xb4] sm:$0x1] %v339
      %vm341 = vsmask.f32 7938
      %vm342 = vmand %vm290, %vm341
      %v343 = vld [vmem:[%s289 + $0x8] sm:$0x1]
      %v344 = vsel %vm342, 0, %v343
      %345 = vst [vmem:[%s289 + $0x8] sm:$0x1] %v344
      %v346 = vld [vmem:[%s289 + $0x14] sm:$0x1]
      %v347 = vsel %vm342, 0, %v346
      %348 = vst [vmem:[%s289 + $0x14] sm:$0x1] %v347
      %v349 = vld [vmem:[%s289 + $0x20] sm:$0x1]
      %v350 = vsel %vm342, 0, %v349
      %351 = vst [vmem:[%s289 + $0x20] sm:$0x1] %v350
      %v352 = vld [vmem:[%s289 + $0x2c] sm:$0x1]
      %v353 = vsel %vm342, 0, %v352
      %354 = vst [vmem:[%s289 + $0x2c] sm:$0x1] %v353
      %v355 = vld [vmem:[%s289 + $0x38] sm:$0x1]
      %v356 = vsel %vm342, 0, %v355
      %357 = vst [vmem:[%s289 + $0x38] sm:$0x1] %v356
      %v358 = vld [vmem:[%s289 + $0x44] sm:$0x1]
      %v359 = vsel %vm342, 0, %v358
      %360 = vst [vmem:[%s289 + $0x44] sm:$0x1] %v359
      %v361 = vld [vmem:[%s289 + $0x50] sm:$0x1]
      %v362 = vsel %vm342, 0, %v361
      %363 = vst [vmem:[%s289 + $0x50] sm:$0x1] %v362
      %v364 = vld [vmem:[%s289 + $0x5c] sm:$0x1]
      %v365 = vsel %vm342, 0, %v364
      %366 = vst [vmem:[%s289 + $0x5c] sm:$0x1] %v365
      %v367 = vld [vmem:[%s289 + $0x68] sm:$0x1]
      %v368 = vsel %vm342, 0, %v367
      %369 = vst [vmem:[%s289 + $0x68] sm:$0x1] %v368
      %v370 = vld [vmem:[%s289 + $0x74] sm:$0x1]
      %v371 = vsel %vm342, 0, %v370
      %372 = vst [vmem:[%s289 + $0x74] sm:$0x1] %v371
      %v373 = vld [vmem:[%s289 + $0x80] sm:$0x1]
      %v374 = vsel %vm342, 0, %v373
      %375 = vst [vmem:[%s289 + $0x80] sm:$0x1] %v374
      %v376 = vld [vmem:[%s289 + $0x8c] sm:$0x1]
      %v377 = vsel %vm342, 0, %v376
      %378 = vst [vmem:[%s289 + $0x8c] sm:$0x1] %v377
      %v379 = vld [vmem:[%s289 + $0x98] sm:$0x1]
      %v380 = vsel %vm342, 0, %v379
      %381 = vst [vmem:[%s289 + $0x98] sm:$0x1] %v380
      %v382 = vld [vmem:[%s289 + $0xa4] sm:$0x1]
      %v383 = vsel %vm342, 0, %v382
      %384 = vst [vmem:[%s289 + $0xa4] sm:$0x1] %v383
      %v385 = vld [vmem:[%s289 + $0xb0] sm:$0x1]
      %v386 = vsel %vm342, 0, %v385
      %387 = vst [vmem:[%s289 + $0xb0] sm:$0x1] %v386
      %v388 = vld [vmem:[%s289 + $0xbc] sm:$0x1]
      %v389 = vsel %vm342, 0, %v388
      %390 = vst [vmem:[%s289 + $0xbc] sm:$0x1] %v389
      %v391 = vld [vmem:[%s273] sm:$0xff]
      %v392 = vld [vmem:[%s273 + $0x8] sm:$0xff]
      %v393 = vld [vmem:[%s273 + $0x10] sm:$0xff]
      %v394 = vld [vmem:[%s273 + $0x18] sm:$0xff]
      %v395 = vld [vmem:[%s273 + $0x20] sm:$0xff]
      %v396 = vld [vmem:[%s273 + $0x28] sm:$0xff]
      %v397 = vld [vmem:[%s273 + $0x30] sm:$0xff]
      %v398 = vld [vmem:[%s273 + $0x38] sm:$0xff]
      %v399 = vld [vmem:[%s273 + $0x40] sm:$0xff]
      %v400 = vld [vmem:[%s273 + $0x48] sm:$0xff]
      %v401 = vld [vmem:[%s273 + $0x50] sm:$0xff]
      %v402 = vld [vmem:[%s273 + $0x58] sm:$0xff]
      %v403 = vld [vmem:[%s273 + $0x60] sm:$0xff]
      %v404 = vld [vmem:[%s273 + $0x68] sm:$0xff]
      %v405 = vld [vmem:[%s273 + $0x70] sm:$0xff]
      %v406 = vld [vmem:[%s273 + $0x78] sm:$0xff]
      %v407 = vld [vmem:[%s273 + $0x80] sm:$0xff]
      %v408 = vld [vmem:[%s273 + $0x88] sm:$0xff]
      %v409 = vld [vmem:[%s273 + $0x90] sm:$0xff]
      %v410 = vld [vmem:[%s273 + $0x98] sm:$0xff]
      %v411 = vld [vmem:[%s273 + $0xa0] sm:$0xff]
      %v412 = vld [vmem:[%s273 + $0xa8] sm:$0xff]
      %v413 = vld [vmem:[%s273 + $0xb0] sm:$0xff]
      %v414 = vld [vmem:[%s273 + $0xb8] sm:$0xff]
      %v415 = vld [vmem:[%s273 + $0xc0] sm:$0xff]
      %v416 = vld [vmem:[%s273 + $0xc8] sm:$0xff]
      %v417 = vld [vmem:[%s273 + $0xd0] sm:$0xff]
      %v418 = vld [vmem:[%s273 + $0xd8] sm:$0xff]
      %v419 = vld [vmem:[%s273 + $0xe0] sm:$0xff]
      %v420 = vld [vmem:[%s273 + $0xe8] sm:$0xff]
      %v421 = vld [vmem:[%s273 + $0xf0] sm:$0xff]
      %v422 = vld [vmem:[%s273 + $0xf8] sm:$0xff]
      %v423 = vpack.c.bf16 %v392, %v391
      %v424 = vpack.c.bf16 %v394, %v393
      %v425 = vpack.c.bf16 %v396, %v395
      %v426 = vpack.c.bf16 %v398, %v397
      %v427 = vpack.c.bf16 %v400, %v399
      %v428 = vpack.c.bf16 %v402, %v401
      %v429 = vpack.c.bf16 %v404, %v403
      %v430 = vpack.c.bf16 %v406, %v405
      %v431 = vpack.c.bf16 %v408, %v407
      %v432 = vpack.c.bf16 %v410, %v409
      %v433 = vpack.c.bf16 %v412, %v411
      %v434 = vpack.c.bf16 %v414, %v413
      %v435 = vpack.c.bf16 %v416, %v415
      %v436 = vpack.c.bf16 %v418, %v417
      %v437 = vpack.c.bf16 %v420, %v419
      %v438 = vpack.c.bf16 %v422, %v421
      %v455 = vunpack.c.l.b16 %v423
      %v456 = vunpack.c.h.b16 %v423
      %v457 = vunpack.c.l.b16 %v424
      %v458 = vunpack.c.h.b16 %v424
      %v459 = vunpack.c.l.b16 %v425
      %v460 = vunpack.c.h.b16 %v425
      %v461 = vunpack.c.l.b16 %v426
      %v462 = vunpack.c.h.b16 %v426
      %v463 = vunpack.c.l.b16 %v427
      %v464 = vunpack.c.h.b16 %v427
      %v465 = vunpack.c.l.b16 %v428
      %v466 = vunpack.c.h.b16 %v428
      %v467 = vunpack.c.l.b16 %v429
      %v468 = vunpack.c.h.b16 %v429
      %v469 = vunpack.c.l.b16 %v430
      %v470 = vunpack.c.h.b16 %v430
      %v471 = vunpack.c.l.b16 %v431
      %v472 = vunpack.c.h.b16 %v431
      %v473 = vunpack.c.l.b16 %v432
      %v474 = vunpack.c.h.b16 %v432
      %v475 = vunpack.c.l.b16 %v433
      %v476 = vunpack.c.h.b16 %v433
      %v477 = vunpack.c.l.b16 %v434
      %v478 = vunpack.c.h.b16 %v434
      %v479 = vunpack.c.l.b16 %v435
      %v480 = vunpack.c.h.b16 %v435
      %v481 = vunpack.c.l.b16 %v436
      %v482 = vunpack.c.h.b16 %v436
      %v483 = vunpack.c.l.b16 %v437
      %v484 = vunpack.c.h.b16 %v437
      %v485 = vunpack.c.l.b16 %v438
      %v486 = vunpack.c.h.b16 %v438
      %v487 = vpack.c.b16 %v455, %v455
      %v488 = vpack.c.b16 %v456, %v456
      %v489 = vpack.c.b16 %v457, %v457
      %v490 = vpack.c.b16 %v458, %v458
      %v491 = vpack.c.b16 %v459, %v459
      %v492 = vpack.c.b16 %v460, %v460
      %v493 = vpack.c.b16 %v461, %v461
      %v494 = vpack.c.b16 %v462, %v462
      %v495 = vpack.c.b16 %v463, %v463
      %v496 = vpack.c.b16 %v464, %v464
      %v497 = vpack.c.b16 %v465, %v465
      %v498 = vpack.c.b16 %v466, %v466
      %v499 = vpack.c.b16 %v467, %v467
      %v500 = vpack.c.b16 %v468, %v468
      %v501 = vpack.c.b16 %v469, %v469
      %v502 = vpack.c.b16 %v470, %v470
      %v503 = vpack.c.b16 %v471, %v471
      %v504 = vpack.c.b16 %v472, %v472
      %v505 = vpack.c.b16 %v473, %v473
      %v506 = vpack.c.b16 %v474, %v474
      %v507 = vpack.c.b16 %v475, %v475
      %v508 = vpack.c.b16 %v476, %v476
      %v509 = vpack.c.b16 %v477, %v477
      %v510 = vpack.c.b16 %v478, %v478
      %v511 = vpack.c.b16 %v479, %v479
      %v512 = vpack.c.b16 %v480, %v480
      %v513 = vpack.c.b16 %v481, %v481
      %v514 = vpack.c.b16 %v482, %v482
      %v515 = vpack.c.b16 %v483, %v483
      %v516 = vpack.c.b16 %v484, %v484
      %v517 = vpack.c.b16 %v485, %v485
      %v518 = vpack.c.b16 %v486, %v486
      %vm519 = vsmask.f32 4368
      %vm520 = vmor %vm291, %vm519
      %v522 = vshrl.u32 %v487, 16
      %v524 = vrot.slane %v522, 7
      %v525 = vshll.u32 %v487, 16
      %v527 = vor.u32 %v524, %v525
      %v528 = vrot.slane %v524, 4
      %v530 = vshrl.u32 %v488, 16
      %v532 = vrot.slane %v530, 7
      %v533 = vshll.u32 %v488, 16
      %v535 = vor.u32 %v532, %v533
      %v536 = vsel %vm520, %v528, %v535
      %v537 = vrot.slane %v532, 4
      %v539 = vshrl.u32 %v489, 16
      %v541 = vrot.slane %v539, 7
      %v542 = vshll.u32 %v489, 16
      %v544 = vor.u32 %v541, %v542
      %v545 = vrot.slane %v541, 4
      %v547 = vshrl.u32 %v490, 16
      %v549 = vrot.slane %v547, 7
      %v550 = vshll.u32 %v490, 16
      %v552 = vor.u32 %v549, %v550
      %v553 = vsel %vm520, %v545, %v552
      %v554 = vrot.slane %v549, 4
      %v556 = vshrl.u32 %v491, 16
      %v558 = vrot.slane %v556, 7
      %v559 = vshll.u32 %v491, 16
      %v561 = vor.u32 %v558, %v559
      %v562 = vrot.slane %v558, 4
      %v564 = vshrl.u32 %v492, 16
      %v566 = vrot.slane %v564, 7
      %v567 = vshll.u32 %v492, 16
      %v569 = vor.u32 %v566, %v567
      %v570 = vsel %vm520, %v562, %v569
      %v571 = vrot.slane %v566, 4
      %v573 = vshrl.u32 %v493, 16
      %v575 = vrot.slane %v573, 7
      %v576 = vshll.u32 %v493, 16
      %v578 = vor.u32 %v575, %v576
      %v579 = vrot.slane %v575, 4
      %v581 = vshrl.u32 %v494, 16
      %v583 = vrot.slane %v581, 7
      %v584 = vshll.u32 %v494, 16
      %v586 = vor.u32 %v583, %v584
      %v587 = vsel %vm520, %v579, %v586
      %v588 = vrot.slane %v583, 4
      %v590 = vshrl.u32 %v495, 16
      %v592 = vrot.slane %v590, 7
      %v593 = vshll.u32 %v495, 16
      %v595 = vor.u32 %v592, %v593
      %v596 = vrot.slane %v592, 4
      %v598 = vshrl.u32 %v496, 16
      %v600 = vrot.slane %v598, 7
      %v601 = vshll.u32 %v496, 16
      %v603 = vor.u32 %v600, %v601
      %v604 = vsel %vm520, %v596, %v603
      %v605 = vrot.slane %v600, 4
      %v607 = vshrl.u32 %v497, 16
      %v609 = vrot.slane %v607, 7
      %v610 = vshll.u32 %v497, 16
      %v612 = vor.u32 %v609, %v610
      %v613 = vrot.slane %v609, 4
      %v615 = vshrl.u32 %v498, 16
      %v617 = vrot.slane %v615, 7
      %v618 = vshll.u32 %v498, 16
      %v620 = vor.u32 %v617, %v618
      %v621 = vsel %vm520, %v613, %v620
      %v622 = vrot.slane %v617, 4
      %v624 = vshrl.u32 %v499, 16
      %v626 = vrot.slane %v624, 7
      %v627 = vshll.u32 %v499, 16
      %v629 = vor.u32 %v626, %v627
      %v630 = vrot.slane %v626, 4
      %v632 = vshrl.u32 %v500, 16
      %v634 = vrot.slane %v632, 7
      %v635 = vshll.u32 %v500, 16
      %v637 = vor.u32 %v634, %v635
      %v638 = vsel %vm520, %v630, %v637
      %v639 = vrot.slane %v634, 4
      %v641 = vshrl.u32 %v501, 16
      %v643 = vrot.slane %v641, 7
      %v644 = vshll.u32 %v501, 16
      %v646 = vor.u32 %v643, %v644
      %v647 = vrot.slane %v643, 4
      %v649 = vshrl.u32 %v502, 16
      %v651 = vrot.slane %v649, 7
      %v652 = vshll.u32 %v502, 16
      %v654 = vor.u32 %v651, %v652
      %v655 = vsel %vm520, %v647, %v654
      %v656 = vrot.slane %v651, 4
      %v658 = vshrl.u32 %v503, 16
      %v660 = vrot.slane %v658, 7
      %v661 = vshll.u32 %v503, 16
      %v663 = vor.u32 %v660, %v661
      %v664 = vrot.slane %v660, 4
      %v666 = vshrl.u32 %v504, 16
      %v668 = vrot.slane %v666, 7
      %v669 = vshll.u32 %v504, 16
      %v671 = vor.u32 %v668, %v669
      %v672 = vsel %vm520, %v664, %v671
      %v673 = vrot.slane %v668, 4
      %v675 = vshrl.u32 %v505, 16
      %v677 = vrot.slane %v675, 7
      %v678 = vshll.u32 %v505, 16
      %v680 = vor.u32 %v677, %v678
      %v681 = vrot.slane %v677, 4
      %v683 = vshrl.u32 %v506, 16
      %v685 = vrot.slane %v683, 7
      %v686 = vshll.u32 %v506, 16
      %v688 = vor.u32 %v685, %v686
      %v689 = vsel %vm520, %v681, %v688
      %v690 = vrot.slane %v685, 4
      %v692 = vshrl.u32 %v507, 16
      %v694 = vrot.slane %v692, 7
      %v695 = vshll.u32 %v507, 16
      %v697 = vor.u32 %v694, %v695
      %v698 = vrot.slane %v694, 4
      %v700 = vshrl.u32 %v508, 16
      %v702 = vrot.slane %v700, 7
      %v703 = vshll.u32 %v508, 16
      %v705 = vor.u32 %v702, %v703
      %v706 = vsel %vm520, %v698, %v705
      %v707 = vrot.slane %v702, 4
      %v709 = vshrl.u32 %v509, 16
      %v711 = vrot.slane %v709, 7
      %v712 = vshll.u32 %v509, 16
      %v714 = vor.u32 %v711, %v712
      %v715 = vrot.slane %v711, 4
      %v717 = vshrl.u32 %v510, 16
      %v719 = vrot.slane %v717, 7
      %v720 = vshll.u32 %v510, 16
      %v722 = vor.u32 %v719, %v720
      %v723 = vsel %vm520, %v715, %v722
      %v724 = vrot.slane %v719, 4
      %v726 = vshrl.u32 %v511, 16
      %v728 = vrot.slane %v726, 7
      %v729 = vshll.u32 %v511, 16
      %v731 = vor.u32 %v728, %v729
      %v732 = vrot.slane %v728, 4
      %v734 = vshrl.u32 %v512, 16
      %v736 = vrot.slane %v734, 7
      %v737 = vshll.u32 %v512, 16
      %v739 = vor.u32 %v736, %v737
      %v740 = vsel %vm520, %v732, %v739
      %v741 = vrot.slane %v736, 4
      %v743 = vshrl.u32 %v513, 16
      %v745 = vrot.slane %v743, 7
      %v746 = vshll.u32 %v513, 16
      %v748 = vor.u32 %v745, %v746
      %v749 = vrot.slane %v745, 4
      %v751 = vshrl.u32 %v514, 16
      %v753 = vrot.slane %v751, 7
      %v754 = vshll.u32 %v514, 16
      %v756 = vor.u32 %v753, %v754
      %v757 = vsel %vm520, %v749, %v756
      %v758 = vrot.slane %v753, 4
      %v760 = vshrl.u32 %v515, 16
      %v762 = vrot.slane %v760, 7
      %v763 = vshll.u32 %v515, 16
      %v765 = vor.u32 %v762, %v763
      %v766 = vrot.slane %v762, 4
      %v768 = vshrl.u32 %v516, 16
      %v770 = vrot.slane %v768, 7
      %v771 = vshll.u32 %v516, 16
      %v773 = vor.u32 %v770, %v771
      %v774 = vsel %vm520, %v766, %v773
      %v775 = vrot.slane %v770, 4
      %v777 = vshrl.u32 %v517, 16
      %v779 = vrot.slane %v777, 7
      %v780 = vshll.u32 %v517, 16
      %v782 = vor.u32 %v779, %v780
      %v783 = vrot.slane %v779, 4
      %v785 = vshrl.u32 %v518, 16
      %v787 = vrot.slane %v785, 7
      %v788 = vshll.u32 %v518, 16
      %v790 = vor.u32 %v787, %v788
      %v791 = vsel %vm520, %v783, %v790
      %v792 = vrot.slane %v787, 4
      %vm841 = vcmask 27648
      %vm842 = vmand %vm841, %vm341
      %v843 = vld [vmem:[%s289] sm:$0xf]
      %v844 = vsel %vm842, %v527, %v843
      %845 = vst [vmem:[%s289] sm:$0xf] %v844
      %846 = vst.msk [vmem:[%s289 + $0x4] sm:$0xf] %vm280, %v536
      %v847 = vld [vmem:[%s289 + $0x8] sm:$0x1]
      %v848 = vsel %vm292, %v537, %v847
      %849 = vst [vmem:[%s289 + $0x8] sm:$0x1] %v848
      %v850 = vld [vmem:[%s289 + $0xc] sm:$0xf]
      %v851 = vsel %vm842, %v544, %v850
      %852 = vst [vmem:[%s289 + $0xc] sm:$0xf] %v851
      %853 = vst.msk [vmem:[%s289 + $0x10] sm:$0xf] %vm280, %v553
      %v854 = vld [vmem:[%s289 + $0x14] sm:$0x1]
      %v855 = vsel %vm292, %v554, %v854
      %856 = vst [vmem:[%s289 + $0x14] sm:$0x1] %v855
      %v857 = vld [vmem:[%s289 + $0x18] sm:$0xf]
      %v858 = vsel %vm842, %v561, %v857
      %859 = vst [vmem:[%s289 + $0x18] sm:$0xf] %v858
      %860 = vst.msk [vmem:[%s289 + $0x1c] sm:$0xf] %vm280, %v570
      %v861 = vld [vmem:[%s289 + $0x20] sm:$0x1]
      %v862 = vsel %vm292, %v571, %v861
      %863 = vst [vmem:[%s289 + $0x20] sm:$0x1] %v862
      %v864 = vld [vmem:[%s289 + $0x24] sm:$0xf]
      %v865 = vsel %vm842, %v578, %v864
      %866 = vst [vmem:[%s289 + $0x24] sm:$0xf] %v865
      %867 = vst.msk [vmem:[%s289 + $0x28] sm:$0xf] %vm280, %v587
      %v868 = vld [vmem:[%s289 + $0x2c] sm:$0x1]
      %v869 = vsel %vm292, %v588, %v868
      %870 = vst [vmem:[%s289 + $0x2c] sm:$0x1] %v869
      %v871 = vld [vmem:[%s289 + $0x30] sm:$0xf]
      %v872 = vsel %vm842, %v595, %v871
      %873 = vst [vmem:[%s289 + $0x30] sm:$0xf] %v872
      %874 = vst.msk [vmem:[%s289 + $0x34] sm:$0xf] %vm280, %v604
      %v875 = vld [vmem:[%s289 + $0x38] sm:$0x1]
      %v876 = vsel %vm292, %v605, %v875
      %877 = vst [vmem:[%s289 + $0x38] sm:$0x1] %v876
      %v878 = vld [vmem:[%s289 + $0x3c] sm:$0xf]
      %v879 = vsel %vm842, %v612, %v878
      %880 = vst [vmem:[%s289 + $0x3c] sm:$0xf] %v879
      %881 = vst.msk [vmem:[%s289 + $0x40] sm:$0xf] %vm280, %v621
      %v882 = vld [vmem:[%s289 + $0x44] sm:$0x1]
      %v883 = vsel %vm292, %v622, %v882
      %884 = vst [vmem:[%s289 + $0x44] sm:$0x1] %v883
      %v885 = vld [vmem:[%s289 + $0x48] sm:$0xf]
      %v886 = vsel %vm842, %v629, %v885
      %887 = vst [vmem:[%s289 + $0x48] sm:$0xf] %v886
      %888 = vst.msk [vmem:[%s289 + $0x4c] sm:$0xf] %vm280, %v638
      %v889 = vld [vmem:[%s289 + $0x50] sm:$0x1]
      %v890 = vsel %vm292, %v639, %v889
      %891 = vst [vmem:[%s289 + $0x50] sm:$0x1] %v890
      %v892 = vld [vmem:[%s289 + $0x54] sm:$0xf]
      %v893 = vsel %vm842, %v646, %v892
      %894 = vst [vmem:[%s289 + $0x54] sm:$0xf] %v893
      %895 = vst.msk [vmem:[%s289 + $0x58] sm:$0xf] %vm280, %v655
      %v896 = vld [vmem:[%s289 + $0x5c] sm:$0x1]
      %v897 = vsel %vm292, %v656, %v896
      %898 = vst [vmem:[%s289 + $0x5c] sm:$0x1] %v897
      %v899 = vld [vmem:[%s289 + $0x60] sm:$0xf]
      %v900 = vsel %vm842, %v663, %v899
      %901 = vst [vmem:[%s289 + $0x60] sm:$0xf] %v900
      %902 = vst.msk [vmem:[%s289 + $0x64] sm:$0xf] %vm280, %v672
      %v903 = vld [vmem:[%s289 + $0x68] sm:$0x1]
      %v904 = vsel %vm292, %v673, %v903
      %905 = vst [vmem:[%s289 + $0x68] sm:$0x1] %v904
      %v906 = vld [vmem:[%s289 + $0x6c] sm:$0xf]
      %v907 = vsel %vm842, %v680, %v906
      %908 = vst [vmem:[%s289 + $0x6c] sm:$0xf] %v907
      %909 = vst.msk [vmem:[%s289 + $0x70] sm:$0xf] %vm280, %v689
      %v910 = vld [vmem:[%s289 + $0x74] sm:$0x1]
      %v911 = vsel %vm292, %v690, %v910
      %912 = vst [vmem:[%s289 + $0x74] sm:$0x1] %v911
      %v913 = vld [vmem:[%s289 + $0x78] sm:$0xf]
      %v914 = vsel %vm842, %v697, %v913
      %915 = vst [vmem:[%s289 + $0x78] sm:$0xf] %v914
      %916 = vst.msk [vmem:[%s289 + $0x7c] sm:$0xf] %vm280, %v706
      %v917 = vld [vmem:[%s289 + $0x80] sm:$0x1]
      %v918 = vsel %vm292, %v707, %v917
      %919 = vst [vmem:[%s289 + $0x80] sm:$0x1] %v918
      %v920 = vld [vmem:[%s289 + $0x84] sm:$0xf]
      %v921 = vsel %vm842, %v714, %v920
      %922 = vst [vmem:[%s289 + $0x84] sm:$0xf] %v921
      %923 = vst.msk [vmem:[%s289 + $0x88] sm:$0xf] %vm280, %v723
      %v924 = vld [vmem:[%s289 + $0x8c] sm:$0x1]
      %v925 = vsel %vm292, %v724, %v924
      %926 = vst [vmem:[%s289 + $0x8c] sm:$0x1] %v925
      %v927 = vld [vmem:[%s289 + $0x90] sm:$0xf]
      %v928 = vsel %vm842, %v731, %v927
      %929 = vst [vmem:[%s289 + $0x90] sm:$0xf] %v928
      %930 = vst.msk [vmem:[%s289 + $0x94] sm:$0xf] %vm280, %v740
      %v931 = vld [vmem:[%s289 + $0x98] sm:$0x1]
      %v932 = vsel %vm292, %v741, %v931
      %933 = vst [vmem:[%s289 + $0x98] sm:$0x1] %v932
      %v934 = vld [vmem:[%s289 + $0x9c] sm:$0xf]
      %v935 = vsel %vm842, %v748, %v934
      %936 = vst [vmem:[%s289 + $0x9c] sm:$0xf] %v935
      %937 = vst.msk [vmem:[%s289 + $0xa0] sm:$0xf] %vm280, %v757
      %v938 = vld [vmem:[%s289 + $0xa4] sm:$0x1]
      %v939 = vsel %vm292, %v758, %v938
      %940 = vst [vmem:[%s289 + $0xa4] sm:$0x1] %v939
      %v941 = vld [vmem:[%s289 + $0xa8] sm:$0xf]
      %v942 = vsel %vm842, %v765, %v941
      %943 = vst [vmem:[%s289 + $0xa8] sm:$0xf] %v942
      %944 = vst.msk [vmem:[%s289 + $0xac] sm:$0xf] %vm280, %v774
      %v945 = vld [vmem:[%s289 + $0xb0] sm:$0x1]
      %v946 = vsel %vm292, %v775, %v945
      %947 = vst [vmem:[%s289 + $0xb0] sm:$0x1] %v946
      %v948 = vld [vmem:[%s289 + $0xb4] sm:$0xf]
      %v949 = vsel %vm842, %v782, %v948
      %950 = vst [vmem:[%s289 + $0xb4] sm:$0xf] %v949
      %951 = vst.msk [vmem:[%s289 + $0xb8] sm:$0xf] %vm280, %v791
      %v952 = vld [vmem:[%s289 + $0xbc] sm:$0x1]
      %v953 = vsel %vm292, %v792, %v952
      %954 = vst [vmem:[%s289 + $0xbc] sm:$0x1] %v953
      %v955 = vld [vmem:[#allocation2] sm:$0xf]
      %v956 = vld [vmem:[#allocation2 + $0x4] sm:$0xf]
      %v957 = vld [vmem:[#allocation2 + $0xc] sm:$0xf]
      %v958 = vld [vmem:[#allocation2 + $0x10] sm:$0xf]
      %v959 = vld [vmem:[#allocation2 + $0x18] sm:$0xf]
      %v960 = vld [vmem:[#allocation2 + $0x1c] sm:$0xf]
      %v961 = vld [vmem:[#allocation2 + $0x24] sm:$0xf]
      %v962 = vld [vmem:[#allocation2 + $0x28] sm:$0xf]
      %v963 = vld [vmem:[#allocation2 + $0x30] sm:$0xf]
      %v964 = vld [vmem:[#allocation2 + $0x34] sm:$0xf]
      %v965 = vld [vmem:[#allocation2 + $0x3c] sm:$0xf]
      %v966 = vld [vmem:[#allocation2 + $0x40] sm:$0xf]
      %v967 = vld [vmem:[#allocation2 + $0x48] sm:$0xf]
      %v968 = vld [vmem:[#allocation2 + $0x4c] sm:$0xf]
      %v969 = vld [vmem:[#allocation2 + $0x54] sm:$0xf]
      %v970 = vld [vmem:[#allocation2 + $0x58] sm:$0xf]
      %v971 = vld [vmem:[#allocation2 + $0x60] sm:$0xf]
      %v972 = vld [vmem:[#allocation2 + $0x64] sm:$0xf]
      %v973 = vld [vmem:[#allocation2 + $0x6c] sm:$0xf]
      %v974 = vld [vmem:[#allocation2 + $0x70] sm:$0xf]
      %v975 = vld [vmem:[#allocation2 + $0x78] sm:$0xf]
      %v976 = vld [vmem:[#allocation2 + $0x7c] sm:$0xf]
      %v977 = vld [vmem:[#allocation2 + $0x84] sm:$0xf]
      %v978 = vld [vmem:[#allocation2 + $0x88] sm:$0xf]
      %v979 = vld [vmem:[#allocation2 + $0x90] sm:$0xf]
      %v980 = vld [vmem:[#allocation2 + $0x94] sm:$0xf]
      %v981 = vld [vmem:[#allocation2 + $0x9c] sm:$0xf]
      %v982 = vld [vmem:[#allocation2 + $0xa0] sm:$0xf]
      %v983 = vld [vmem:[#allocation2 + $0xa8] sm:$0xf]
      %v984 = vld [vmem:[#allocation2 + $0xac] sm:$0xf]
      %v985 = vld [vmem:[#allocation2 + $0xb4] sm:$0xf]
      %v986 = vld [vmem:[#allocation2 + $0xb8] sm:$0xf]
      %v987 = vld [vmem:[#allocation2 + $0xc0] sm:$0xf]
      %v988 = vld [vmem:[#allocation2 + $0xc4] sm:$0xf]
      %v989 = vld [vmem:[#allocation2 + $0xcc] sm:$0xf]
      %v990 = vld [vmem:[#allocation2 + $0xd0] sm:$0xf]
      %v991 = vld [vmem:[#allocation2 + $0x8] sm:$0x1]
      %v992 = vld [vmem:[#allocation2 + $0x14] sm:$0x1]
      %v993 = vld [vmem:[#allocation2 + $0x20] sm:$0x1]
      %v994 = vld [vmem:[#allocation2 + $0x2c] sm:$0x1]
      %v995 = vld [vmem:[#allocation2 + $0x38] sm:$0x1]
      %v996 = vld [vmem:[#allocation2 + $0x44] sm:$0x1]
      %v997 = vld [vmem:[#allocation2 + $0x50] sm:$0x1]
      %v998 = vld [vmem:[#allocation2 + $0x5c] sm:$0x1]
      %v999 = vld [vmem:[#allocation2 + $0x68] sm:$0x1]
      %v1000 = vld [vmem:[#allocation2 + $0x74] sm:$0x1]
      %v1001 = vld [vmem:[#allocation2 + $0x80] sm:$0x1]
      %v1002 = vld [vmem:[#allocation2 + $0x8c] sm:$0x1]
      %v1003 = vld [vmem:[#allocation2 + $0x98] sm:$0x1]
      %v1004 = vld [vmem:[#allocation2 + $0xa4] sm:$0x1]
      %v1005 = vld [vmem:[#allocation2 + $0xb0] sm:$0x1]
      %v1006 = vld [vmem:[#allocation2 + $0xbc] sm:$0x1]
      %v1007 = vld [vmem:[#allocation2 + $0xc8] sm:$0x1]
      %v1008 = vld [vmem:[#allocation2 + $0xd4] sm:$0x1]
      %v1009 = vld [vmem:[#allocation2] sm:$0xe]
      %v1010 = vld [vmem:[#allocation2 + $0xc] sm:$0xe]
      %v1011 = vld [vmem:[#allocation2 + $0x18] sm:$0xe]
      %v1012 = vld [vmem:[#allocation2 + $0x24] sm:$0xe]
      %v1013 = vld [vmem:[#allocation2 + $0x30] sm:$0xe]
      %v1014 = vld [vmem:[#allocation2 + $0x3c] sm:$0xe]
      %v1015 = vld [vmem:[#allocation2 + $0x48] sm:$0xe]
      %v1016 = vld [vmem:[#allocation2 + $0x54] sm:$0xe]
      %v1017 = vld [vmem:[#allocation2 + $0x60] sm:$0xe]
      %v1018 = vld [vmem:[#allocation2 + $0x6c] sm:$0xe]
      %v1019 = vld [vmem:[#allocation2 + $0x78] sm:$0xe]
      %v1020 = vld [vmem:[#allocation2 + $0x84] sm:$0xe]
      %v1021 = vld [vmem:[#allocation2 + $0x90] sm:$0xe]
      %v1022 = vld [vmem:[#allocation2 + $0x9c] sm:$0xe]
      %v1023 = vld [vmem:[#allocation2 + $0xa8] sm:$0xe]
      %v1024 = vld [vmem:[#allocation2 + $0xb4] sm:$0xe]
      %v1025 = vld [vmem:[#allocation2 + $0xc0] sm:$0xe]
      %v1026 = vld [vmem:[#allocation2 + $0xcc] sm:$0xe]
      %v1059 = vunpack.c.l.b16 %v955
      %v1060 = vunpack.c.l.b16 %v956
      %v1061 = vunpack.c.l.b16 %v957
      %v1062 = vunpack.c.l.b16 %v958
      %v1063 = vunpack.c.l.b16 %v959
      %v1064 = vunpack.c.l.b16 %v960
      %v1065 = vunpack.c.l.b16 %v961
      %v1066 = vunpack.c.l.b16 %v962
      %v1067 = vunpack.c.l.b16 %v963
      %v1068 = vunpack.c.l.b16 %v964
      %v1069 = vunpack.c.l.b16 %v965
      %v1070 = vunpack.c.l.b16 %v966
      %v1071 = vunpack.c.l.b16 %v967
      %v1072 = vunpack.c.l.b16 %v968
      %v1073 = vunpack.c.l.b16 %v969
      %v1074 = vunpack.c.l.b16 %v970
      %v1075 = vunpack.c.l.b16 %v971
      %v1076 = vunpack.c.l.b16 %v972
      %v1077 = vunpack.c.l.b16 %v973
      %v1078 = vunpack.c.l.b16 %v974
      %v1079 = vunpack.c.l.b16 %v975
      %v1080 = vunpack.c.l.b16 %v976
      %v1081 = vunpack.c.l.b16 %v977
      %v1082 = vunpack.c.l.b16 %v978
      %v1083 = vunpack.c.l.b16 %v979
      %v1084 = vunpack.c.l.b16 %v980
      %v1085 = vunpack.c.l.b16 %v981
      %v1086 = vunpack.c.l.b16 %v982
      %v1087 = vunpack.c.l.b16 %v983
      %v1088 = vunpack.c.l.b16 %v984
      %v1089 = vunpack.c.l.b16 %v985
      %v1090 = vunpack.c.l.b16 %v986
      %v1091 = vpack.c.b16 %v1060, %v1059
      %v1092 = vpack.c.b16 %v1062, %v1061
      %v1093 = vpack.c.b16 %v1064, %v1063
      %v1094 = vpack.c.b16 %v1066, %v1065
      %v1095 = vpack.c.b16 %v1068, %v1067
      %v1096 = vpack.c.b16 %v1070, %v1069
      %v1097 = vpack.c.b16 %v1072, %v1071
      %v1098 = vpack.c.b16 %v1074, %v1073
      %v1099 = vpack.c.b16 %v1076, %v1075
      %v1100 = vpack.c.b16 %v1078, %v1077
      %v1101 = vpack.c.b16 %v1080, %v1079
      %v1102 = vpack.c.b16 %v1082, %v1081
      %v1103 = vpack.c.b16 %v1084, %v1083
      %v1104 = vpack.c.b16 %v1086, %v1085
      %v1105 = vpack.c.b16 %v1088, %v1087
      %v1106 = vpack.c.b16 %v1090, %v1089
      %v1109 = vunpack.c.l.b16 %v987
      %v1110 = vunpack.c.l.b16 %v988
      %v1111 = vpack.c.b16 %v1110, %v1109
      %1112 = vrot.lane.b32.xlu0 %v1092, 4
      %v1113 = vpop.permute.xlu0 %1112
      %1114 = vrot.lane.b32.xlu0 %v1093, 4
      %v1115 = vpop.permute.xlu0 %1114
      %1116 = vrot.lane.b32.xlu0 %v1094, 4
      %v1117 = vpop.permute.xlu0 %1116
      %1118 = vrot.lane.b32.xlu0 %v1095, 4
      %v1119 = vpop.permute.xlu0 %1118
      %1120 = vrot.lane.b32.xlu0 %v1096, 4
      %v1121 = vpop.permute.xlu0 %1120
      %1122 = vrot.lane.b32.xlu0 %v1097, 4
      %v1123 = vpop.permute.xlu0 %1122
      %1124 = vrot.lane.b32.xlu0 %v1098, 4
      %v1125 = vpop.permute.xlu0 %1124
      %1126 = vrot.lane.b32.xlu0 %v1099, 4
      %v1127 = vpop.permute.xlu0 %1126
      %1128 = vrot.lane.b32.xlu0 %v1100, 4
      %v1129 = vpop.permute.xlu0 %1128
      %1130 = vrot.lane.b32.xlu0 %v1101, 4
      %v1131 = vpop.permute.xlu0 %1130
      %1132 = vrot.lane.b32.xlu0 %v1102, 4
      %v1133 = vpop.permute.xlu0 %1132
      %1134 = vrot.lane.b32.xlu0 %v1103, 4
      %v1135 = vpop.permute.xlu0 %1134
      %1136 = vrot.lane.b32.xlu0 %v1104, 4
      %v1137 = vpop.permute.xlu0 %1136
      %1138 = vrot.lane.b32.xlu0 %v1105, 4
      %v1139 = vpop.permute.xlu0 %1138
      %1140 = vrot.lane.b32.xlu0 %v1106, 4
      %v1141 = vpop.permute.xlu0 %1140
      %1142 = vrot.lane.b32.xlu0 %v1111, 4
      %v1143 = vpop.permute.xlu0 %1142
      %v1146 = vunpack.c.l.b16 %v989
      %v1147 = vunpack.c.l.b16 %v990
      %v1148 = vpack.c.b16 %v1147, %v1146
      %1149 = vrot.lane.b32.xlu0 %v1093, 8
      %v1150 = vpop.permute.xlu0 %1149
      %1151 = vrot.lane.b32.xlu0 %v1094, 8
      %v1152 = vpop.permute.xlu0 %1151
      %1153 = vrot.lane.b32.xlu0 %v1095, 8
      %v1154 = vpop.permute.xlu0 %1153
      %1155 = vrot.lane.b32.xlu0 %v1096, 8
      %v1156 = vpop.permute.xlu0 %1155
      %1157 = vrot.lane.b32.xlu0 %v1097, 8
      %v1158 = vpop.permute.xlu0 %1157
      %1159 = vrot.lane.b32.xlu0 %v1098, 8
      %v1160 = vpop.permute.xlu0 %1159
      %1161 = vrot.lane.b32.xlu0 %v1099, 8
      %v1162 = vpop.permute.xlu0 %1161
      %1163 = vrot.lane.b32.xlu0 %v1100, 8
      %v1164 = vpop.permute.xlu0 %1163
      %1165 = vrot.lane.b32.xlu0 %v1101, 8
      %v1166 = vpop.permute.xlu0 %1165
      %1167 = vrot.lane.b32.xlu0 %v1102, 8
      %v1168 = vpop.permute.xlu0 %1167
      %1169 = vrot.lane.b32.xlu0 %v1103, 8
      %v1170 = vpop.permute.xlu0 %1169
      %1171 = vrot.lane.b32.xlu0 %v1104, 8
      %v1172 = vpop.permute.xlu0 %1171
      %1173 = vrot.lane.b32.xlu0 %v1105, 8
      %v1174 = vpop.permute.xlu0 %1173
      %1175 = vrot.lane.b32.xlu0 %v1106, 8
      %v1176 = vpop.permute.xlu0 %1175
      %1177 = vrot.lane.b32.xlu0 %v1111, 8
      %v1178 = vpop.permute.xlu0 %1177
      %1179 = vrot.lane.b32.xlu0 %v1148, 8
      %v1180 = vpop.permute.xlu0 %1179
      %v1197 = vunpack.c.l.b16 %v991
      %v1198 = vunpack.c.l.b16 %v992
      %v1199 = vunpack.c.l.b16 %v993
      %v1200 = vunpack.c.l.b16 %v994
      %v1201 = vunpack.c.l.b16 %v995
      %v1202 = vunpack.c.l.b16 %v996
      %v1203 = vunpack.c.l.b16 %v997
      %v1204 = vunpack.c.l.b16 %v998
      %v1205 = vunpack.c.l.b16 %v999
      %v1206 = vunpack.c.l.b16 %v1000
      %v1207 = vunpack.c.l.b16 %v1001
      %v1208 = vunpack.c.l.b16 %v1002
      %v1209 = vunpack.c.l.b16 %v1003
      %v1210 = vunpack.c.l.b16 %v1004
      %v1211 = vunpack.c.l.b16 %v1005
      %v1212 = vunpack.c.l.b16 %v1006
      %v1213 = vpack.c.b16 %v1197, %v1197
      %v1214 = vpack.c.b16 %v1198, %v1198
      %v1215 = vpack.c.b16 %v1199, %v1199
      %v1216 = vpack.c.b16 %v1200, %v1200
      %v1217 = vpack.c.b16 %v1201, %v1201
      %v1218 = vpack.c.b16 %v1202, %v1202
      %v1219 = vpack.c.b16 %v1203, %v1203
      %v1220 = vpack.c.b16 %v1204, %v1204
      %v1221 = vpack.c.b16 %v1205, %v1205
      %v1222 = vpack.c.b16 %v1206, %v1206
      %v1223 = vpack.c.b16 %v1207, %v1207
      %v1224 = vpack.c.b16 %v1208, %v1208
      %v1225 = vpack.c.b16 %v1209, %v1209
      %v1226 = vpack.c.b16 %v1210, %v1210
      %v1227 = vpack.c.b16 %v1211, %v1211
      %v1228 = vpack.c.b16 %v1212, %v1212
      %vm1229 = vsmask.f32 7424
      %v1231 = vshrl.u32 %v1091, 16
      %v1233 = vshll.u32 %v1091, 16
      %v1235 = vrot.slane %v1233, 1
      %v1236 = vor.u32 %v1231, %v1235
      %v1238 = vshll.u32 %v1213, 16
      %v1240 = vrot.slane %v1238, 1
      %v1241 = vsel %vm1229, %v1236, %v1240
      %v1243 = vshrl.u32 %v1092, 16
      %v1245 = vshll.u32 %v1092, 16
      %v1247 = vrot.slane %v1245, 1
      %v1248 = vor.u32 %v1243, %v1247
      %v1250 = vshll.u32 %v1214, 16
      %v1252 = vrot.slane %v1250, 1
      %v1253 = vsel %vm1229, %v1248, %v1252
      %v1255 = vshrl.u32 %v1093, 16
      %v1257 = vshll.u32 %v1093, 16
      %v1259 = vrot.slane %v1257, 1
      %v1260 = vor.u32 %v1255, %v1259
      %v1262 = vshll.u32 %v1215, 16
      %v1264 = vrot.slane %v1262, 1
      %v1265 = vsel %vm1229, %v1260, %v1264
      %v1267 = vshrl.u32 %v1094, 16
      %v1269 = vshll.u32 %v1094, 16
      %v1271 = vrot.slane %v1269, 1
      %v1272 = vor.u32 %v1267, %v1271
      %v1274 = vshll.u32 %v1216, 16
      %v1276 = vrot.slane %v1274, 1
      %v1277 = vsel %vm1229, %v1272, %v1276
      %v1279 = vshrl.u32 %v1095, 16
      %v1281 = vshll.u32 %v1095, 16
      %v1283 = vrot.slane %v1281, 1
      %v1284 = vor.u32 %v1279, %v1283
      %v1286 = vshll.u32 %v1217, 16
      %v1288 = vrot.slane %v1286, 1
      %v1289 = vsel %vm1229, %v1284, %v1288
      %v1291 = vshrl.u32 %v1096, 16
      %v1293 = vshll.u32 %v1096, 16
      %v1295 = vrot.slane %v1293, 1
      %v1296 = vor.u32 %v1291, %v1295
      %v1298 = vshll.u32 %v1218, 16
      %v1300 = vrot.slane %v1298, 1
      %v1301 = vsel %vm1229, %v1296, %v1300
      %v1303 = vshrl.u32 %v1097, 16
      %v1305 = vshll.u32 %v1097, 16
      %v1307 = vrot.slane %v1305, 1
      %v1308 = vor.u32 %v1303, %v1307
      %v1310 = vshll.u32 %v1219, 16
      %v1312 = vrot.slane %v1310, 1
      %v1313 = vsel %vm1229, %v1308, %v1312
      %v1315 = vshrl.u32 %v1098, 16
      %v1317 = vshll.u32 %v1098, 16
      %v1319 = vrot.slane %v1317, 1
      %v1320 = vor.u32 %v1315, %v1319
      %v1322 = vshll.u32 %v1220, 16
      %v1324 = vrot.slane %v1322, 1
      %v1325 = vsel %vm1229, %v1320, %v1324
      %v1327 = vshrl.u32 %v1099, 16
      %v1329 = vshll.u32 %v1099, 16
      %v1331 = vrot.slane %v1329, 1
      %v1332 = vor.u32 %v1327, %v1331
      %v1334 = vshll.u32 %v1221, 16
      %v1336 = vrot.slane %v1334, 1
      %v1337 = vsel %vm1229, %v1332, %v1336
      %v1339 = vshrl.u32 %v1100, 16
      %v1341 = vshll.u32 %v1100, 16
      %v1343 = vrot.slane %v1341, 1
      %v1344 = vor.u32 %v1339, %v1343
      %v1346 = vshll.u32 %v1222, 16
      %v1348 = vrot.slane %v1346, 1
      %v1349 = vsel %vm1229, %v1344, %v1348
      %v1351 = vshrl.u32 %v1101, 16
      %v1353 = vshll.u32 %v1101, 16
      %v1355 = vrot.slane %v1353, 1
      %v1356 = vor.u32 %v1351, %v1355
      %v1358 = vshll.u32 %v1223, 16
      %v1360 = vrot.slane %v1358, 1
      %v1361 = vsel %vm1229, %v1356, %v1360
      %v1363 = vshrl.u32 %v1102, 16
      %v1365 = vshll.u32 %v1102, 16
      %v1367 = vrot.slane %v1365, 1
      %v1368 = vor.u32 %v1363, %v1367
      %v1370 = vshll.u32 %v1224, 16
      %v1372 = vrot.slane %v1370, 1
      %v1373 = vsel %vm1229, %v1368, %v1372
      %v1375 = vshrl.u32 %v1103, 16
      %v1377 = vshll.u32 %v1103, 16
      %v1379 = vrot.slane %v1377, 1
      %v1380 = vor.u32 %v1375, %v1379
      %v1382 = vshll.u32 %v1225, 16
      %v1384 = vrot.slane %v1382, 1
      %v1385 = vsel %vm1229, %v1380, %v1384
      %v1387 = vshrl.u32 %v1104, 16
      %v1389 = vshll.u32 %v1104, 16
      %v1391 = vrot.slane %v1389, 1
      %v1392 = vor.u32 %v1387, %v1391
      %v1394 = vshll.u32 %v1226, 16
      %v1396 = vrot.slane %v1394, 1
      %v1397 = vsel %vm1229, %v1392, %v1396
      %v1399 = vshrl.u32 %v1105, 16
      %v1401 = vshll.u32 %v1105, 16
      %v1403 = vrot.slane %v1401, 1
      %v1404 = vor.u32 %v1399, %v1403
      %v1406 = vshll.u32 %v1227, 16
      %v1408 = vrot.slane %v1406, 1
      %v1409 = vsel %vm1229, %v1404, %v1408
      %v1411 = vshrl.u32 %v1106, 16
      %v1413 = vshll.u32 %v1106, 16
      %v1415 = vrot.slane %v1413, 1
      %v1416 = vor.u32 %v1411, %v1415
      %v1418 = vshll.u32 %v1228, 16
      %v1420 = vrot.slane %v1418, 1
      %v1421 = vsel %vm1229, %v1416, %v1420
      %1422 = vrot.lane.b32.xlu0 %v1241, 12
      %v1423 = vpop.permute.xlu0 %1422
      %1424 = vrot.lane.b32.xlu0 %v1253, 12
      %v1425 = vpop.permute.xlu0 %1424
      %1426 = vrot.lane.b32.xlu0 %v1265, 12
      %v1427 = vpop.permute.xlu0 %1426
      %1428 = vrot.lane.b32.xlu0 %v1277, 12
      %v1429 = vpop.permute.xlu0 %1428
      %1430 = vrot.lane.b32.xlu0 %v1289, 12
      %v1431 = vpop.permute.xlu0 %1430
      %1432 = vrot.lane.b32.xlu0 %v1301, 12
      %v1433 = vpop.permute.xlu0 %1432
      %1434 = vrot.lane.b32.xlu0 %v1313, 12
      %v1435 = vpop.permute.xlu0 %1434
      %1436 = vrot.lane.b32.xlu0 %v1325, 12
      %v1437 = vpop.permute.xlu0 %1436
      %1438 = vrot.lane.b32.xlu0 %v1337, 12
      %v1439 = vpop.permute.xlu0 %1438
      %1440 = vrot.lane.b32.xlu0 %v1349, 12
      %v1441 = vpop.permute.xlu0 %1440
      %1442 = vrot.lane.b32.xlu0 %v1361, 12
      %v1443 = vpop.permute.xlu0 %1442
      %1444 = vrot.lane.b32.xlu0 %v1373, 12
      %v1445 = vpop.permute.xlu0 %1444
      %1446 = vrot.lane.b32.xlu0 %v1385, 12
      %v1447 = vpop.permute.xlu0 %1446
      %1448 = vrot.lane.b32.xlu0 %v1397, 12
      %v1449 = vpop.permute.xlu0 %1448
      %1450 = vrot.lane.b32.xlu0 %v1409, 12
      %v1451 = vpop.permute.xlu0 %1450
      %1452 = vrot.lane.b32.xlu0 %v1421, 12
      %v1453 = vpop.permute.xlu0 %1452
      %v1455 = vunpack.c.l.b16 %v1007
      %v1456 = vpack.c.b16 %v1455, %v1455
      %v1458 = vshrl.u32 %v1111, 16
      %v1460 = vshll.u32 %v1111, 16
      %v1462 = vrot.slane %v1460, 1
      %v1463 = vor.u32 %v1458, %v1462
      %v1465 = vshll.u32 %v1456, 16
      %v1467 = vrot.slane %v1465, 1
      %v1468 = vsel %vm1229, %v1463, %v1467
      %1469 = vrot.lane.b32.xlu0 %v1253, 16
      %v1470 = vpop.permute.xlu0 %1469
      %1471 = vrot.lane.b32.xlu0 %v1265, 16
      %v1472 = vpop.permute.xlu0 %1471
      %1473 = vrot.lane.b32.xlu0 %v1277, 16
      %v1474 = vpop.permute.xlu0 %1473
      %1475 = vrot.lane.b32.xlu0 %v1289, 16
      %v1476 = vpop.permute.xlu0 %1475
      %1477 = vrot.lane.b32.xlu0 %v1301, 16
      %v1478 = vpop.permute.xlu0 %1477
      %1479 = vrot.lane.b32.xlu0 %v1313, 16
      %v1480 = vpop.permute.xlu0 %1479
      %1481 = vrot.lane.b32.xlu0 %v1325, 16
      %v1482 = vpop.permute.xlu0 %1481
      %1483 = vrot.lane.b32.xlu0 %v1337, 16
      %v1484 = vpop.permute.xlu0 %1483
      %1485 = vrot.lane.b32.xlu0 %v1349, 16
      %v1486 = vpop.permute.xlu0 %1485
      %1487 = vrot.lane.b32.xlu0 %v1361, 16
      %v1488 = vpop.permute.xlu0 %1487
      %1489 = vrot.lane.b32.xlu0 %v1373, 16
      %v1490 = vpop.permute.xlu0 %1489
      %1491 = vrot.lane.b32.xlu0 %v1385, 16
      %v1492 = vpop.permute.xlu0 %1491
      %1493 = vrot.lane.b32.xlu0 %v1397, 16
      %v1494 = vpop.permute.xlu0 %1493
      %1495 = vrot.lane.b32.xlu0 %v1409, 16
      %v1496 = vpop.permute.xlu0 %1495
      %1497 = vrot.lane.b32.xlu0 %v1421, 16
      %v1498 = vpop.permute.xlu0 %1497
      %1499 = vrot.lane.b32.xlu0 %v1468, 16
      %v1500 = vpop.permute.xlu0 %1499
      %v1502 = vunpack.c.l.b16 %v1008
      %v1503 = vpack.c.b16 %v1502, %v1502
      %v1505 = vshrl.u32 %v1148, 16
      %v1507 = vshll.u32 %v1148, 16
      %v1509 = vrot.slane %v1507, 1
      %v1510 = vor.u32 %v1505, %v1509
      %v1512 = vshll.u32 %v1503, 16
      %v1514 = vrot.slane %v1512, 1
      %v1515 = vsel %vm1229, %v1510, %v1514
      %1516 = vrot.lane.b32.xlu0 %v1265, 20
      %v1517 = vpop.permute.xlu0 %1516
      %1518 = vrot.lane.b32.xlu0 %v1277, 20
      %v1519 = vpop.permute.xlu0 %1518
      %1520 = vrot.lane.b32.xlu0 %v1289, 20
      %v1521 = vpop.permute.xlu0 %1520
      %1522 = vrot.lane.b32.xlu0 %v1301, 20
      %v1523 = vpop.permute.xlu0 %1522
      %1524 = vrot.lane.b32.xlu0 %v1313, 20
      %v1525 = vpop.permute.xlu0 %1524
      %1526 = vrot.lane.b32.xlu0 %v1325, 20
      %v1527 = vpop.permute.xlu0 %1526
      %1528 = vrot.lane.b32.xlu0 %v1337, 20
      %v1529 = vpop.permute.xlu0 %1528
      %1530 = vrot.lane.b32.xlu0 %v1349, 20
      %v1531 = vpop.permute.xlu0 %1530
      %1532 = vrot.lane.b32.xlu0 %v1361, 20
      %v1533 = vpop.permute.xlu0 %1532
      %1534 = vrot.lane.b32.xlu0 %v1373, 20
      %v1535 = vpop.permute.xlu0 %1534
      %1536 = vrot.lane.b32.xlu0 %v1385, 20
      %v1537 = vpop.permute.xlu0 %1536
      %1538 = vrot.lane.b32.xlu0 %v1397, 20
      %v1539 = vpop.permute.xlu0 %1538
      %1540 = vrot.lane.b32.xlu0 %v1409, 20
      %v1541 = vpop.permute.xlu0 %1540
      %1542 = vrot.lane.b32.xlu0 %v1421, 20
      %v1543 = vpop.permute.xlu0 %1542
      %1544 = vrot.lane.b32.xlu0 %v1468, 20
      %v1545 = vpop.permute.xlu0 %1544
      %1546 = vrot.lane.b32.xlu0 %v1515, 20
      %v1547 = vpop.permute.xlu0 %1546
      %v1564 = vunpack.c.l.b16 %v1009
      %v1565 = vunpack.c.l.b16 %v1010
      %v1566 = vunpack.c.l.b16 %v1011
      %v1567 = vunpack.c.l.b16 %v1012
      %v1568 = vunpack.c.l.b16 %v1013
      %v1569 = vunpack.c.l.b16 %v1014
      %v1570 = vunpack.c.l.b16 %v1015
      %v1571 = vunpack.c.l.b16 %v1016
      %v1572 = vunpack.c.l.b16 %v1017
      %v1573 = vunpack.c.l.b16 %v1018
      %v1574 = vunpack.c.l.b16 %v1019
      %v1575 = vunpack.c.l.b16 %v1020
      %v1576 = vunpack.c.l.b16 %v1021
      %v1577 = vunpack.c.l.b16 %v1022
      %v1578 = vunpack.c.l.b16 %v1023
      %v1579 = vunpack.c.l.b16 %v1024
      %v1580 = vpack.c.b16 %v1060, %v1564
      %v1581 = vpack.c.b16 %v1062, %v1565
      %v1582 = vpack.c.b16 %v1064, %v1566
      %v1583 = vpack.c.b16 %v1066, %v1567
      %v1584 = vpack.c.b16 %v1068, %v1568
      %v1585 = vpack.c.b16 %v1070, %v1569
      %v1586 = vpack.c.b16 %v1072, %v1570
      %v1587 = vpack.c.b16 %v1074, %v1571
      %v1588 = vpack.c.b16 %v1076, %v1572
      %v1589 = vpack.c.b16 %v1078, %v1573
      %v1590 = vpack.c.b16 %v1080, %v1574
      %v1591 = vpack.c.b16 %v1082, %v1575
      %v1592 = vpack.c.b16 %v1084, %v1576
      %v1593 = vpack.c.b16 %v1086, %v1577
      %v1594 = vpack.c.b16 %v1088, %v1578
      %v1595 = vpack.c.b16 %v1090, %v1579
      %vm1596 = vcmask 1046528
      %v1597 = vrot.slane %v1580, 1
      %v1598 = vrot.slane %v1213, 1
      %v1599 = vsel %vm1596, %v1597, %v1598
      %v1600 = vrot.slane %v1581, 1
      %v1601 = vrot.slane %v1214, 1
      %v1602 = vsel %vm1596, %v1600, %v1601
      %v1603 = vrot.slane %v1582, 1
      %v1604 = vrot.slane %v1215, 1
      %v1605 = vsel %vm1596, %v1603, %v1604
      %v1606 = vrot.slane %v1583, 1
      %v1607 = vrot.slane %v1216, 1
      %v1608 = vsel %vm1596, %v1606, %v1607
      %v1609 = vrot.slane %v1584, 1
      %v1610 = vrot.slane %v1217, 1
      %v1611 = vsel %vm1596, %v1609, %v1610
      %v1612 = vrot.slane %v1585, 1
      %v1613 = vrot.slane %v1218, 1
      %v1614 = vsel %vm1596, %v1612, %v1613
      %v1615 = vrot.slane %v1586, 1
      %v1616 = vrot.slane %v1219, 1
      %v1617 = vsel %vm1596, %v1615, %v1616
      %v1618 = vrot.slane %v1587, 1
      %v1619 = vrot.slane %v1220, 1
      %v1620 = vsel %vm1596, %v1618, %v1619
      %v1621 = vrot.slane %v1588, 1
      %v1622 = vrot.slane %v1221, 1
      %v1623 = vsel %vm1596, %v1621, %v1622
      %v1624 = vrot.slane %v1589, 1
      %v1625 = vrot.slane %v1222, 1
      %v1626 = vsel %vm1596, %v1624, %v1625
      %v1627 = vrot.slane %v1590, 1
      %v1628 = vrot.slane %v1223, 1
      %v1629 = vsel %vm1596, %v1627, %v1628
      %v1630 = vrot.slane %v1591, 1
      %v1631 = vrot.slane %v1224, 1
      %v1632 = vsel %vm1596, %v1630, %v1631
      %v1633 = vrot.slane %v1592, 1
      %v1634 = vrot.slane %v1225, 1
      %v1635 = vsel %vm1596, %v1633, %v1634
      %v1636 = vrot.slane %v1593, 1
      %v1637 = vrot.slane %v1226, 1
      %v1638 = vsel %vm1596, %v1636, %v1637
      %v1639 = vrot.slane %v1594, 1
      %v1640 = vrot.slane %v1227, 1
      %v1641 = vsel %vm1596, %v1639, %v1640
      %v1642 = vrot.slane %v1595, 1
      %v1643 = vrot.slane %v1228, 1
      %v1644 = vsel %vm1596, %v1642, %v1643
      %1645 = vrot.lane.b32.xlu0 %v1599, 24
      %v1646 = vpop.permute.xlu0 %1645
      %1647 = vrot.lane.b32.xlu0 %v1602, 24
      %v1648 = vpop.permute.xlu0 %1647
      %1649 = vrot.lane.b32.xlu0 %v1605, 24
      %v1650 = vpop.permute.xlu0 %1649
      %1651 = vrot.lane.b32.xlu0 %v1608, 24
      %v1652 = vpop.permute.xlu0 %1651
      %1653 = vrot.lane.b32.xlu0 %v1611, 24
      %v1654 = vpop.permute.xlu0 %1653
      %1655 = vrot.lane.b32.xlu0 %v1614, 24
      %v1656 = vpop.permute.xlu0 %1655
      %1657 = vrot.lane.b32.xlu0 %v1617, 24
      %v1658 = vpop.permute.xlu0 %1657
      %1659 = vrot.lane.b32.xlu0 %v1620, 24
      %v1660 = vpop.permute.xlu0 %1659
      %1661 = vrot.lane.b32.xlu0 %v1623, 24
      %v1662 = vpop.permute.xlu0 %1661
      %1663 = vrot.lane.b32.xlu0 %v1626, 24
      %v1664 = vpop.permute.xlu0 %1663
      %1665 = vrot.lane.b32.xlu0 %v1629, 24
      %v1666 = vpop.permute.xlu0 %1665
      %1667 = vrot.lane.b32.xlu0 %v1632, 24
      %v1668 = vpop.permute.xlu0 %1667
      %1669 = vrot.lane.b32.xlu0 %v1635, 24
      %v1670 = vpop.permute.xlu0 %1669
      %1671 = vrot.lane.b32.xlu0 %v1638, 24
      %v1672 = vpop.permute.xlu0 %1671
      %1673 = vrot.lane.b32.xlu0 %v1641, 24
      %v1674 = vpop.permute.xlu0 %1673
      %1675 = vrot.lane.b32.xlu0 %v1644, 24
      %v1676 = vpop.permute.xlu0 %1675
      %v1678 = vunpack.c.l.b16 %v1025
      %v1679 = vpack.c.b16 %v1110, %v1678
      %v1680 = vrot.slane %v1679, 1
      %v1681 = vrot.slane %v1456, 1
      %v1682 = vsel %vm1596, %v1680, %v1681
      %1683 = vrot.lane.b32.xlu0 %v1602, 28
      %v1684 = vpop.permute.xlu0 %1683
      %1685 = vrot.lane.b32.xlu0 %v1605, 28
      %v1686 = vpop.permute.xlu0 %1685
      %1687 = vrot.lane.b32.xlu0 %v1608, 28
      %v1688 = vpop.permute.xlu0 %1687
      %1689 = vrot.lane.b32.xlu0 %v1611, 28
      %v1690 = vpop.permute.xlu0 %1689
      %1691 = vrot.lane.b32.xlu0 %v1614, 28
      %v1692 = vpop.permute.xlu0 %1691
      %1693 = vrot.lane.b32.xlu0 %v1617, 28
      %v1694 = vpop.permute.xlu0 %1693
      %1695 = vrot.lane.b32.xlu0 %v1620, 28
      %v1696 = vpop.permute.xlu0 %1695
      %1697 = vrot.lane.b32.xlu0 %v1623, 28
      %v1698 = vpop.permute.xlu0 %1697
      %1699 = vrot.lane.b32.xlu0 %v1626, 28
      %v1700 = vpop.permute.xlu0 %1699
      %1701 = vrot.lane.b32.xlu0 %v1629, 28
      %v1702 = vpop.permute.xlu0 %1701
      %1703 = vrot.lane.b32.xlu0 %v1632, 28
      %v1704 = vpop.permute.xlu0 %1703
      %1705 = vrot.lane.b32.xlu0 %v1635, 28
      %v1706 = vpop.permute.xlu0 %1705
      %1707 = vrot.lane.b32.xlu0 %v1638, 28
      %v1708 = vpop.permute.xlu0 %1707
      %1709 = vrot.lane.b32.xlu0 %v1641, 28
      %v1710 = vpop.permute.xlu0 %1709
      %1711 = vrot.lane.b32.xlu0 %v1644, 28
      %v1712 = vpop.permute.xlu0 %1711
      %1713 = vrot.lane.b32.xlu0 %v1682, 28
      %v1714 = vpop.permute.xlu0 %1713
      %v1716 = vunpack.c.l.b16 %v1026
      %v1717 = vpack.c.b16 %v1147, %v1716
      %v1718 = vrot.slane %v1717, 1
      %v1719 = vrot.slane %v1503, 1
      %v1720 = vsel %vm1596, %v1718, %v1719
      %1721 = vrot.lane.b32.xlu0 %v1605, 32
      %v1722 = vpop.permute.xlu0 %1721
      %1723 = vrot.lane.b32.xlu0 %v1608, 32
      %v1724 = vpop.permute.xlu0 %1723
      %1725 = vrot.lane.b32.xlu0 %v1611, 32
      %v1726 = vpop.permute.xlu0 %1725
      %1727 = vrot.lane.b32.xlu0 %v1614, 32
      %v1728 = vpop.permute.xlu0 %1727
      %1729 = vrot.lane.b32.xlu0 %v1617, 32
      %v1730 = vpop.permute.xlu0 %1729
      %1731 = vrot.lane.b32.xlu0 %v1620, 32
      %v1732 = vpop.permute.xlu0 %1731
      %1733 = vrot.lane.b32.xlu0 %v1623, 32
      %v1734 = vpop.permute.xlu0 %1733
      %1735 = vrot.lane.b32.xlu0 %v1626, 32
      %v1736 = vpop.permute.xlu0 %1735
      %1737 = vrot.lane.b32.xlu0 %v1629, 32
      %v1738 = vpop.permute.xlu0 %1737
      %1739 = vrot.lane.b32.xlu0 %v1632, 32
      %v1740 = vpop.permute.xlu0 %1739
      %1741 = vrot.lane.b32.xlu0 %v1635, 32
      %v1742 = vpop.permute.xlu0 %1741
      %1743 = vrot.lane.b32.xlu0 %v1638, 32
      %v1744 = vpop.permute.xlu0 %1743
      %1745 = vrot.lane.b32.xlu0 %v1641, 32
      %v1746 = vpop.permute.xlu0 %1745
      %1747 = vrot.lane.b32.xlu0 %v1644, 32
      %v1748 = vpop.permute.xlu0 %1747
      %1749 = vrot.lane.b32.xlu0 %v1682, 32
      %v1750 = vpop.permute.xlu0 %1749
      %1751 = vrot.lane.b32.xlu0 %v1720, 32
      %v1752 = vpop.permute.xlu0 %1751
      %vm1753 = vcmask 31744
      %v1755 = vsel %vm1753, %v1091, %v1113
      %v1757 = vsel %vm1753, %v1092, %v1115
      %v1759 = vsel %vm1753, %v1093, %v1117
      %v1761 = vsel %vm1753, %v1094, %v1119
      %v1763 = vsel %vm1753, %v1095, %v1121
      %v1765 = vsel %vm1753, %v1096, %v1123
      %v1767 = vsel %vm1753, %v1097, %v1125
      %v1769 = vsel %vm1753, %v1098, %v1127
      %v1771 = vsel %vm1753, %v1099, %v1129
      %v1773 = vsel %vm1753, %v1100, %v1131
      %v1775 = vsel %vm1753, %v1101, %v1133
      %v1777 = vsel %vm1753, %v1102, %v1135
      %v1779 = vsel %vm1753, %v1103, %v1137
      %v1781 = vsel %vm1753, %v1104, %v1139
      %v1783 = vsel %vm1753, %v1105, %v1141
      %v1785 = vsel %vm1753, %v1106, %v1143
      %vm1786 = vcmask 64512
      %v1788 = vsel %vm1786, %v1755, %v1150
      %v1790 = vsel %vm1786, %v1757, %v1152
      %v1792 = vsel %vm1786, %v1759, %v1154
      %v1794 = vsel %vm1786, %v1761, %v1156
      %v1796 = vsel %vm1786, %v1763, %v1158
      %v1798 = vsel %vm1786, %v1765, %v1160
      %v1800 = vsel %vm1786, %v1767, %v1162
      %v1802 = vsel %vm1786, %v1769, %v1164
      %v1804 = vsel %vm1786, %v1771, %v1166
      %v1806 = vsel %vm1786, %v1773, %v1168
      %v1808 = vsel %vm1786, %v1775, %v1170
      %v1810 = vsel %vm1786, %v1777, %v1172
      %v1812 = vsel %vm1786, %v1779, %v1174
      %v1814 = vsel %vm1786, %v1781, %v1176
      %v1816 = vsel %vm1786, %v1783, %v1178
      %v1818 = vsel %vm1786, %v1785, %v1180
      %vm1819 = vcmask 97280
      %v1821 = vsel %vm1819, %v1788, %v1423
      %v1823 = vsel %vm1819, %v1790, %v1425
      %v1825 = vsel %vm1819, %v1792, %v1427
      %v1827 = vsel %vm1819, %v1794, %v1429
      %v1829 = vsel %vm1819, %v1796, %v1431
      %v1831 = vsel %vm1819, %v1798, %v1433
      %v1833 = vsel %vm1819, %v1800, %v1435
      %v1835 = vsel %vm1819, %v1802, %v1437
      %v1837 = vsel %vm1819, %v1804, %v1439
      %v1839 = vsel %vm1819, %v1806, %v1441
      %v1841 = vsel %vm1819, %v1808, %v1443
      %v1843 = vsel %vm1819, %v1810, %v1445
      %v1845 = vsel %vm1819, %v1812, %v1447
      %v1847 = vsel %vm1819, %v1814, %v1449
      %v1849 = vsel %vm1819, %v1816, %v1451
      %v1851 = vsel %vm1819, %v1818, %v1453
      %vm1852 = vcmask 130048
      %v1854 = vsel %vm1852, %v1821, %v1470
      %v1856 = vsel %vm1852, %v1823, %v1472
      %v1858 = vsel %vm1852, %v1825, %v1474
      %v1860 = vsel %vm1852, %v1827, %v1476
      %v1862 = vsel %vm1852, %v1829, %v1478
      %v1864 = vsel %vm1852, %v1831, %v1480
      %v1866 = vsel %vm1852, %v1833, %v1482
      %v1868 = vsel %vm1852, %v1835, %v1484
      %v1870 = vsel %vm1852, %v1837, %v1486
      %v1872 = vsel %vm1852, %v1839, %v1488
      %v1874 = vsel %vm1852, %v1841, %v1490
      %v1876 = vsel %vm1852, %v1843, %v1492
      %v1878 = vsel %vm1852, %v1845, %v1494
      %v1880 = vsel %vm1852, %v1847, %v1496
      %v1882 = vsel %vm1852, %v1849, %v1498
      %v1884 = vsel %vm1852, %v1851, %v1500
      %vm1885 = vcmask 162816
      %v1887 = vsel %vm1885, %v1854, %v1517
      %v1889 = vsel %vm1885, %v1856, %v1519
      %v1891 = vsel %vm1885, %v1858, %v1521
      %v1893 = vsel %vm1885, %v1860, %v1523
      %v1895 = vsel %vm1885, %v1862, %v1525
      %v1897 = vsel %vm1885, %v1864, %v1527
      %v1899 = vsel %vm1885, %v1866, %v1529
      %v1901 = vsel %vm1885, %v1868, %v1531
      %v1903 = vsel %vm1885, %v1870, %v1533
      %v1905 = vsel %vm1885, %v1872, %v1535
      %v1907 = vsel %vm1885, %v1874, %v1537
      %v1909 = vsel %vm1885, %v1876, %v1539
      %v1911 = vsel %vm1885, %v1878, %v1541
      %v1913 = vsel %vm1885, %v1880, %v1543
      %v1915 = vsel %vm1885, %v1882, %v1545
      %v1917 = vsel %vm1885, %v1884, %v1547
      %vm1918 = vcmask 195584
      %v1920 = vsel %vm1918, %v1887, %v1646
      %v1922 = vsel %vm1918, %v1889, %v1648
      %v1924 = vsel %vm1918, %v1891, %v1650
      %v1926 = vsel %vm1918, %v1893, %v1652
      %v1928 = vsel %vm1918, %v1895, %v1654
      %v1930 = vsel %vm1918, %v1897, %v1656
      %v1932 = vsel %vm1918, %v1899, %v1658
      %v1934 = vsel %vm1918, %v1901, %v1660
      %v1936 = vsel %vm1918, %v1903, %v1662
      %v1938 = vsel %vm1918, %v1905, %v1664
      %v1940 = vsel %vm1918, %v1907, %v1666
      %v1942 = vsel %vm1918, %v1909, %v1668
      %v1944 = vsel %vm1918, %v1911, %v1670
      %v1946 = vsel %vm1918, %v1913, %v1672
      %v1948 = vsel %vm1918, %v1915, %v1674
      %v1950 = vsel %vm1918, %v1917, %v1676
      %vm1951 = vcmask 228352
      %v1953 = vsel %vm1951, %v1920, %v1684
      %v1955 = vsel %vm1951, %v1922, %v1686
      %v1957 = vsel %vm1951, %v1924, %v1688
      %v1959 = vsel %vm1951, %v1926, %v1690
      %v1961 = vsel %vm1951, %v1928, %v1692
      %v1963 = vsel %vm1951, %v1930, %v1694
      %v1965 = vsel %vm1951, %v1932, %v1696
      %v1967 = vsel %vm1951, %v1934, %v1698
      %v1969 = vsel %vm1951, %v1936, %v1700
      %v1971 = vsel %vm1951, %v1938, %v1702
      %v1973 = vsel %vm1951, %v1940, %v1704
      %v1975 = vsel %vm1951, %v1942, %v1706
      %v1977 = vsel %vm1951, %v1944, %v1708
      %v1979 = vsel %vm1951, %v1946, %v1710
      %v1981 = vsel %vm1951, %v1948, %v1712
      %v1983 = vsel %vm1951, %v1950, %v1714
      %vm1984 = vcmask 261120
      %v1986 = vsel %vm1984, %v1953, %v1722
      %v1988 = vsel %vm1984, %v1955, %v1724
      %v1990 = vsel %vm1984, %v1957, %v1726
      %v1992 = vsel %vm1984, %v1959, %v1728
      %v1994 = vsel %vm1984, %v1961, %v1730
      %v1996 = vsel %vm1984, %v1963, %v1732
      %v1998 = vsel %vm1984, %v1965, %v1734
      %v2000 = vsel %vm1984, %v1967, %v1736
      %v2002 = vsel %vm1984, %v1969, %v1738
      %v2004 = vsel %vm1984, %v1971, %v1740
      %v2006 = vsel %vm1984, %v1973, %v1742
      %v2008 = vsel %vm1984, %v1975, %v1744
      %v2010 = vsel %vm1984, %v1977, %v1746
      %v2012 = vsel %vm1984, %v1979, %v1748
      %v2014 = vsel %vm1984, %v1981, %v1750
      %v2016 = vsel %vm1984, %v1983, %v1752
      %vm2017 = vcmask 293888
      %v2019 = vsel %vm2017, %v1986, 0
      %v2021 = vsel %vm2017, %v1988, 0
      %v2023 = vsel %vm2017, %v1990, 0
      %v2025 = vsel %vm2017, %v1992, 0
      %v2027 = vsel %vm2017, %v1994, 0
      %v2029 = vsel %vm2017, %v1996, 0
      %v2031 = vsel %vm2017, %v1998, 0
      %v2033 = vsel %vm2017, %v2000, 0
      %v2035 = vsel %vm2017, %v2002, 0
      %v2037 = vsel %vm2017, %v2004, 0
      %v2039 = vsel %vm2017, %v2006, 0
      %v2041 = vsel %vm2017, %v2008, 0
      %v2043 = vsel %vm2017, %v2010, 0
      %v2045 = vsel %vm2017, %v2012, 0
      %v2047 = vsel %vm2017, %v2014, 0
      %v2049 = vsel %vm2017, %v2016, 0
      %v2051 = vld [vmem:[%s1] sm:$0xf]
      %v2052 = vld [vmem:[%s1 + $0x4] sm:$0xf]
      %v2053 = vld [vmem:[%s1 + $0x8] sm:$0xf]
      %v2054 = vld [vmem:[%s1 + $0xc] sm:$0xf]
      %v2055 = vld [vmem:[%s1 + $0x10] sm:$0xf]
      %v2056 = vld [vmem:[%s1 + $0x14] sm:$0xf]
      %v2057 = vld [vmem:[%s1 + $0x18] sm:$0xf]
      %v2058 = vld [vmem:[%s1 + $0x1c] sm:$0xf]
      %v2059 = vld [vmem:[%s1 + $0x20] sm:$0xf]
      %v2060 = vld [vmem:[%s1 + $0x24] sm:$0xf]
      %v2061 = vld [vmem:[%s1 + $0x28] sm:$0xf]
      %v2062 = vld [vmem:[%s1 + $0x2c] sm:$0xf]
      %v2063 = vld [vmem:[%s1 + $0x30] sm:$0xf]
      %v2064 = vld [vmem:[%s1 + $0x34] sm:$0xf]
      %v2065 = vld [vmem:[%s1 + $0x38] sm:$0xf]
      %v2066 = vld [vmem:[%s1 + $0x3c] sm:$0xf]
      %v2083 = vunpack.c.l.b16 %v2051
      %v2084 = vunpack.c.l.b16 %v2052
      %v2085 = vunpack.c.l.b16 %v2053
      %v2086 = vunpack.c.l.b16 %v2054
      %v2087 = vunpack.c.l.b16 %v2055
      %v2088 = vunpack.c.l.b16 %v2056
      %v2089 = vunpack.c.l.b16 %v2057
      %v2090 = vunpack.c.l.b16 %v2058
      %v2091 = vunpack.c.l.b16 %v2059
      %v2092 = vunpack.c.l.b16 %v2060
      %v2093 = vunpack.c.l.b16 %v2061
      %v2094 = vunpack.c.l.b16 %v2062
      %v2095 = vunpack.c.l.b16 %v2063
      %v2096 = vunpack.c.l.b16 %v2064
      %v2097 = vunpack.c.l.b16 %v2065
      %v2098 = vunpack.c.l.b16 %v2066
      %v2099 = vpack.c.b16 %v2084, %v2083
      %v2100 = vpack.c.b16 %v2086, %v2085
      %v2101 = vpack.c.b16 %v2088, %v2087
      %v2102 = vpack.c.b16 %v2090, %v2089
      %v2103 = vpack.c.b16 %v2092, %v2091
      %v2104 = vpack.c.b16 %v2094, %v2093
      %v2105 = vpack.c.b16 %v2096, %v2095
      %v2106 = vpack.c.b16 %v2098, %v2097
      %2115 = vmatprep.subr.bf16.mxu0 0
      %2116 = vmatpush1.bf16.msra.mxu0 %v2099
      %2117 = vmatprep.subr.bf16.mxu0 0
      %2118 = vmatpush1.bf16.msra.mxu0 %v2100
      %2119 = vmatprep.subr.bf16.mxu0 0
      %2120 = vmatpush1.bf16.msra.mxu0 %v2101
      %2121 = vmatprep.subr.bf16.mxu0 0
      %2122 = vmatpush1.bf16.msra.mxu0 %v2102
      %2123 = vmatprep.subr.bf16.mxu0 0
      %2124 = vmatpush1.bf16.msra.mxu0 %v2103
      %2125 = vmatprep.subr.bf16.mxu0 0
      %2126 = vmatpush1.bf16.msra.mxu0 %v2104
      %2127 = vmatprep.subr.bf16.mxu0 0
      %2128 = vmatpush1.bf16.msra.mxu0 %v2105
      %2129 = vmatprep.subr.bf16.mxu0 0
      %2130 = vmatpush1.bf16.msra.mxu0 %v2106
      %2131 = vmatprep.subr.bf16.mxu0 0
      %2132 = vmatpush1.bf16.msra.mxu0 0
      %2133 = vmatprep.subr.bf16.mxu0 0
      %2134 = vmatpush1.bf16.msra.mxu0 0
      %2135 = vmatprep.subr.bf16.mxu0 0
      %2136 = vmatpush1.bf16.msra.mxu0 0
      %2137 = vmatprep.subr.bf16.mxu0 0
      %2138 = vmatpush1.bf16.msra.mxu0 0
      %2139 = vmatprep.subr.bf16.mxu0 0
      %2140 = vmatpush1.bf16.msra.mxu0 0
      %2141 = vmatprep.subr.bf16.mxu0 0
      %2142 = vmatpush1.bf16.msra.mxu0 0
      %2143 = vmatprep.subr.bf16.mxu0 0
      %2144 = vmatpush1.bf16.msra.mxu0 0
      %2145 = vmatprep.subr.bf16.mxu0 0
      %2146 = vmatpush1.bf16.msra.mxu0 0
      %2147 = vmatprep.mubr.bf16.mxu0 0
      %2148 = vmatmul.mubr.bf16.gmra.mrb[0].mxu0 %v2019
      %v2149 = vpop.f32.mrb[0].mxu0
      %v2150 = vadd.f32 0.0, %v2149
      %v2151 = vpop.f32.mrb[0].mxu0
      %v2152 = vpop.f32.mrb[0].mxu0
      %v2153 = vadd.f32 0.0, %v2152
      %v2154 = vpop.f32.mrb[0].mxu0
      %2155 = vmatprep.mubr.bf16.mxu0 0
      %2156 = vmatmul.mubr.bf16.gmra.mrb[0].mxu0 %v2021
      %v2157 = vpop.f32.mrb[0].mxu0
      %v2158 = vadd.f32 0.0, %v2157
      %v2159 = vpop.f32.mrb[0].mxu0
      %v2160 = vpop.f32.mrb[0].mxu0
      %v2161 = vadd.f32 0.0, %v2160
      %v2162 = vpop.f32.mrb[0].mxu0
      %2163 = vmatprep.mubr.bf16.mxu0 0
      %2164 = vmatmul.mubr.bf16.gmra.mrb[0].mxu0 %v2023
      %v2165 = vpop.f32.mrb[0].mxu0
      %v2166 = vadd.f32 0.0, %v2165
      %v2167 = vpop.f32.mrb[0].mxu0
      %v2168 = vpop.f32.mrb[0].mxu0
      %v2169 = vadd.f32 0.0, %v2168
      %v2170 = vpop.f32.mrb[0].mxu0
      %2171 = vmatprep.mubr.bf16.mxu0 0
      %2172 = vmatmul.mubr.bf16.gmra.mrb[0].mxu0 %v2025
      %v2173 = vpop.f32.mrb[0].mxu0
      %v2174 = vadd.f32 0.0, %v2173
      %v2175 = vpop.f32.mrb[0].mxu0
      %v2176 = vpop.f32.mrb[0].mxu0
      %v2177 = vadd.f32 0.0, %v2176
      %v2178 = vpop.f32.mrb[0].mxu0
      %2179 = vmatprep.mubr.bf16.mxu0 0
      %2180 = vmatmul.mubr.bf16.gmra.mrb[0].mxu0 %v2027
      %v2181 = vpop.f32.mrb[0].mxu0
      %v2182 = vadd.f32 0.0, %v2181
      %v2183 = vpop.f32.mrb[0].mxu0
      %v2184 = vpop.f32.mrb[0].mxu0
      %v2185 = vadd.f32 0.0, %v2184
      %v2186 = vpop.f32.mrb[0].mxu0
      %2187 = vmatprep.mubr.bf16.mxu0 0
      %2188 = vmatmul.mubr.bf16.gmra.mrb[0].mxu0 %v2029
      %v2189 = vpop.f32.mrb[0].mxu0
      %v2190 = vadd.f32 0.0, %v2189
      %v2191 = vpop.f32.mrb[0].mxu0
      %v2192 = vpop.f32.mrb[0].mxu0
      %v2193 = vadd.f32 0.0, %v2192
      %v2194 = vpop.f32.mrb[0].mxu0
      %2195 = vmatprep.mubr.bf16.mxu0 0
      %2196 = vmatmul.mubr.bf16.gmra.mrb[0].mxu0 %v2031
      %v2197 = vpop.f32.mrb[0].mxu0
      %v2198 = vadd.f32 0.0, %v2197
      %v2199 = vpop.f32.mrb[0].mxu0
      %v2200 = vpop.f32.mrb[0].mxu0
      %v2201 = vadd.f32 0.0, %v2200
      %v2202 = vpop.f32.mrb[0].mxu0
      %2203 = vmatprep.mubr.bf16.mxu0 0
      %2204 = vmatmul.mubr.bf16.gmra.mrb[0].mxu0 %v2033
      %v2205 = vpop.f32.mrb[0].mxu0
      %v2206 = vadd.f32 0.0, %v2205
      %v2207 = vpop.f32.mrb[0].mxu0
      %v2208 = vpop.f32.mrb[0].mxu0
      %v2209 = vadd.f32 0.0, %v2208
      %v2210 = vpop.f32.mrb[0].mxu0
      %2211 = vmatprep.mubr.bf16.mxu0 0
      %2212 = vmatmul.mubr.bf16.gmra.mrb[0].mxu0 %v2035
      %v2213 = vpop.f32.mrb[0].mxu0
      %v2214 = vadd.f32 0.0, %v2213
      %v2215 = vpop.f32.mrb[0].mxu0
      %v2216 = vpop.f32.mrb[0].mxu0
      %v2217 = vadd.f32 0.0, %v2216
      %v2218 = vpop.f32.mrb[0].mxu0
      %2219 = vmatprep.mubr.bf16.mxu0 0
      %2220 = vmatmul.mubr.bf16.gmra.mrb[0].mxu0 %v2037
      %v2221 = vpop.f32.mrb[0].mxu0
      %v2222 = vadd.f32 0.0, %v2221
      %v2223 = vpop.f32.mrb[0].mxu0
      %v2224 = vpop.f32.mrb[0].mxu0
      %v2225 = vadd.f32 0.0, %v2224
      %v2226 = vpop.f32.mrb[0].mxu0
      %2227 = vmatprep.mubr.bf16.mxu0 0
      %2228 = vmatmul.mubr.bf16.gmra.mrb[0].mxu0 %v2039
      %v2229 = vpop.f32.mrb[0].mxu0
      %v2230 = vadd.f32 0.0, %v2229
      %v2231 = vpop.f32.mrb[0].mxu0
      %v2232 = vpop.f32.mrb[0].mxu0
      %v2233 = vadd.f32 0.0, %v2232
      %v2234 = vpop.f32.mrb[0].mxu0
      %2235 = vmatprep.mubr.bf16.mxu0 0
      %2236 = vmatmul.mubr.bf16.gmra.mrb[0].mxu0 %v2041
      %v2237 = vpop.f32.mrb[0].mxu0
      %v2238 = vadd.f32 0.0, %v2237
      %v2239 = vpop.f32.mrb[0].mxu0
      %v2240 = vpop.f32.mrb[0].mxu0
      %v2241 = vadd.f32 0.0, %v2240
      %v2242 = vpop.f32.mrb[0].mxu0
      %2243 = vmatprep.mubr.bf16.mxu0 0
      %2244 = vmatmul.mubr.bf16.gmra.mrb[0].mxu0 %v2043
      %v2245 = vpop.f32.mrb[0].mxu0
      %v2246 = vadd.f32 0.0, %v2245
      %v2247 = vpop.f32.mrb[0].mxu0
      %v2248 = vpop.f32.mrb[0].mxu0
      %v2249 = vadd.f32 0.0, %v2248
      %v2250 = vpop.f32.mrb[0].mxu0
      %2251 = vmatprep.mubr.bf16.mxu0 0
      %2252 = vmatmul.mubr.bf16.gmra.mrb[0].mxu0 %v2045
      %v2253 = vpop.f32.mrb[0].mxu0
      %v2254 = vadd.f32 0.0, %v2253
      %v2255 = vpop.f32.mrb[0].mxu0
      %v2256 = vpop.f32.mrb[0].mxu0
      %v2257 = vadd.f32 0.0, %v2256
      %v2258 = vpop.f32.mrb[0].mxu0
      %2259 = vmatprep.mubr.bf16.mxu0 0
      %2260 = vmatmul.mubr.bf16.gmra.mrb[0].mxu0 %v2047
      %v2261 = vpop.f32.mrb[0].mxu0
      %v2262 = vadd.f32 0.0, %v2261
      %v2263 = vpop.f32.mrb[0].mxu0
      %v2264 = vpop.f32.mrb[0].mxu0
      %v2265 = vadd.f32 0.0, %v2264
      %v2266 = vpop.f32.mrb[0].mxu0
      %2267 = vmatprep.mubr.bf16.mxu0 0
      %2268 = vmatmul.mubr.bf16.gmra.mrb[0].mxu0 %v2049
      %v2269 = vpop.f32.mrb[0].mxu0
      %v2270 = vadd.f32 0.0, %v2269
      %v2271 = vpop.f32.mrb[0].mxu0
      %v2272 = vpop.f32.mrb[0].mxu0
      %v2273 = vadd.f32 0.0, %v2272
      %v2274 = vpop.f32.mrb[0].mxu0
      %2275 = vdwg.mxu0
      %v2276 = vld [vmem:[%s2] sm:$0x1]
      %v2278 = vlaneseq
      %v2279 = vshrl.u32 %v2278, 7
      %v2280 = vsub.s32 0, %v2279
      %v2281 = vrot.slane %v2276, %v2280
      %v2283 = vmul.f32 %v2150, %v2281
      %v2284 = vmul.f32 %v2153, %v2281
      %v2285 = vmul.f32 %v2158, %v2281
      %v2286 = vmul.f32 %v2161, %v2281
      %v2287 = vmul.f32 %v2166, %v2281
      %v2288 = vmul.f32 %v2169, %v2281
      %v2289 = vmul.f32 %v2174, %v2281
      %v2290 = vmul.f32 %v2177, %v2281
      %v2291 = vmul.f32 %v2182, %v2281
      %v2292 = vmul.f32 %v2185, %v2281
      %v2293 = vmul.f32 %v2190, %v2281
      %v2294 = vmul.f32 %v2193, %v2281
      %v2295 = vmul.f32 %v2198, %v2281
      %v2296 = vmul.f32 %v2201, %v2281
      %v2297 = vmul.f32 %v2206, %v2281
      %v2298 = vmul.f32 %v2209, %v2281
      %v2299 = vmul.f32 %v2214, %v2281
      %v2300 = vmul.f32 %v2217, %v2281
      %v2301 = vmul.f32 %v2222, %v2281
      %v2302 = vmul.f32 %v2225, %v2281
      %v2303 = vmul.f32 %v2230, %v2281
      %v2304 = vmul.f32 %v2233, %v2281
      %v2305 = vmul.f32 %v2238, %v2281
      %v2306 = vmul.f32 %v2241, %v2281
      %v2307 = vmul.f32 %v2246, %v2281
      %v2308 = vmul.f32 %v2249, %v2281
      %v2309 = vmul.f32 %v2254, %v2281
      %v2310 = vmul.f32 %v2257, %v2281
      %v2311 = vmul.f32 %v2262, %v2281
      %v2312 = vmul.f32 %v2265, %v2281
      %v2313 = vmul.f32 %v2270, %v2281
      %v2314 = vmul.f32 %v2273, %v2281
      %v2315 = vld [vmem:[%s3] sm:$0x1]
      %v2317 = vlaneseq
      %v2318 = vshrl.u32 %v2317, 7
      %v2319 = vsub.s32 0, %v2318
      %v2320 = vrot.slane %v2315, %v2319
      %v2322 = vadd.f32 %v2283, %v2320
      %v2323 = vadd.f32 %v2284, %v2320
      %v2324 = vadd.f32 %v2285, %v2320
      %v2325 = vadd.f32 %v2286, %v2320
      %v2326 = vadd.f32 %v2287, %v2320
      %v2327 = vadd.f32 %v2288, %v2320
      %v2328 = vadd.f32 %v2289, %v2320
      %v2329 = vadd.f32 %v2290, %v2320
      %v2330 = vadd.f32 %v2291, %v2320
      %v2331 = vadd.f32 %v2292, %v2320
      %v2332 = vadd.f32 %v2293, %v2320
      %v2333 = vadd.f32 %v2294, %v2320
      %v2334 = vadd.f32 %v2295, %v2320
      %v2335 = vadd.f32 %v2296, %v2320
      %v2336 = vadd.f32 %v2297, %v2320
      %v2337 = vadd.f32 %v2298, %v2320
      %v2338 = vadd.f32 %v2299, %v2320
      %v2339 = vadd.f32 %v2300, %v2320
      %v2340 = vadd.f32 %v2301, %v2320
      %v2341 = vadd.f32 %v2302, %v2320
      %v2342 = vadd.f32 %v2303, %v2320
      %v2343 = vadd.f32 %v2304, %v2320
      %v2344 = vadd.f32 %v2305, %v2320
      %v2345 = vadd.f32 %v2306, %v2320
      %v2346 = vadd.f32 %v2307, %v2320
      %v2347 = vadd.f32 %v2308, %v2320
      %v2348 = vadd.f32 %v2309, %v2320
      %v2349 = vadd.f32 %v2310, %v2320
      %v2350 = vadd.f32 %v2311, %v2320
      %v2351 = vadd.f32 %v2312, %v2320
      %v2352 = vadd.f32 %v2313, %v2320
      %v2353 = vadd.f32 %v2314, %v2320
      %v2354 = vmax.f32 %v2322, 0.0
      %v2355 = vmax.f32 %v2323, 0.0
      %v2356 = vmax.f32 %v2324, 0.0
      %v2357 = vmax.f32 %v2325, 0.0
      %v2358 = vmax.f32 %v2326, 0.0
      %v2359 = vmax.f32 %v2327, 0.0
      %v2360 = vmax.f32 %v2328, 0.0
      %v2361 = vmax.f32 %v2329, 0.0
      %v2362 = vmax.f32 %v2330, 0.0
      %v2363 = vmax.f32 %v2331, 0.0
      %v2364 = vmax.f32 %v2332, 0.0
      %v2365 = vmax.f32 %v2333, 0.0
      %v2366 = vmax.f32 %v2334, 0.0
      %v2367 = vmax.f32 %v2335, 0.0
      %v2368 = vmax.f32 %v2336, 0.0
      %v2369 = vmax.f32 %v2337, 0.0
      %v2370 = vmax.f32 %v2338, 0.0
      %v2371 = vmax.f32 %v2339, 0.0
      %v2372 = vmax.f32 %v2340, 0.0
      %v2373 = vmax.f32 %v2341, 0.0
      %v2374 = vmax.f32 %v2342, 0.0
      %v2375 = vmax.f32 %v2343, 0.0
      %v2376 = vmax.f32 %v2344, 0.0
      %v2377 = vmax.f32 %v2345, 0.0
      %v2378 = vmax.f32 %v2346, 0.0
      %v2379 = vmax.f32 %v2347, 0.0
      %v2380 = vmax.f32 %v2348, 0.0
      %v2381 = vmax.f32 %v2349, 0.0
      %v2382 = vmax.f32 %v2350, 0.0
      %v2383 = vmax.f32 %v2351, 0.0
      %v2384 = vmax.f32 %v2352, 0.0
      %v2385 = vmax.f32 %v2353, 0.0
      %v2386 = vpack.c.bf16 %v2355, %v2354
      %v2387 = vpack.c.bf16 %v2357, %v2356
      %v2388 = vpack.c.bf16 %v2359, %v2358
      %v2389 = vpack.c.bf16 %v2361, %v2360
      %v2390 = vpack.c.bf16 %v2363, %v2362
      %v2391 = vpack.c.bf16 %v2365, %v2364
      %v2392 = vpack.c.bf16 %v2367, %v2366
      %v2393 = vpack.c.bf16 %v2369, %v2368
      %v2394 = vpack.c.bf16 %v2371, %v2370
      %v2395 = vpack.c.bf16 %v2373, %v2372
      %v2396 = vpack.c.bf16 %v2375, %v2374
      %v2397 = vpack.c.bf16 %v2377, %v2376
      %v2398 = vpack.c.bf16 %v2379, %v2378
      %v2399 = vpack.c.bf16 %v2381, %v2380
      %v2400 = vpack.c.bf16 %v2383, %v2382
      %v2401 = vpack.c.bf16 %v2385, %v2384
      %v2418 = vunpack.c.l.b16 %v2386
      %v2419 = vunpack.c.h.b16 %v2386
      %v2420 = vunpack.c.l.b16 %v2387
      %v2421 = vunpack.c.h.b16 %v2387
      %v2422 = vunpack.c.l.b16 %v2388
      %v2423 = vunpack.c.h.b16 %v2388
      %v2424 = vunpack.c.l.b16 %v2389
      %v2425 = vunpack.c.h.b16 %v2389
      %v2426 = vunpack.c.l.b16 %v2390
      %v2427 = vunpack.c.h.b16 %v2390
      %v2428 = vunpack.c.l.b16 %v2391
      %v2429 = vunpack.c.h.b16 %v2391
      %v2430 = vunpack.c.l.b16 %v2392
      %v2431 = vunpack.c.h.b16 %v2392
      %v2432 = vunpack.c.l.b16 %v2393
      %v2433 = vunpack.c.h.b16 %v2393
      %v2434 = vunpack.c.l.b16 %v2394
      %v2435 = vunpack.c.h.b16 %v2394
      %v2436 = vunpack.c.l.b16 %v2395
      %v2437 = vunpack.c.h.b16 %v2395
      %v2438 = vunpack.c.l.b16 %v2396
      %v2439 = vunpack.c.h.b16 %v2396
      %v2440 = vunpack.c.l.b16 %v2397
      %v2441 = vunpack.c.h.b16 %v2397
      %v2442 = vunpack.c.l.b16 %v2398
      %v2443 = vunpack.c.h.b16 %v2398
      %v2444 = vunpack.c.l.b16 %v2399
      %v2445 = vunpack.c.h.b16 %v2399
      %v2446 = vunpack.c.l.b16 %v2400
      %v2447 = vunpack.c.h.b16 %v2400
      %v2448 = vunpack.c.l.b16 %v2401
      %v2449 = vunpack.c.h.b16 %v2401
      %v2450 = vpack.c.b16 %v2418, %v2418
      %v2451 = vpack.c.b16 %v2419, %v2419
      %v2452 = vpack.c.b16 %v2420, %v2420
      %v2453 = vpack.c.b16 %v2421, %v2421
      %v2454 = vpack.c.b16 %v2422, %v2422
      %v2455 = vpack.c.b16 %v2423, %v2423
      %v2456 = vpack.c.b16 %v2424, %v2424
      %v2457 = vpack.c.b16 %v2425, %v2425
      %v2458 = vpack.c.b16 %v2426, %v2426
      %v2459 = vpack.c.b16 %v2427, %v2427
      %v2460 = vpack.c.b16 %v2428, %v2428
      %v2461 = vpack.c.b16 %v2429, %v2429
      %v2462 = vpack.c.b16 %v2430, %v2430
      %v2463 = vpack.c.b16 %v2431, %v2431
      %v2464 = vpack.c.b16 %v2432, %v2432
      %v2465 = vpack.c.b16 %v2433, %v2433
      %v2466 = vpack.c.b16 %v2434, %v2434
      %v2467 = vpack.c.b16 %v2435, %v2435
      %v2468 = vpack.c.b16 %v2436, %v2436
      %v2469 = vpack.c.b16 %v2437, %v2437
      %v2470 = vpack.c.b16 %v2438, %v2438
      %v2471 = vpack.c.b16 %v2439, %v2439
      %v2472 = vpack.c.b16 %v2440, %v2440
      %v2473 = vpack.c.b16 %v2441, %v2441
      %v2474 = vpack.c.b16 %v2442, %v2442
      %v2475 = vpack.c.b16 %v2443, %v2443
      %v2476 = vpack.c.b16 %v2444, %v2444
      %v2477 = vpack.c.b16 %v2445, %v2445
      %v2478 = vpack.c.b16 %v2446, %v2446
      %v2479 = vpack.c.b16 %v2447, %v2447
      %v2480 = vpack.c.b16 %v2448, %v2448
      %v2481 = vpack.c.b16 %v2449, %v2449
      %v2483 = vshrl.u32 %v2450, 16
      %v2485 = vrot.slane %v2483, 7
      %v2486 = vshll.u32 %v2450, 16
      %v2488 = vor.u32 %v2485, %v2486
      %v2489 = vrot.slane %v2485, 4
      %v2491 = vshrl.u32 %v2451, 16
      %v2493 = vrot.slane %v2491, 7
      %v2494 = vshll.u32 %v2451, 16
      %v2496 = vor.u32 %v2493, %v2494
      %v2497 = vsel %vm520, %v2489, %v2496
      %v2498 = vrot.slane %v2493, 4
      %v2500 = vshrl.u32 %v2452, 16
      %v2502 = vrot.slane %v2500, 7
      %v2503 = vshll.u32 %v2452, 16
      %v2505 = vor.u32 %v2502, %v2503
      %v2506 = vrot.slane %v2502, 4
      %v2508 = vshrl.u32 %v2453, 16
      %v2510 = vrot.slane %v2508, 7
      %v2511 = vshll.u32 %v2453, 16
      %v2513 = vor.u32 %v2510, %v2511
      %v2514 = vsel %vm520, %v2506, %v2513
      %v2515 = vrot.slane %v2510, 4
      %v2517 = vshrl.u32 %v2454, 16
      %v2519 = vrot.slane %v2517, 7
      %v2520 = vshll.u32 %v2454, 16
      %v2522 = vor.u32 %v2519, %v2520
      %v2523 = vrot.slane %v2519, 4
      %v2525 = vshrl.u32 %v2455, 16
      %v2527 = vrot.slane %v2525, 7
      %v2528 = vshll.u32 %v2455, 16
      %v2530 = vor.u32 %v2527, %v2528
      %v2531 = vsel %vm520, %v2523, %v2530
      %v2532 = vrot.slane %v2527, 4
      %v2534 = vshrl.u32 %v2456, 16
      %v2536 = vrot.slane %v2534, 7
      %v2537 = vshll.u32 %v2456, 16
      %v2539 = vor.u32 %v2536, %v2537
      %v2540 = vrot.slane %v2536, 4
      %v2542 = vshrl.u32 %v2457, 16
      %v2544 = vrot.slane %v2542, 7
      %v2545 = vshll.u32 %v2457, 16
      %v2547 = vor.u32 %v2544, %v2545
      %v2548 = vsel %vm520, %v2540, %v2547
      %v2549 = vrot.slane %v2544, 4
      %v2551 = vshrl.u32 %v2458, 16
      %v2553 = vrot.slane %v2551, 7
      %v2554 = vshll.u32 %v2458, 16
      %v2556 = vor.u32 %v2553, %v2554
      %v2557 = vrot.slane %v2553, 4
      %v2559 = vshrl.u32 %v2459, 16
      %v2561 = vrot.slane %v2559, 7
      %v2562 = vshll.u32 %v2459, 16
      %v2564 = vor.u32 %v2561, %v2562
      %v2565 = vsel %vm520, %v2557, %v2564
      %v2566 = vrot.slane %v2561, 4
      %v2568 = vshrl.u32 %v2460, 16
      %v2570 = vrot.slane %v2568, 7
      %v2571 = vshll.u32 %v2460, 16
      %v2573 = vor.u32 %v2570, %v2571
      %v2574 = vrot.slane %v2570, 4
      %v2576 = vshrl.u32 %v2461, 16
      %v2578 = vrot.slane %v2576, 7
      %v2579 = vshll.u32 %v2461, 16
      %v2581 = vor.u32 %v2578, %v2579
      %v2582 = vsel %vm520, %v2574, %v2581
      %v2583 = vrot.slane %v2578, 4
      %v2585 = vshrl.u32 %v2462, 16
      %v2587 = vrot.slane %v2585, 7
      %v2588 = vshll.u32 %v2462, 16
      %v2590 = vor.u32 %v2587, %v2588
      %v2591 = vrot.slane %v2587, 4
      %v2593 = vshrl.u32 %v2463, 16
      %v2595 = vrot.slane %v2593, 7
      %v2596 = vshll.u32 %v2463, 16
      %v2598 = vor.u32 %v2595, %v2596
      %v2599 = vsel %vm520, %v2591, %v2598
      %v2600 = vrot.slane %v2595, 4
      %v2602 = vshrl.u32 %v2464, 16
      %v2604 = vrot.slane %v2602, 7
      %v2605 = vshll.u32 %v2464, 16
      %v2607 = vor.u32 %v2604, %v2605
      %v2608 = vrot.slane %v2604, 4
      %v2610 = vshrl.u32 %v2465, 16
      %v2612 = vrot.slane %v2610, 7
      %v2613 = vshll.u32 %v2465, 16
      %v2615 = vor.u32 %v2612, %v2613
      %v2616 = vsel %vm520, %v2608, %v2615
      %v2617 = vrot.slane %v2612, 4
      %v2619 = vshrl.u32 %v2466, 16
      %v2621 = vrot.slane %v2619, 7
      %v2622 = vshll.u32 %v2466, 16
      %v2624 = vor.u32 %v2621, %v2622
      %v2625 = vrot.slane %v2621, 4
      %v2627 = vshrl.u32 %v2467, 16
      %v2629 = vrot.slane %v2627, 7
      %v2630 = vshll.u32 %v2467, 16
      %v2632 = vor.u32 %v2629, %v2630
      %v2633 = vsel %vm520, %v2625, %v2632
      %v2634 = vrot.slane %v2629, 4
      %v2636 = vshrl.u32 %v2468, 16
      %v2638 = vrot.slane %v2636, 7
      %v2639 = vshll.u32 %v2468, 16
      %v2641 = vor.u32 %v2638, %v2639
      %v2642 = vrot.slane %v2638, 4
      %v2644 = vshrl.u32 %v2469, 16
      %v2646 = vrot.slane %v2644, 7
      %v2647 = vshll.u32 %v2469, 16
      %v2649 = vor.u32 %v2646, %v2647
      %v2650 = vsel %vm520, %v2642, %v2649
      %v2651 = vrot.slane %v2646, 4
      %v2653 = vshrl.u32 %v2470, 16
      %v2655 = vrot.slane %v2653, 7
      %v2656 = vshll.u32 %v2470, 16
      %v2658 = vor.u32 %v2655, %v2656
      %v2659 = vrot.slane %v2655, 4
      %v2661 = vshrl.u32 %v2471, 16
      %v2663 = vrot.slane %v2661, 7
      %v2664 = vshll.u32 %v2471, 16
      %v2666 = vor.u32 %v2663, %v2664
      %v2667 = vsel %vm520, %v2659, %v2666
      %v2668 = vrot.slane %v2663, 4
      %v2670 = vshrl.u32 %v2472, 16
      %v2672 = vrot.slane %v2670, 7
      %v2673 = vshll.u32 %v2472, 16
      %v2675 = vor.u32 %v2672, %v2673
      %v2676 = vrot.slane %v2672, 4
      %v2678 = vshrl.u32 %v2473, 16
      %v2680 = vrot.slane %v2678, 7
      %v2681 = vshll.u32 %v2473, 16
      %v2683 = vor.u32 %v2680, %v2681
      %v2684 = vsel %vm520, %v2676, %v2683
      %v2685 = vrot.slane %v2680, 4
      %v2687 = vshrl.u32 %v2474, 16
      %v2689 = vrot.slane %v2687, 7
      %v2690 = vshll.u32 %v2474, 16
      %v2692 = vor.u32 %v2689, %v2690
      %v2693 = vrot.slane %v2689, 4
      %v2695 = vshrl.u32 %v2475, 16
      %v2697 = vrot.slane %v2695, 7
      %v2698 = vshll.u32 %v2475, 16
      %v2700 = vor.u32 %v2697, %v2698
      %v2701 = vsel %vm520, %v2693, %v2700
      %v2702 = vrot.slane %v2697, 4
      %v2704 = vshrl.u32 %v2476, 16
      %v2706 = vrot.slane %v2704, 7
      %v2707 = vshll.u32 %v2476, 16
      %v2709 = vor.u32 %v2706, %v2707
      %v2710 = vrot.slane %v2706, 4
      %v2712 = vshrl.u32 %v2477, 16
      %v2714 = vrot.slane %v2712, 7
      %v2715 = vshll.u32 %v2477, 16
      %v2717 = vor.u32 %v2714, %v2715
      %v2718 = vsel %vm520, %v2710, %v2717
      %v2719 = vrot.slane %v2714, 4
      %v2721 = vshrl.u32 %v2478, 16
      %v2723 = vrot.slane %v2721, 7
      %v2724 = vshll.u32 %v2478, 16
      %v2726 = vor.u32 %v2723, %v2724
      %v2727 = vrot.slane %v2723, 4
      %v2729 = vshrl.u32 %v2479, 16
      %v2731 = vrot.slane %v2729, 7
      %v2732 = vshll.u32 %v2479, 16
      %v2734 = vor.u32 %v2731, %v2732
      %v2735 = vsel %vm520, %v2727, %v2734
      %v2736 = vrot.slane %v2731, 4
      %v2738 = vshrl.u32 %v2480, 16
      %v2740 = vrot.slane %v2738, 7
      %v2741 = vshll.u32 %v2480, 16
      %v2743 = vor.u32 %v2740, %v2741
      %v2744 = vrot.slane %v2740, 4
      %v2746 = vshrl.u32 %v2481, 16
      %v2748 = vrot.slane %v2746, 7
      %v2749 = vshll.u32 %v2481, 16
      %v2751 = vor.u32 %v2748, %v2749
      %v2752 = vsel %vm520, %v2744, %v2751
      %v2753 = vrot.slane %v2748, 4
      %v2802 = vld [vmem:[%s289] sm:$0xf]
      %v2803 = vsel %vm842, %v2488, %v2802
      %2804 = vst [vmem:[%s289] sm:$0xf] %v2803
      %2805 = vst.msk [vmem:[%s289 + $0x4] sm:$0xf] %vm280, %v2497
      %v2806 = vld [vmem:[%s289 + $0x8] sm:$0x1]
      %v2807 = vsel %vm292, %v2498, %v2806
      %2808 = vst [vmem:[%s289 + $0x8] sm:$0x1] %v2807
      %v2809 = vld [vmem:[%s289 + $0xc] sm:$0xf]
      %v2810 = vsel %vm842, %v2505, %v2809
      %2811 = vst [vmem:[%s289 + $0xc] sm:$0xf] %v2810
      %2812 = vst.msk [vmem:[%s289 + $0x10] sm:$0xf] %vm280, %v2514
      %v2813 = vld [vmem:[%s289 + $0x14] sm:$0x1]
      %v2814 = vsel %vm292, %v2515, %v2813
      %2815 = vst [vmem:[%s289 + $0x14] sm:$0x1] %v2814
      %v2816 = vld [vmem:[%s289 + $0x18] sm:$0xf]
      %v2817 = vsel %vm842, %v2522, %v2816
      %2818 = vst [vmem:[%s289 + $0x18] sm:$0xf] %v2817
      %2819 = vst.msk [vmem:[%s289 + $0x1c] sm:$0xf] %vm280, %v2531
      %v2820 = vld [vmem:[%s289 + $0x20] sm:$0x1]
      %v2821 = vsel %vm292, %v2532, %v2820
      %2822 = vst [vmem:[%s289 + $0x20] sm:$0x1] %v2821
      %v2823 = vld [vmem:[%s289 + $0x24] sm:$0xf]
      %v2824 = vsel %vm842, %v2539, %v2823
      %2825 = vst [vmem:[%s289 + $0x24] sm:$0xf] %v2824
      %2826 = vst.msk [vmem:[%s289 + $0x28] sm:$0xf] %vm280, %v2548
      %v2827 = vld [vmem:[%s289 + $0x2c] sm:$0x1]
      %v2828 = vsel %vm292, %v2549, %v2827
      %2829 = vst [vmem:[%s289 + $0x2c] sm:$0x1] %v2828
      %v2830 = vld [vmem:[%s289 + $0x30] sm:$0xf]
      %v2831 = vsel %vm842, %v2556, %v2830
      %2832 = vst [vmem:[%s289 + $0x30] sm:$0xf] %v2831
      %2833 = vst.msk [vmem:[%s289 + $0x34] sm:$0xf] %vm280, %v2565
      %v2834 = vld [vmem:[%s289 + $0x38] sm:$0x1]
      %v2835 = vsel %vm292, %v2566, %v2834
      %2836 = vst [vmem:[%s289 + $0x38] sm:$0x1] %v2835
      %v2837 = vld [vmem:[%s289 + $0x3c] sm:$0xf]
      %v2838 = vsel %vm842, %v2573, %v2837
      %2839 = vst [vmem:[%s289 + $0x3c] sm:$0xf] %v2838
      %2840 = vst.msk [vmem:[%s289 + $0x40] sm:$0xf] %vm280, %v2582
      %v2841 = vld [vmem:[%s289 + $0x44] sm:$0x1]
      %v2842 = vsel %vm292, %v2583, %v2841
      %2843 = vst [vmem:[%s289 + $0x44] sm:$0x1] %v2842
      %v2844 = vld [vmem:[%s289 + $0x48] sm:$0xf]
      %v2845 = vsel %vm842, %v2590, %v2844
      %2846 = vst [vmem:[%s289 + $0x48] sm:$0xf] %v2845
      %2847 = vst.msk [vmem:[%s289 + $0x4c] sm:$0xf] %vm280, %v2599
      %v2848 = vld [vmem:[%s289 + $0x50] sm:$0x1]
      %v2849 = vsel %vm292, %v2600, %v2848
      %2850 = vst [vmem:[%s289 + $0x50] sm:$0x1] %v2849
      %v2851 = vld [vmem:[%s289 + $0x54] sm:$0xf]
      %v2852 = vsel %vm842, %v2607, %v2851
      %2853 = vst [vmem:[%s289 + $0x54] sm:$0xf] %v2852
      %2854 = vst.msk [vmem:[%s289 + $0x58] sm:$0xf] %vm280, %v2616
      %v2855 = vld [vmem:[%s289 + $0x5c] sm:$0x1]
      %v2856 = vsel %vm292, %v2617, %v2855
      %2857 = vst [vmem:[%s289 + $0x5c] sm:$0x1] %v2856
      %v2858 = vld [vmem:[%s289 + $0x60] sm:$0xf]
      %v2859 = vsel %vm842, %v2624, %v2858
      %2860 = vst [vmem:[%s289 + $0x60] sm:$0xf] %v2859
      %2861 = vst.msk [vmem:[%s289 + $0x64] sm:$0xf] %vm280, %v2633
      %v2862 = vld [vmem:[%s289 + $0x68] sm:$0x1]
      %v2863 = vsel %vm292, %v2634, %v2862
      %2864 = vst [vmem:[%s289 + $0x68] sm:$0x1] %v2863
      %v2865 = vld [vmem:[%s289 + $0x6c] sm:$0xf]
      %v2866 = vsel %vm842, %v2641, %v2865
      %2867 = vst [vmem:[%s289 + $0x6c] sm:$0xf] %v2866
      %2868 = vst.msk [vmem:[%s289 + $0x70] sm:$0xf] %vm280, %v2650
      %v2869 = vld [vmem:[%s289 + $0x74] sm:$0x1]
      %v2870 = vsel %vm292, %v2651, %v2869
      %2871 = vst [vmem:[%s289 + $0x74] sm:$0x1] %v2870
      %v2872 = vld [vmem:[%s289 + $0x78] sm:$0xf]
      %v2873 = vsel %vm842, %v2658, %v2872
      %2874 = vst [vmem:[%s289 + $0x78] sm:$0xf] %v2873
      %2875 = vst.msk [vmem:[%s289 + $0x7c] sm:$0xf] %vm280, %v2667
      %v2876 = vld [vmem:[%s289 + $0x80] sm:$0x1]
      %v2877 = vsel %vm292, %v2668, %v2876
      %2878 = vst [vmem:[%s289 + $0x80] sm:$0x1] %v2877
      %v2879 = vld [vmem:[%s289 + $0x84] sm:$0xf]
      %v2880 = vsel %vm842, %v2675, %v2879
      %2881 = vst [vmem:[%s289 + $0x84] sm:$0xf] %v2880
      %2882 = vst.msk [vmem:[%s289 + $0x88] sm:$0xf] %vm280, %v2684
      %v2883 = vld [vmem:[%s289 + $0x8c] sm:$0x1]
      %v2884 = vsel %vm292, %v2685, %v2883
      %2885 = vst [vmem:[%s289 + $0x8c] sm:$0x1] %v2884
      %v2886 = vld [vmem:[%s289 + $0x90] sm:$0xf]
      %v2887 = vsel %vm842, %v2692, %v2886
      %2888 = vst [vmem:[%s289 + $0x90] sm:$0xf] %v2887
      %2889 = vst.msk [vmem:[%s289 + $0x94] sm:$0xf] %vm280, %v2701
      %v2890 = vld [vmem:[%s289 + $0x98] sm:$0x1]
      %v2891 = vsel %vm292, %v2702, %v2890
      %2892 = vst [vmem:[%s289 + $0x98] sm:$0x1] %v2891
      %v2893 = vld [vmem:[%s289 + $0x9c] sm:$0xf]
      %v2894 = vsel %vm842, %v2709, %v2893
      %2895 = vst [vmem:[%s289 + $0x9c] sm:$0xf] %v2894
      %2896 = vst.msk [vmem:[%s289 + $0xa0] sm:$0xf] %vm280, %v2718
      %v2897 = vld [vmem:[%s289 + $0xa4] sm:$0x1]
      %v2898 = vsel %vm292, %v2719, %v2897
      %2899 = vst [vmem:[%s289 + $0xa4] sm:$0x1] %v2898
      %v2900 = vld [vmem:[%s289 + $0xa8] sm:$0xf]
      %v2901 = vsel %vm842, %v2726, %v2900
      %2902 = vst [vmem:[%s289 + $0xa8] sm:$0xf] %v2901
      %2903 = vst.msk [vmem:[%s289 + $0xac] sm:$0xf] %vm280, %v2735
      %v2904 = vld [vmem:[%s289 + $0xb0] sm:$0x1]
      %v2905 = vsel %vm292, %v2736, %v2904
      %2906 = vst [vmem:[%s289 + $0xb0] sm:$0x1] %v2905
      %v2907 = vld [vmem:[%s289 + $0xb4] sm:$0xf]
      %v2908 = vsel %vm842, %v2743, %v2907
      %2909 = vst [vmem:[%s289 + $0xb4] sm:$0xf] %v2908
      %2910 = vst.msk [vmem:[%s289 + $0xb8] sm:$0xf] %vm280, %v2752
      %v2911 = vld [vmem:[%s289 + $0xbc] sm:$0x1]
      %v2912 = vsel %vm292, %v2753, %v2911
      %2913 = vst [vmem:[%s289 + $0xbc] sm:$0x1] %v2912
      %v2914 = vld [vmem:[#allocation2] sm:$0xf]
      %v2915 = vld [vmem:[#allocation2 + $0x4] sm:$0xf]
      %v2916 = vld [vmem:[#allocation2 + $0xc] sm:$0xf]
      %v2917 = vld [vmem:[#allocation2 + $0x10] sm:$0xf]
      %v2918 = vld [vmem:[#allocation2 + $0x18] sm:$0xf]
      %v2919 = vld [vmem:[#allocation2 + $0x1c] sm:$0xf]
      %v2920 = vld [vmem:[#allocation2 + $0x24] sm:$0xf]
      %v2921 = vld [vmem:[#allocation2 + $0x28] sm:$0xf]
      %v2922 = vld [vmem:[#allocation2 + $0x30] sm:$0xf]
      %v2923 = vld [vmem:[#allocation2 + $0x34] sm:$0xf]
      %v2924 = vld [vmem:[#allocation2 + $0x3c] sm:$0xf]
      %v2925 = vld [vmem:[#allocation2 + $0x40] sm:$0xf]
      %v2926 = vld [vmem:[#allocation2 + $0x48] sm:$0xf]
      %v2927 = vld [vmem:[#allocation2 + $0x4c] sm:$0xf]
      %v2928 = vld [vmem:[#allocation2 + $0x54] sm:$0xf]
      %v2929 = vld [vmem:[#allocation2 + $0x58] sm:$0xf]
      %v2930 = vld [vmem:[#allocation2 + $0x60] sm:$0xf]
      %v2931 = vld [vmem:[#allocation2 + $0x64] sm:$0xf]
      %v2932 = vld [vmem:[#allocation2 + $0x6c] sm:$0xf]
      %v2933 = vld [vmem:[#allocation2 + $0x70] sm:$0xf]
      %v2934 = vld [vmem:[#allocation2 + $0x78] sm:$0xf]
      %v2935 = vld [vmem:[#allocation2 + $0x7c] sm:$0xf]
      %v2936 = vld [vmem:[#allocation2 + $0x84] sm:$0xf]
      %v2937 = vld [vmem:[#allocation2 + $0x88] sm:$0xf]
      %v2938 = vld [vmem:[#allocation2 + $0x90] sm:$0xf]
      %v2939 = vld [vmem:[#allocation2 + $0x94] sm:$0xf]
      %v2940 = vld [vmem:[#allocation2 + $0x9c] sm:$0xf]
      %v2941 = vld [vmem:[#allocation2 + $0xa0] sm:$0xf]
      %v2942 = vld [vmem:[#allocation2 + $0xa8] sm:$0xf]
      %v2943 = vld [vmem:[#allocation2 + $0xac] sm:$0xf]
      %v2944 = vld [vmem:[#allocation2 + $0xb4] sm:$0xf]
      %v2945 = vld [vmem:[#allocation2 + $0xb8] sm:$0xf]
      %v2946 = vld [vmem:[#allocation2 + $0xc0] sm:$0xf]
      %v2947 = vld [vmem:[#allocation2 + $0xc4] sm:$0xf]
      %v2948 = vld [vmem:[#allocation2 + $0xcc] sm:$0xf]
      %v2949 = vld [vmem:[#allocation2 + $0xd0] sm:$0xf]
      %v2950 = vld [vmem:[#allocation2 + $0x8] sm:$0x1]
      %v2951 = vld [vmem:[#allocation2 + $0x14] sm:$0x1]
      %v2952 = vld [vmem:[#allocation2 + $0x20] sm:$0x1]
      %v2953 = vld [vmem:[#allocation2 + $0x2c] sm:$0x1]
      %v2954 = vld [vmem:[#allocation2 + $0x38] sm:$0x1]
      %v2955 = vld [vmem:[#allocation2 + $0x44] sm:$0x1]
      %v2956 = vld [vmem:[#allocation2 + $0x50] sm:$0x1]
      %v2957 = vld [vmem:[#allocation2 + $0x5c] sm:$0x1]
      %v2958 = vld [vmem:[#allocation2 + $0x68] sm:$0x1]
      %v2959 = vld [vmem:[#allocation2 + $0x74] sm:$0x1]
      %v2960 = vld [vmem:[#allocation2 + $0x80] sm:$0x1]
      %v2961 = vld [vmem:[#allocation2 + $0x8c] sm:$0x1]
      %v2962 = vld [vmem:[#allocation2 + $0x98] sm:$0x1]
      %v2963 = vld [vmem:[#allocation2 + $0xa4] sm:$0x1]
      %v2964 = vld [vmem:[#allocation2 + $0xb0] sm:$0x1]
      %v2965 = vld [vmem:[#allocation2 + $0xbc] sm:$0x1]
      %v2966 = vld [vmem:[#allocation2 + $0xc8] sm:$0x1]
      %v2967 = vld [vmem:[#allocation2 + $0xd4] sm:$0x1]
      %v2968 = vld [vmem:[#allocation2] sm:$0xe]
      %v2969 = vld [vmem:[#allocation2 + $0xc] sm:$0xe]
      %v2970 = vld [vmem:[#allocation2 + $0x18] sm:$0xe]
      %v2971 = vld [vmem:[#allocation2 + $0x24] sm:$0xe]
      %v2972 = vld [vmem:[#allocation2 + $0x30] sm:$0xe]
      %v2973 = vld [vmem:[#allocation2 + $0x3c] sm:$0xe]
      %v2974 = vld [vmem:[#allocation2 + $0x48] sm:$0xe]
      %v2975 = vld [vmem:[#allocation2 + $0x54] sm:$0xe]
      %v2976 = vld [vmem:[#allocation2 + $0x60] sm:$0xe]
      %v2977 = vld [vmem:[#allocation2 + $0x6c] sm:$0xe]
      %v2978 = vld [vmem:[#allocation2 + $0x78] sm:$0xe]
      %v2979 = vld [vmem:[#allocation2 + $0x84] sm:$0xe]
      %v2980 = vld [vmem:[#allocation2 + $0x90] sm:$0xe]
      %v2981 = vld [vmem:[#allocation2 + $0x9c] sm:$0xe]
      %v2982 = vld [vmem:[#allocation2 + $0xa8] sm:$0xe]
      %v2983 = vld [vmem:[#allocation2 + $0xb4] sm:$0xe]
      %v2984 = vld [vmem:[#allocation2 + $0xc0] sm:$0xe]
      %v2985 = vld [vmem:[#allocation2 + $0xcc] sm:$0xe]
      %v3018 = vunpack.c.l.b16 %v2914
      %v3019 = vunpack.c.l.b16 %v2915
      %v3020 = vunpack.c.l.b16 %v2916
      %v3021 = vunpack.c.l.b16 %v2917
      %v3022 = vunpack.c.l.b16 %v2918
      %v3023 = vunpack.c.l.b16 %v2919
      %v3024 = vunpack.c.l.b16 %v2920
      %v3025 = vunpack.c.l.b16 %v2921
      %v3026 = vunpack.c.l.b16 %v2922
      %v3027 = vunpack.c.l.b16 %v2923
      %v3028 = vunpack.c.l.b16 %v2924
      %v3029 = vunpack.c.l.b16 %v2925
      %v3030 = vunpack.c.l.b16 %v2926
      %v3031 = vunpack.c.l.b16 %v2927
      %v3032 = vunpack.c.l.b16 %v2928
      %v3033 = vunpack.c.l.b16 %v2929
      %v3034 = vunpack.c.l.b16 %v2930
      %v3035 = vunpack.c.l.b16 %v2931
      %v3036 = vunpack.c.l.b16 %v2932
      %v3037 = vunpack.c.l.b16 %v2933
      %v3038 = vunpack.c.l.b16 %v2934
      %v3039 = vunpack.c.l.b16 %v2935
      %v3040 = vunpack.c.l.b16 %v2936
      %v3041 = vunpack.c.l.b16 %v2937
      %v3042 = vunpack.c.l.b16 %v2938
      %v3043 = vunpack.c.l.b16 %v2939
      %v3044 = vunpack.c.l.b16 %v2940
      %v3045 = vunpack.c.l.b16 %v2941
      %v3046 = vunpack.c.l.b16 %v2942
      %v3047 = vunpack.c.l.b16 %v2943
      %v3048 = vunpack.c.l.b16 %v2944
      %v3049 = vunpack.c.l.b16 %v2945
      %v3050 = vpack.c.b16 %v3019, %v3018
      %v3051 = vpack.c.b16 %v3021, %v3020
      %v3052 = vpack.c.b16 %v3023, %v3022
      %v3053 = vpack.c.b16 %v3025, %v3024
      %v3054 = vpack.c.b16 %v3027, %v3026
      %v3055 = vpack.c.b16 %v3029, %v3028
      %v3056 = vpack.c.b16 %v3031, %v3030
      %v3057 = vpack.c.b16 %v3033, %v3032
      %v3058 = vpack.c.b16 %v3035, %v3034
      %v3059 = vpack.c.b16 %v3037, %v3036
      %v3060 = vpack.c.b16 %v3039, %v3038
      %v3061 = vpack.c.b16 %v3041, %v3040
      %v3062 = vpack.c.b16 %v3043, %v3042
      %v3063 = vpack.c.b16 %v3045, %v3044
      %v3064 = vpack.c.b16 %v3047, %v3046
      %v3065 = vpack.c.b16 %v3049, %v3048
      %v3068 = vunpack.c.l.b16 %v2946
      %v3069 = vunpack.c.l.b16 %v2947
      %v3070 = vpack.c.b16 %v3069, %v3068
      %3071 = vrot.lane.b32.xlu0 %v3051, 4
      %v3072 = vpop.permute.xlu0 %3071
      %3073 = vrot.lane.b32.xlu0 %v3052, 4
      %v3074 = vpop.permute.xlu0 %3073
      %3075 = vrot.lane.b32.xlu0 %v3053, 4
      %v3076 = vpop.permute.xlu0 %3075
      %3077 = vrot.lane.b32.xlu0 %v3054, 4
      %v3078 = vpop.permute.xlu0 %3077
      %3079 = vrot.lane.b32.xlu0 %v3055, 4
      %v3080 = vpop.permute.xlu0 %3079
      %3081 = vrot.lane.b32.xlu0 %v3056, 4
      %v3082 = vpop.permute.xlu0 %3081
      %3083 = vrot.lane.b32.xlu0 %v3057, 4
      %v3084 = vpop.permute.xlu0 %3083
      %3085 = vrot.lane.b32.xlu0 %v3058, 4
      %v3086 = vpop.permute.xlu0 %3085
      %3087 = vrot.lane.b32.xlu0 %v3059, 4
      %v3088 = vpop.permute.xlu0 %3087
      %3089 = vrot.lane.b32.xlu0 %v3060, 4
      %v3090 = vpop.permute.xlu0 %3089
      %3091 = vrot.lane.b32.xlu0 %v3061, 4
      %v3092 = vpop.permute.xlu0 %3091
      %3093 = vrot.lane.b32.xlu0 %v3062, 4
      %v3094 = vpop.permute.xlu0 %3093
      %3095 = vrot.lane.b32.xlu0 %v3063, 4
      %v3096 = vpop.permute.xlu0 %3095
      %3097 = vrot.lane.b32.xlu0 %v3064, 4
      %v3098 = vpop.permute.xlu0 %3097
      %3099 = vrot.lane.b32.xlu0 %v3065, 4
      %v3100 = vpop.permute.xlu0 %3099
      %3101 = vrot.lane.b32.xlu0 %v3070, 4
      %v3102 = vpop.permute.xlu0 %3101
      %v3105 = vunpack.c.l.b16 %v2948
      %v3106 = vunpack.c.l.b16 %v2949
      %v3107 = vpack.c.b16 %v3106, %v3105
      %3108 = vrot.lane.b32.xlu0 %v3052, 8
      %v3109 = vpop.permute.xlu0 %3108
      %3110 = vrot.lane.b32.xlu0 %v3053, 8
      %v3111 = vpop.permute.xlu0 %3110
      %3112 = vrot.lane.b32.xlu0 %v3054, 8
      %v3113 = vpop.permute.xlu0 %3112
      %3114 = vrot.lane.b32.xlu0 %v3055, 8
      %v3115 = vpop.permute.xlu0 %3114
      %3116 = vrot.lane.b32.xlu0 %v3056, 8
      %v3117 = vpop.permute.xlu0 %3116
      %3118 = vrot.lane.b32.xlu0 %v3057, 8
      %v3119 = vpop.permute.xlu0 %3118
      %3120 = vrot.lane.b32.xlu0 %v3058, 8
      %v3121 = vpop.permute.xlu0 %3120
      %3122 = vrot.lane.b32.xlu0 %v3059, 8
      %v3123 = vpop.permute.xlu0 %3122
      %3124 = vrot.lane.b32.xlu0 %v3060, 8
      %v3125 = vpop.permute.xlu0 %3124
      %3126 = vrot.lane.b32.xlu0 %v3061, 8
      %v3127 = vpop.permute.xlu0 %3126
      %3128 = vrot.lane.b32.xlu0 %v3062, 8
      %v3129 = vpop.permute.xlu0 %3128
      %3130 = vrot.lane.b32.xlu0 %v3063, 8
      %v3131 = vpop.permute.xlu0 %3130
      %3132 = vrot.lane.b32.xlu0 %v3064, 8
      %v3133 = vpop.permute.xlu0 %3132
      %3134 = vrot.lane.b32.xlu0 %v3065, 8
      %v3135 = vpop.permute.xlu0 %3134
      %3136 = vrot.lane.b32.xlu0 %v3070, 8
      %v3137 = vpop.permute.xlu0 %3136
      %3138 = vrot.lane.b32.xlu0 %v3107, 8
      %v3139 = vpop.permute.xlu0 %3138
      %v3156 = vunpack.c.l.b16 %v2950
      %v3157 = vunpack.c.l.b16 %v2951
      %v3158 = vunpack.c.l.b16 %v2952
      %v3159 = vunpack.c.l.b16 %v2953
      %v3160 = vunpack.c.l.b16 %v2954
      %v3161 = vunpack.c.l.b16 %v2955
      %v3162 = vunpack.c.l.b16 %v2956
      %v3163 = vunpack.c.l.b16 %v2957
      %v3164 = vunpack.c.l.b16 %v2958
      %v3165 = vunpack.c.l.b16 %v2959
      %v3166 = vunpack.c.l.b16 %v2960
      %v3167 = vunpack.c.l.b16 %v2961
      %v3168 = vunpack.c.l.b16 %v2962
      %v3169 = vunpack.c.l.b16 %v2963
      %v3170 = vunpack.c.l.b16 %v2964
      %v3171 = vunpack.c.l.b16 %v2965
      %v3172 = vpack.c.b16 %v3156, %v3156
      %v3173 = vpack.c.b16 %v3157, %v3157
      %v3174 = vpack.c.b16 %v3158, %v3158
      %v3175 = vpack.c.b16 %v3159, %v3159
      %v3176 = vpack.c.b16 %v3160, %v3160
      %v3177 = vpack.c.b16 %v3161, %v3161
      %v3178 = vpack.c.b16 %v3162, %v3162
      %v3179 = vpack.c.b16 %v3163, %v3163
      %v3180 = vpack.c.b16 %v3164, %v3164
      %v3181 = vpack.c.b16 %v3165, %v3165
      %v3182 = vpack.c.b16 %v3166, %v3166
      %v3183 = vpack.c.b16 %v3167, %v3167
      %v3184 = vpack.c.b16 %v3168, %v3168
      %v3185 = vpack.c.b16 %v3169, %v3169
      %v3186 = vpack.c.b16 %v3170, %v3170
      %v3187 = vpack.c.b16 %v3171, %v3171
      %v3189 = vshrl.u32 %v3050, 16
      %v3191 = vshll.u32 %v3050, 16
      %v3193 = vrot.slane %v3191, 1
      %v3194 = vor.u32 %v3189, %v3193
      %v3196 = vshll.u32 %v3172, 16
      %v3198 = vrot.slane %v3196, 1
      %v3199 = vsel %vm1229, %v3194, %v3198
      %v3201 = vshrl.u32 %v3051, 16
      %v3203 = vshll.u32 %v3051, 16
      %v3205 = vrot.slane %v3203, 1
      %v3206 = vor.u32 %v3201, %v3205
      %v3208 = vshll.u32 %v3173, 16
      %v3210 = vrot.slane %v3208, 1
      %v3211 = vsel %vm1229, %v3206, %v3210
      %v3213 = vshrl.u32 %v3052, 16
      %v3215 = vshll.u32 %v3052, 16
      %v3217 = vrot.slane %v3215, 1
      %v3218 = vor.u32 %v3213, %v3217
      %v3220 = vshll.u32 %v3174, 16
      %v3222 = vrot.slane %v3220, 1
      %v3223 = vsel %vm1229, %v3218, %v3222
      %v3225 = vshrl.u32 %v3053, 16
      %v3227 = vshll.u32 %v3053, 16
      %v3229 = vrot.slane %v3227, 1
      %v3230 = vor.u32 %v3225, %v3229
      %v3232 = vshll.u32 %v3175, 16
      %v3234 = vrot.slane %v3232, 1
      %v3235 = vsel %vm1229, %v3230, %v3234
      %v3237 = vshrl.u32 %v3054, 16
      %v3239 = vshll.u32 %v3054, 16
      %v3241 = vrot.slane %v3239, 1
      %v3242 = vor.u32 %v3237, %v3241
      %v3244 = vshll.u32 %v3176, 16
      %v3246 = vrot.slane %v3244, 1
      %v3247 = vsel %vm1229, %v3242, %v3246
      %v3249 = vshrl.u32 %v3055, 16
      %v3251 = vshll.u32 %v3055, 16
      %v3253 = vrot.slane %v3251, 1
      %v3254 = vor.u32 %v3249, %v3253
      %v3256 = vshll.u32 %v3177, 16
      %v3258 = vrot.slane %v3256, 1
      %v3259 = vsel %vm1229, %v3254, %v3258
      %v3261 = vshrl.u32 %v3056, 16
      %v3263 = vshll.u32 %v3056, 16
      %v3265 = vrot.slane %v3263, 1
      %v3266 = vor.u32 %v3261, %v3265
      %v3268 = vshll.u32 %v3178, 16
      %v3270 = vrot.slane %v3268, 1
      %v3271 = vsel %vm1229, %v3266, %v3270
      %v3273 = vshrl.u32 %v3057, 16
      %v3275 = vshll.u32 %v3057, 16
      %v3277 = vrot.slane %v3275, 1
      %v3278 = vor.u32 %v3273, %v3277
      %v3280 = vshll.u32 %v3179, 16
      %v3282 = vrot.slane %v3280, 1
      %v3283 = vsel %vm1229, %v3278, %v3282
      %v3285 = vshrl.u32 %v3058, 16
      %v3287 = vshll.u32 %v3058, 16
      %v3289 = vrot.slane %v3287, 1
      %v3290 = vor.u32 %v3285, %v3289
      %v3292 = vshll.u32 %v3180, 16
      %v3294 = vrot.slane %v3292, 1
      %v3295 = vsel %vm1229, %v3290, %v3294
      %v3297 = vshrl.u32 %v3059, 16
      %v3299 = vshll.u32 %v3059, 16
      %v3301 = vrot.slane %v3299, 1
      %v3302 = vor.u32 %v3297, %v3301
      %v3304 = vshll.u32 %v3181, 16
      %v3306 = vrot.slane %v3304, 1
      %v3307 = vsel %vm1229, %v3302, %v3306
      %v3309 = vshrl.u32 %v3060, 16
      %v3311 = vshll.u32 %v3060, 16
      %v3313 = vrot.slane %v3311, 1
      %v3314 = vor.u32 %v3309, %v3313
      %v3316 = vshll.u32 %v3182, 16
      %v3318 = vrot.slane %v3316, 1
      %v3319 = vsel %vm1229, %v3314, %v3318
      %v3321 = vshrl.u32 %v3061, 16
      %v3323 = vshll.u32 %v3061, 16
      %v3325 = vrot.slane %v3323, 1
      %v3326 = vor.u32 %v3321, %v3325
      %v3328 = vshll.u32 %v3183, 16
      %v3330 = vrot.slane %v3328, 1
      %v3331 = vsel %vm1229, %v3326, %v3330
      %v3333 = vshrl.u32 %v3062, 16
      %v3335 = vshll.u32 %v3062, 16
      %v3337 = vrot.slane %v3335, 1
      %v3338 = vor.u32 %v3333, %v3337
      %v3340 = vshll.u32 %v3184, 16
      %v3342 = vrot.slane %v3340, 1
      %v3343 = vsel %vm1229, %v3338, %v3342
      %v3345 = vshrl.u32 %v3063, 16
      %v3347 = vshll.u32 %v3063, 16
      %v3349 = vrot.slane %v3347, 1
      %v3350 = vor.u32 %v3345, %v3349
      %v3352 = vshll.u32 %v3185, 16
      %v3354 = vrot.slane %v3352, 1
      %v3355 = vsel %vm1229, %v3350, %v3354
      %v3357 = vshrl.u32 %v3064, 16
      %v3359 = vshll.u32 %v3064, 16
      %v3361 = vrot.slane %v3359, 1
      %v3362 = vor.u32 %v3357, %v3361
      %v3364 = vshll.u32 %v3186, 16
      %v3366 = vrot.slane %v3364, 1
      %v3367 = vsel %vm1229, %v3362, %v3366
      %v3369 = vshrl.u32 %v3065, 16
      %v3371 = vshll.u32 %v3065, 16
      %v3373 = vrot.slane %v3371, 1
      %v3374 = vor.u32 %v3369, %v3373
      %v3376 = vshll.u32 %v3187, 16
      %v3378 = vrot.slane %v3376, 1
      %v3379 = vsel %vm1229, %v3374, %v3378
      %3380 = vrot.lane.b32.xlu0 %v3199, 12
      %v3381 = vpop.permute.xlu0 %3380
      %3382 = vrot.lane.b32.xlu0 %v3211, 12
      %v3383 = vpop.permute.xlu0 %3382
      %3384 = vrot.lane.b32.xlu0 %v3223, 12
      %v3385 = vpop.permute.xlu0 %3384
      %3386 = vrot.lane.b32.xlu0 %v3235, 12
      %v3387 = vpop.permute.xlu0 %3386
      %3388 = vrot.lane.b32.xlu0 %v3247, 12
      %v3389 = vpop.permute.xlu0 %3388
      %3390 = vrot.lane.b32.xlu0 %v3259, 12
      %v3391 = vpop.permute.xlu0 %3390
      %3392 = vrot.lane.b32.xlu0 %v3271, 12
      %v3393 = vpop.permute.xlu0 %3392
      %3394 = vrot.lane.b32.xlu0 %v3283, 12
      %v3395 = vpop.permute.xlu0 %3394
      %3396 = vrot.lane.b32.xlu0 %v3295, 12
      %v3397 = vpop.permute.xlu0 %3396
      %3398 = vrot.lane.b32.xlu0 %v3307, 12
      %v3399 = vpop.permute.xlu0 %3398
      %3400 = vrot.lane.b32.xlu0 %v3319, 12
      %v3401 = vpop.permute.xlu0 %3400
      %3402 = vrot.lane.b32.xlu0 %v3331, 12
      %v3403 = vpop.permute.xlu0 %3402
      %3404 = vrot.lane.b32.xlu0 %v3343, 12
      %v3405 = vpop.permute.xlu0 %3404
      %3406 = vrot.lane.b32.xlu0 %v3355, 12
      %v3407 = vpop.permute.xlu0 %3406
      %3408 = vrot.lane.b32.xlu0 %v3367, 12
      %v3409 = vpop.permute.xlu0 %3408
      %3410 = vrot.lane.b32.xlu0 %v3379, 12
      %v3411 = vpop.permute.xlu0 %3410
      %v3413 = vunpack.c.l.b16 %v2966
      %v3414 = vpack.c.b16 %v3413, %v3413
      %v3416 = vshrl.u32 %v3070, 16
      %v3418 = vshll.u32 %v3070, 16
      %v3420 = vrot.slane %v3418, 1
      %v3421 = vor.u32 %v3416, %v3420
      %v3423 = vshll.u32 %v3414, 16
      %v3425 = vrot.slane %v3423, 1
      %v3426 = vsel %vm1229, %v3421, %v3425
      %3427 = vrot.lane.b32.xlu0 %v3211, 16
      %v3428 = vpop.permute.xlu0 %3427
      %3429 = vrot.lane.b32.xlu0 %v3223, 16
      %v3430 = vpop.permute.xlu0 %3429
      %3431 = vrot.lane.b32.xlu0 %v3235, 16
      %v3432 = vpop.permute.xlu0 %3431
      %3433 = vrot.lane.b32.xlu0 %v3247, 16
      %v3434 = vpop.permute.xlu0 %3433
      %3435 = vrot.lane.b32.xlu0 %v3259, 16
      %v3436 = vpop.permute.xlu0 %3435
      %3437 = vrot.lane.b32.xlu0 %v3271, 16
      %v3438 = vpop.permute.xlu0 %3437
      %3439 = vrot.lane.b32.xlu0 %v3283, 16
      %v3440 = vpop.permute.xlu0 %3439
      %3441 = vrot.lane.b32.xlu0 %v3295, 16
      %v3442 = vpop.permute.xlu0 %3441
      %3443 = vrot.lane.b32.xlu0 %v3307, 16
      %v3444 = vpop.permute.xlu0 %3443
      %3445 = vrot.lane.b32.xlu0 %v3319, 16
      %v3446 = vpop.permute.xlu0 %3445
      %3447 = vrot.lane.b32.xlu0 %v3331, 16
      %v3448 = vpop.permute.xlu0 %3447
      %3449 = vrot.lane.b32.xlu0 %v3343, 16
      %v3450 = vpop.permute.xlu0 %3449
      %3451 = vrot.lane.b32.xlu0 %v3355, 16
      %v3452 = vpop.permute.xlu0 %3451
      %3453 = vrot.lane.b32.xlu0 %v3367, 16
      %v3454 = vpop.permute.xlu0 %3453
      %3455 = vrot.lane.b32.xlu0 %v3379, 16
      %v3456 = vpop.permute.xlu0 %3455
      %3457 = vrot.lane.b32.xlu0 %v3426, 16
      %v3458 = vpop.permute.xlu0 %3457
      %v3460 = vunpack.c.l.b16 %v2967
      %v3461 = vpack.c.b16 %v3460, %v3460
      %v3463 = vshrl.u32 %v3107, 16
      %v3465 = vshll.u32 %v3107, 16
      %v3467 = vrot.slane %v3465, 1
      %v3468 = vor.u32 %v3463, %v3467
      %v3470 = vshll.u32 %v3461, 16
      %v3472 = vrot.slane %v3470, 1
      %v3473 = vsel %vm1229, %v3468, %v3472
      %3474 = vrot.lane.b32.xlu0 %v3223, 20
      %v3475 = vpop.permute.xlu0 %3474
      %3476 = vrot.lane.b32.xlu0 %v3235, 20
      %v3477 = vpop.permute.xlu0 %3476
      %3478 = vrot.lane.b32.xlu0 %v3247, 20
      %v3479 = vpop.permute.xlu0 %3478
      %3480 = vrot.lane.b32.xlu0 %v3259, 20
      %v3481 = vpop.permute.xlu0 %3480
      %3482 = vrot.lane.b32.xlu0 %v3271, 20
      %v3483 = vpop.permute.xlu0 %3482
      %3484 = vrot.lane.b32.xlu0 %v3283, 20
      %v3485 = vpop.permute.xlu0 %3484
      %3486 = vrot.lane.b32.xlu0 %v3295, 20
      %v3487 = vpop.permute.xlu0 %3486
      %3488 = vrot.lane.b32.xlu0 %v3307, 20
      %v3489 = vpop.permute.xlu0 %3488
      %3490 = vrot.lane.b32.xlu0 %v3319, 20
      %v3491 = vpop.permute.xlu0 %3490
      %3492 = vrot.lane.b32.xlu0 %v3331, 20
      %v3493 = vpop.permute.xlu0 %3492
      %3494 = vrot.lane.b32.xlu0 %v3343, 20
      %v3495 = vpop.permute.xlu0 %3494
      %3496 = vrot.lane.b32.xlu0 %v3355, 20
      %v3497 = vpop.permute.xlu0 %3496
      %3498 = vrot.lane.b32.xlu0 %v3367, 20
      %v3499 = vpop.permute.xlu0 %3498
      %3500 = vrot.lane.b32.xlu0 %v3379, 20
      %v3501 = vpop.permute.xlu0 %3500
      %3502 = vrot.lane.b32.xlu0 %v3426, 20
      %v3503 = vpop.permute.xlu0 %3502
      %3504 = vrot.lane.b32.xlu0 %v3473, 20
      %v3505 = vpop.permute.xlu0 %3504
      %v3522 = vunpack.c.l.b16 %v2968
      %v3523 = vunpack.c.l.b16 %v2969
      %v3524 = vunpack.c.l.b16 %v2970
      %v3525 = vunpack.c.l.b16 %v2971
      %v3526 = vunpack.c.l.b16 %v2972
      %v3527 = vunpack.c.l.b16 %v2973
      %v3528 = vunpack.c.l.b16 %v2974
      %v3529 = vunpack.c.l.b16 %v2975
      %v3530 = vunpack.c.l.b16 %v2976
      %v3531 = vunpack.c.l.b16 %v2977
      %v3532 = vunpack.c.l.b16 %v2978
      %v3533 = vunpack.c.l.b16 %v2979
      %v3534 = vunpack.c.l.b16 %v2980
      %v3535 = vunpack.c.l.b16 %v2981
      %v3536 = vunpack.c.l.b16 %v2982
      %v3537 = vunpack.c.l.b16 %v2983
      %v3538 = vpack.c.b16 %v3019, %v3522
      %v3539 = vpack.c.b16 %v3021, %v3523
      %v3540 = vpack.c.b16 %v3023, %v3524
      %v3541 = vpack.c.b16 %v3025, %v3525
      %v3542 = vpack.c.b16 %v3027, %v3526
      %v3543 = vpack.c.b16 %v3029, %v3527
      %v3544 = vpack.c.b16 %v3031, %v3528
      %v3545 = vpack.c.b16 %v3033, %v3529
      %v3546 = vpack.c.b16 %v3035, %v3530
      %v3547 = vpack.c.b16 %v3037, %v3531
      %v3548 = vpack.c.b16 %v3039, %v3532
      %v3549 = vpack.c.b16 %v3041, %v3533
      %v3550 = vpack.c.b16 %v3043, %v3534
      %v3551 = vpack.c.b16 %v3045, %v3535
      %v3552 = vpack.c.b16 %v3047, %v3536
      %v3553 = vpack.c.b16 %v3049, %v3537
      %v3554 = vrot.slane %v3538, 1
      %v3555 = vrot.slane %v3172, 1
      %v3556 = vsel %vm1596, %v3554, %v3555
      %v3557 = vrot.slane %v3539, 1
      %v3558 = vrot.slane %v3173, 1
      %v3559 = vsel %vm1596, %v3557, %v3558
      %v3560 = vrot.slane %v3540, 1
      %v3561 = vrot.slane %v3174, 1
      %v3562 = vsel %vm1596, %v3560, %v3561
      %v3563 = vrot.slane %v3541, 1
      %v3564 = vrot.slane %v3175, 1
      %v3565 = vsel %vm1596, %v3563, %v3564
      %v3566 = vrot.slane %v3542, 1
      %v3567 = vrot.slane %v3176, 1
      %v3568 = vsel %vm1596, %v3566, %v3567
      %v3569 = vrot.slane %v3543, 1
      %v3570 = vrot.slane %v3177, 1
      %v3571 = vsel %vm1596, %v3569, %v3570
      %v3572 = vrot.slane %v3544, 1
      %v3573 = vrot.slane %v3178, 1
      %v3574 = vsel %vm1596, %v3572, %v3573
      %v3575 = vrot.slane %v3545, 1
      %v3576 = vrot.slane %v3179, 1
      %v3577 = vsel %vm1596, %v3575, %v3576
      %v3578 = vrot.slane %v3546, 1
      %v3579 = vrot.slane %v3180, 1
      %v3580 = vsel %vm1596, %v3578, %v3579
      %v3581 = vrot.slane %v3547, 1
      %v3582 = vrot.slane %v3181, 1
      %v3583 = vsel %vm1596, %v3581, %v3582
      %v3584 = vrot.slane %v3548, 1
      %v3585 = vrot.slane %v3182, 1
      %v3586 = vsel %vm1596, %v3584, %v3585
      %v3587 = vrot.slane %v3549, 1
      %v3588 = vrot.slane %v3183, 1
      %v3589 = vsel %vm1596, %v3587, %v3588
      %v3590 = vrot.slane %v3550, 1
      %v3591 = vrot.slane %v3184, 1
      %v3592 = vsel %vm1596, %v3590, %v3591
      %v3593 = vrot.slane %v3551, 1
      %v3594 = vrot.slane %v3185, 1
      %v3595 = vsel %vm1596, %v3593, %v3594
      %v3596 = vrot.slane %v3552, 1
      %v3597 = vrot.slane %v3186, 1
      %v3598 = vsel %vm1596, %v3596, %v3597
      %v3599 = vrot.slane %v3553, 1
      %v3600 = vrot.slane %v3187, 1
      %v3601 = vsel %vm1596, %v3599, %v3600
      %3602 = vrot.lane.b32.xlu0 %v3556, 24
      %v3603 = vpop.permute.xlu0 %3602
      %3604 = vrot.lane.b32.xlu0 %v3559, 24
      %v3605 = vpop.permute.xlu0 %3604
      %3606 = vrot.lane.b32.xlu0 %v3562, 24
      %v3607 = vpop.permute.xlu0 %3606
      %3608 = vrot.lane.b32.xlu0 %v3565, 24
      %v3609 = vpop.permute.xlu0 %3608
      %3610 = vrot.lane.b32.xlu0 %v3568, 24
      %v3611 = vpop.permute.xlu0 %3610
      %3612 = vrot.lane.b32.xlu0 %v3571, 24
      %v3613 = vpop.permute.xlu0 %3612
      %3614 = vrot.lane.b32.xlu0 %v3574, 24
      %v3615 = vpop.permute.xlu0 %3614
      %3616 = vrot.lane.b32.xlu0 %v3577, 24
      %v3617 = vpop.permute.xlu0 %3616
      %3618 = vrot.lane.b32.xlu0 %v3580, 24
      %v3619 = vpop.permute.xlu0 %3618
      %3620 = vrot.lane.b32.xlu0 %v3583, 24
      %v3621 = vpop.permute.xlu0 %3620
      %3622 = vrot.lane.b32.xlu0 %v3586, 24
      %v3623 = vpop.permute.xlu0 %3622
      %3624 = vrot.lane.b32.xlu0 %v3589, 24
      %v3625 = vpop.permute.xlu0 %3624
      %3626 = vrot.lane.b32.xlu0 %v3592, 24
      %v3627 = vpop.permute.xlu0 %3626
      %3628 = vrot.lane.b32.xlu0 %v3595, 24
      %v3629 = vpop.permute.xlu0 %3628
      %3630 = vrot.lane.b32.xlu0 %v3598, 24
      %v3631 = vpop.permute.xlu0 %3630
      %3632 = vrot.lane.b32.xlu0 %v3601, 24
      %v3633 = vpop.permute.xlu0 %3632
      %v3635 = vunpack.c.l.b16 %v2984
      %v3636 = vpack.c.b16 %v3069, %v3635
      %v3637 = vrot.slane %v3636, 1
      %v3638 = vrot.slane %v3414, 1
      %v3639 = vsel %vm1596, %v3637, %v3638
      %3640 = vrot.lane.b32.xlu0 %v3559, 28
      %v3641 = vpop.permute.xlu0 %3640
      %3642 = vrot.lane.b32.xlu0 %v3562, 28
      %v3643 = vpop.permute.xlu0 %3642
      %3644 = vrot.lane.b32.xlu0 %v3565, 28
      %v3645 = vpop.permute.xlu0 %3644
      %3646 = vrot.lane.b32.xlu0 %v3568, 28
      %v3647 = vpop.permute.xlu0 %3646
      %3648 = vrot.lane.b32.xlu0 %v3571, 28
      %v3649 = vpop.permute.xlu0 %3648
      %3650 = vrot.lane.b32.xlu0 %v3574, 28
      %v3651 = vpop.permute.xlu0 %3650
      %3652 = vrot.lane.b32.xlu0 %v3577, 28
      %v3653 = vpop.permute.xlu0 %3652
      %3654 = vrot.lane.b32.xlu0 %v3580, 28
      %v3655 = vpop.permute.xlu0 %3654
      %3656 = vrot.lane.b32.xlu0 %v3583, 28
      %v3657 = vpop.permute.xlu0 %3656
      %3658 = vrot.lane.b32.xlu0 %v3586, 28
      %v3659 = vpop.permute.xlu0 %3658
      %3660 = vrot.lane.b32.xlu0 %v3589, 28
      %v3661 = vpop.permute.xlu0 %3660
      %3662 = vrot.lane.b32.xlu0 %v3592, 28
      %v3663 = vpop.permute.xlu0 %3662
      %3664 = vrot.lane.b32.xlu0 %v3595, 28
      %v3665 = vpop.permute.xlu0 %3664
      %3666 = vrot.lane.b32.xlu0 %v3598, 28
      %v3667 = vpop.permute.xlu0 %3666
      %3668 = vrot.lane.b32.xlu0 %v3601, 28
      %v3669 = vpop.permute.xlu0 %3668
      %3670 = vrot.lane.b32.xlu0 %v3639, 28
      %v3671 = vpop.permute.xlu0 %3670
      %v3673 = vunpack.c.l.b16 %v2985
      %v3674 = vpack.c.b16 %v3106, %v3673
      %v3675 = vrot.slane %v3674, 1
      %v3676 = vrot.slane %v3461, 1
      %v3677 = vsel %vm1596, %v3675, %v3676
      %3678 = vrot.lane.b32.xlu0 %v3562, 32
      %v3679 = vpop.permute.xlu0 %3678
      %3680 = vrot.lane.b32.xlu0 %v3565, 32
      %v3681 = vpop.permute.xlu0 %3680
      %3682 = vrot.lane.b32.xlu0 %v3568, 32
      %v3683 = vpop.permute.xlu0 %3682
      %3684 = vrot.lane.b32.xlu0 %v3571, 32
      %v3685 = vpop.permute.xlu0 %3684
      %3686 = vrot.lane.b32.xlu0 %v3574, 32
      %v3687 = vpop.permute.xlu0 %3686
      %3688 = vrot.lane.b32.xlu0 %v3577, 32
      %v3689 = vpop.permute.xlu0 %3688
      %3690 = vrot.lane.b32.xlu0 %v3580, 32
      %v3691 = vpop.permute.xlu0 %3690
      %3692 = vrot.lane.b32.xlu0 %v3583, 32
      %v3693 = vpop.permute.xlu0 %3692
      %3694 = vrot.lane.b32.xlu0 %v3586, 32
      %v3695 = vpop.permute.xlu0 %3694
      %3696 = vrot.lane.b32.xlu0 %v3589, 32
      %v3697 = vpop.permute.xlu0 %3696
      %3698 = vrot.lane.b32.xlu0 %v3592, 32
      %v3699 = vpop.permute.xlu0 %3698
      %3700 = vrot.lane.b32.xlu0 %v3595, 32
      %v3701 = vpop.permute.xlu0 %3700
      %3702 = vrot.lane.b32.xlu0 %v3598, 32
      %v3703 = vpop.permute.xlu0 %3702
      %3704 = vrot.lane.b32.xlu0 %v3601, 32
      %v3705 = vpop.permute.xlu0 %3704
      %3706 = vrot.lane.b32.xlu0 %v3639, 32
      %v3707 = vpop.permute.xlu0 %3706
      %3708 = vrot.lane.b32.xlu0 %v3677, 32
      %v3709 = vpop.permute.xlu0 %3708
      %v3711 = vsel %vm1753, %v3050, %v3072
      %v3713 = vsel %vm1753, %v3051, %v3074
      %v3715 = vsel %vm1753, %v3052, %v3076
      %v3717 = vsel %vm1753, %v3053, %v3078
      %v3719 = vsel %vm1753, %v3054, %v3080
      %v3721 = vsel %vm1753, %v3055, %v3082
      %v3723 = vsel %vm1753, %v3056, %v3084
      %v3725 = vsel %vm1753, %v3057, %v3086
      %v3727 = vsel %vm1753, %v3058, %v3088
      %v3729 = vsel %vm1753, %v3059, %v3090
      %v3731 = vsel %vm1753, %v3060, %v3092
      %v3733 = vsel %vm1753, %v3061, %v3094
      %v3735 = vsel %vm1753, %v3062, %v3096
      %v3737 = vsel %vm1753, %v3063, %v3098
      %v3739 = vsel %vm1753, %v3064, %v3100
      %v3741 = vsel %vm1753, %v3065, %v3102
      %v3743 = vsel %vm1786, %v3711, %v3109
      %v3745 = vsel %vm1786, %v3713, %v3111
      %v3747 = vsel %vm1786, %v3715, %v3113
      %v3749 = vsel %vm1786, %v3717, %v3115
      %v3751 = vsel %vm1786, %v3719, %v3117
      %v3753 = vsel %vm1786, %v3721, %v3119
      %v3755 = vsel %vm1786, %v3723, %v3121
      %v3757 = vsel %vm1786, %v3725, %v3123
      %v3759 = vsel %vm1786, %v3727, %v3125
      %v3761 = vsel %vm1786, %v3729, %v3127
      %v3763 = vsel %vm1786, %v3731, %v3129
      %v3765 = vsel %vm1786, %v3733, %v3131
      %v3767 = vsel %vm1786, %v3735, %v3133
      %v3769 = vsel %vm1786, %v3737, %v3135
      %v3771 = vsel %vm1786, %v3739, %v3137
      %v3773 = vsel %vm1786, %v3741, %v3139
      %v3775 = vsel %vm1819, %v3743, %v3381
      %v3777 = vsel %vm1819, %v3745, %v3383
      %v3779 = vsel %vm1819, %v3747, %v3385
      %v3781 = vsel %vm1819, %v3749, %v3387
      %v3783 = vsel %vm1819, %v3751, %v3389
      %v3785 = vsel %vm1819, %v3753, %v3391
      %v3787 = vsel %vm1819, %v3755, %v3393
      %v3789 = vsel %vm1819, %v3757, %v3395
      %v3791 = vsel %vm1819, %v3759, %v3397
      %v3793 = vsel %vm1819, %v3761, %v3399
      %v3795 = vsel %vm1819, %v3763, %v3401
      %v3797 = vsel %vm1819, %v3765, %v3403
      %v3799 = vsel %vm1819, %v3767, %v3405
      %v3801 = vsel %vm1819, %v3769, %v3407
      %v3803 = vsel %vm1819, %v3771, %v3409
      %v3805 = vsel %vm1819, %v3773, %v3411
      %v3807 = vsel %vm1852, %v3775, %v3428
      %v3809 = vsel %vm1852, %v3777, %v3430
      %v3811 = vsel %vm1852, %v3779, %v3432
      %v3813 = vsel %vm1852, %v3781, %v3434
      %v3815 = vsel %vm1852, %v3783, %v3436
      %v3817 = vsel %vm1852, %v3785, %v3438
      %v3819 = vsel %vm1852, %v3787, %v3440
      %v3821 = vsel %vm1852, %v3789, %v3442
      %v3823 = vsel %vm1852, %v3791, %v3444
      %v3825 = vsel %vm1852, %v3793, %v3446
      %v3827 = vsel %vm1852, %v3795, %v3448
      %v3829 = vsel %vm1852, %v3797, %v3450
      %v3831 = vsel %vm1852, %v3799, %v3452
      %v3833 = vsel %vm1852, %v3801, %v3454
      %v3835 = vsel %vm1852, %v3803, %v3456
      %v3837 = vsel %vm1852, %v3805, %v3458
      %v3839 = vsel %vm1885, %v3807, %v3475
      %v3841 = vsel %vm1885, %v3809, %v3477
      %v3843 = vsel %vm1885, %v3811, %v3479
      %v3845 = vsel %vm1885, %v3813, %v3481
      %v3847 = vsel %vm1885, %v3815, %v3483
      %v3849 = vsel %vm1885, %v3817, %v3485
      %v3851 = vsel %vm1885, %v3819, %v3487
      %v3853 = vsel %vm1885, %v3821, %v3489
      %v3855 = vsel %vm1885, %v3823, %v3491
      %v3857 = vsel %vm1885, %v3825, %v3493
      %v3859 = vsel %vm1885, %v3827, %v3495
      %v3861 = vsel %vm1885, %v3829, %v3497
      %v3863 = vsel %vm1885, %v3831, %v3499
      %v3865 = vsel %vm1885, %v3833, %v3501
      %v3867 = vsel %vm1885, %v3835, %v3503
      %v3869 = vsel %vm1885, %v3837, %v3505
      %v3871 = vsel %vm1918, %v3839, %v3603
      %v3873 = vsel %vm1918, %v3841, %v3605
      %v3875 = vsel %vm1918, %v3843, %v3607
      %v3877 = vsel %vm1918, %v3845, %v3609
      %v3879 = vsel %vm1918, %v3847, %v3611
      %v3881 = vsel %vm1918, %v3849, %v3613
      %v3883 = vsel %vm1918, %v3851, %v3615
      %v3885 = vsel %vm1918, %v3853, %v3617
      %v3887 = vsel %vm1918, %v3855, %v3619
      %v3889 = vsel %vm1918, %v3857, %v3621
      %v3891 = vsel %vm1918, %v3859, %v3623
      %v3893 = vsel %vm1918, %v3861, %v3625
      %v3895 = vsel %vm1918, %v3863, %v3627
      %v3897 = vsel %vm1918, %v3865, %v3629
      %v3899 = vsel %vm1918, %v3867, %v3631
      %v3901 = vsel %vm1918, %v3869, %v3633
      %v3903 = vsel %vm1951, %v3871, %v3641
      %v3905 = vsel %vm1951, %v3873, %v3643
      %v3907 = vsel %vm1951, %v3875, %v3645
      %v3909 = vsel %vm1951, %v3877, %v3647
      %v3911 = vsel %vm1951, %v3879, %v3649
      %v3913 = vsel %vm1951, %v3881, %v3651
      %v3915 = vsel %vm1951, %v3883, %v3653
      %v3917 = vsel %vm1951, %v3885, %v3655
      %v3919 = vsel %vm1951, %v3887, %v3657
      %v3921 = vsel %vm1951, %v3889, %v3659
      %v3923 = vsel %vm1951, %v3891, %v3661
      %v3925 = vsel %vm1951, %v3893, %v3663
      %v3927 = vsel %vm1951, %v3895, %v3665
      %v3929 = vsel %vm1951, %v3897, %v3667
      %v3931 = vsel %vm1951, %v3899, %v3669
      %v3933 = vsel %vm1951, %v3901, %v3671
      %v3935 = vsel %vm1984, %v3903, %v3679
      %v3937 = vsel %vm1984, %v3905, %v3681
      %v3939 = vsel %vm1984, %v3907, %v3683
      %v3941 = vsel %vm1984, %v3909, %v3685
      %v3943 = vsel %vm1984, %v3911, %v3687
      %v3945 = vsel %vm1984, %v3913, %v3689
      %v3947 = vsel %vm1984, %v3915, %v3691
      %v3949 = vsel %vm1984, %v3917, %v3693
      %v3951 = vsel %vm1984, %v3919, %v3695
      %v3953 = vsel %vm1984, %v3921, %v3697
      %v3955 = vsel %vm1984, %v3923, %v3699
      %v3957 = vsel %vm1984, %v3925, %v3701
      %v3959 = vsel %vm1984, %v3927, %v3703
      %v3961 = vsel %vm1984, %v3929, %v3705
      %v3963 = vsel %vm1984, %v3931, %v3707
      %v3965 = vsel %vm1984, %v3933, %v3709
      %v3966 = vsel %vm2017, %v3935, 0
      %v3968 = vsel %vm2017, %v3937, 0
      %v3970 = vsel %vm2017, %v3939, 0
      %v3972 = vsel %vm2017, %v3941, 0
      %v3974 = vsel %vm2017, %v3943, 0
      %v3976 = vsel %vm2017, %v3945, 0
      %v3978 = vsel %vm2017, %v3947, 0
      %v3980 = vsel %vm2017, %v3949, 0
      %v3982 = vsel %vm2017, %v3951, 0
      %v3984 = vsel %vm2017, %v3953, 0
      %v3986 = vsel %vm2017, %v3955, 0
      %v3988 = vsel %vm2017, %v3957, 0
      %v3990 = vsel %vm2017, %v3959, 0
      %v3992 = vsel %vm2017, %v3961, 0
      %v3994 = vsel %vm2017, %v3963, 0
      %v3996 = vsel %vm2017, %v3965, 0
      %v3998 = vld [vmem:[%s4] sm:$0xf]
      %v3999 = vld [vmem:[%s4 + $0x4] sm:$0xf]
      %v4000 = vld [vmem:[%s4 + $0x8] sm:$0xf]
      %v4001 = vld [vmem:[%s4 + $0xc] sm:$0xf]
      %v4002 = vld [vmem:[%s4 + $0x10] sm:$0xf]
      %v4003 = vld [vmem:[%s4 + $0x14] sm:$0xf]
      %v4004 = vld [vmem:[%s4 + $0x18] sm:$0xf]
      %v4005 = vld [vmem:[%s4 + $0x1c] sm:$0xf]
      %v4006 = vld [vmem:[%s4 + $0x20] sm:$0xf]
      %v4007 = vld [vmem:[%s4 + $0x24] sm:$0xf]
      %v4008 = vld [vmem:[%s4 + $0x28] sm:$0xf]
      %v4009 = vld [vmem:[%s4 + $0x2c] sm:$0xf]
      %v4010 = vld [vmem:[%s4 + $0x30] sm:$0xf]
      %v4011 = vld [vmem:[%s4 + $0x34] sm:$0xf]
      %v4012 = vld [vmem:[%s4 + $0x38] sm:$0xf]
      %v4013 = vld [vmem:[%s4 + $0x3c] sm:$0xf]
      %v4030 = vunpack.c.l.b16 %v3998
      %v4031 = vunpack.c.l.b16 %v3999
      %v4032 = vunpack.c.l.b16 %v4000
      %v4033 = vunpack.c.l.b16 %v4001
      %v4034 = vunpack.c.l.b16 %v4002
      %v4035 = vunpack.c.l.b16 %v4003
      %v4036 = vunpack.c.l.b16 %v4004
      %v4037 = vunpack.c.l.b16 %v4005
      %v4038 = vunpack.c.l.b16 %v4006
      %v4039 = vunpack.c.l.b16 %v4007
      %v4040 = vunpack.c.l.b16 %v4008
      %v4041 = vunpack.c.l.b16 %v4009
      %v4042 = vunpack.c.l.b16 %v4010
      %v4043 = vunpack.c.l.b16 %v4011
      %v4044 = vunpack.c.l.b16 %v4012
      %v4045 = vunpack.c.l.b16 %v4013
      %v4046 = vpack.c.b16 %v4031, %v4030
      %v4047 = vpack.c.b16 %v4033, %v4032
      %v4048 = vpack.c.b16 %v4035, %v4034
      %v4049 = vpack.c.b16 %v4037, %v4036
      %v4050 = vpack.c.b16 %v4039, %v4038
      %v4051 = vpack.c.b16 %v4041, %v4040
      %v4052 = vpack.c.b16 %v4043, %v4042
      %v4053 = vpack.c.b16 %v4045, %v4044
      %4062 = vmatprep.subr.bf16.mxu0 0
      %4063 = vmatpush1.bf16.msra.mxu0 %v4046
      %4064 = vmatprep.subr.bf16.mxu0 0
      %4065 = vmatpush1.bf16.msra.mxu0 %v4047
      %4066 = vmatprep.subr.bf16.mxu0 0
      %4067 = vmatpush1.bf16.msra.mxu0 %v4048
      %4068 = vmatprep.subr.bf16.mxu0 0
      %4069 = vmatpush1.bf16.msra.mxu0 %v4049
      %4070 = vmatprep.subr.bf16.mxu0 0
      %4071 = vmatpush1.bf16.msra.mxu0 %v4050
      %4072 = vmatprep.subr.bf16.mxu0 0
      %4073 = vmatpush1.bf16.msra.mxu0 %v4051
      %4074 = vmatprep.subr.bf16.mxu0 0
      %4075 = vmatpush1.bf16.msra.mxu0 %v4052
      %4076 = vmatprep.subr.bf16.mxu0 0
      %4077 = vmatpush1.bf16.msra.mxu0 %v4053
      %4078 = vmatprep.subr.bf16.mxu0 0
      %4079 = vmatpush1.bf16.msra.mxu0 0
      %4080 = vmatprep.subr.bf16.mxu0 0
      %4081 = vmatpush1.bf16.msra.mxu0 0
      %4082 = vmatprep.subr.bf16.mxu0 0
      %4083 = vmatpush1.bf16.msra.mxu0 0
      %4084 = vmatprep.subr.bf16.mxu0 0
      %4085 = vmatpush1.bf16.msra.mxu0 0
      %4086 = vmatprep.subr.bf16.mxu0 0
      %4087 = vmatpush1.bf16.msra.mxu0 0
      %4088 = vmatprep.subr.bf16.mxu0 0
      %4089 = vmatpush1.bf16.msra.mxu0 0
      %4090 = vmatprep.subr.bf16.mxu0 0
      %4091 = vmatpush1.bf16.msra.mxu0 0
      %4092 = vmatprep.subr.bf16.mxu0 0
      %4093 = vmatpush1.bf16.msra.mxu0 0
      %4094 = vmatprep.mubr.bf16.mxu0 0
      %4095 = vmatmul.mubr.bf16.gmra.mrb[0].mxu0 %v3966
      %v4096 = vpop.f32.mrb[0].mxu0
      %v4097 = vadd.f32 0.0, %v4096
      %v4098 = vpop.f32.mrb[0].mxu0
      %v4099 = vpop.f32.mrb[0].mxu0
      %v4100 = vadd.f32 0.0, %v4099
      %v4101 = vpop.f32.mrb[0].mxu0
      %4102 = vmatprep.mubr.bf16.mxu0 0
      %4103 = vmatmul.mubr.bf16.gmra.mrb[0].mxu0 %v3968
      %v4104 = vpop.f32.mrb[0].mxu0
      %v4105 = vadd.f32 0.0, %v4104
      %v4106 = vpop.f32.mrb[0].mxu0
      %v4107 = vpop.f32.mrb[0].mxu0
      %v4108 = vadd.f32 0.0, %v4107
      %v4109 = vpop.f32.mrb[0].mxu0
      %4110 = vmatprep.mubr.bf16.mxu0 0
      %4111 = vmatmul.mubr.bf16.gmra.mrb[0].mxu0 %v3970
      %v4112 = vpop.f32.mrb[0].mxu0
      %v4113 = vadd.f32 0.0, %v4112
      %v4114 = vpop.f32.mrb[0].mxu0
      %v4115 = vpop.f32.mrb[0].mxu0
      %v4116 = vadd.f32 0.0, %v4115
      %v4117 = vpop.f32.mrb[0].mxu0
      %4118 = vmatprep.mubr.bf16.mxu0 0
      %4119 = vmatmul.mubr.bf16.gmra.mrb[0].mxu0 %v3972
      %v4120 = vpop.f32.mrb[0].mxu0
      %v4121 = vadd.f32 0.0, %v4120
      %v4122 = vpop.f32.mrb[0].mxu0
      %v4123 = vpop.f32.mrb[0].mxu0
      %v4124 = vadd.f32 0.0, %v4123
      %v4125 = vpop.f32.mrb[0].mxu0
      %4126 = vmatprep.mubr.bf16.mxu0 0
      %4127 = vmatmul.mubr.bf16.gmra.mrb[0].mxu0 %v3974
      %v4128 = vpop.f32.mrb[0].mxu0
      %v4129 = vadd.f32 0.0, %v4128
      %v4130 = vpop.f32.mrb[0].mxu0
      %v4131 = vpop.f32.mrb[0].mxu0
      %v4132 = vadd.f32 0.0, %v4131
      %v4133 = vpop.f32.mrb[0].mxu0
      %4134 = vmatprep.mubr.bf16.mxu0 0
      %4135 = vmatmul.mubr.bf16.gmra.mrb[0].mxu0 %v3976
      %v4136 = vpop.f32.mrb[0].mxu0
      %v4137 = vadd.f32 0.0, %v4136
      %v4138 = vpop.f32.mrb[0].mxu0
      %v4139 = vpop.f32.mrb[0].mxu0
      %v4140 = vadd.f32 0.0, %v4139
      %v4141 = vpop.f32.mrb[0].mxu0
      %4142 = vmatprep.mubr.bf16.mxu0 0
      %4143 = vmatmul.mubr.bf16.gmra.mrb[0].mxu0 %v3978
      %v4144 = vpop.f32.mrb[0].mxu0
      %v4145 = vadd.f32 0.0, %v4144
      %v4146 = vpop.f32.mrb[0].mxu0
      %v4147 = vpop.f32.mrb[0].mxu0
      %v4148 = vadd.f32 0.0, %v4147
      %v4149 = vpop.f32.mrb[0].mxu0
      %4150 = vmatprep.mubr.bf16.mxu0 0
      %4151 = vmatmul.mubr.bf16.gmra.mrb[0].mxu0 %v3980
      %v4152 = vpop.f32.mrb[0].mxu0
      %v4153 = vadd.f32 0.0, %v4152
      %v4154 = vpop.f32.mrb[0].mxu0
      %v4155 = vpop.f32.mrb[0].mxu0
      %v4156 = vadd.f32 0.0, %v4155
      %v4157 = vpop.f32.mrb[0].mxu0
      %4158 = vmatprep.mubr.bf16.mxu0 0
      %4159 = vmatmul.mubr.bf16.gmra.mrb[0].mxu0 %v3982
      %v4160 = vpop.f32.mrb[0].mxu0
      %v4161 = vadd.f32 0.0, %v4160
      %v4162 = vpop.f32.mrb[0].mxu0
      %v4163 = vpop.f32.mrb[0].mxu0
      %v4164 = vadd.f32 0.0, %v4163
      %v4165 = vpop.f32.mrb[0].mxu0
      %4166 = vmatprep.mubr.bf16.mxu0 0
      %4167 = vmatmul.mubr.bf16.gmra.mrb[0].mxu0 %v3984
      %v4168 = vpop.f32.mrb[0].mxu0
      %v4169 = vadd.f32 0.0, %v4168
      %v4170 = vpop.f32.mrb[0].mxu0
      %v4171 = vpop.f32.mrb[0].mxu0
      %v4172 = vadd.f32 0.0, %v4171
      %v4173 = vpop.f32.mrb[0].mxu0
      %4174 = vmatprep.mubr.bf16.mxu0 0
      %4175 = vmatmul.mubr.bf16.gmra.mrb[0].mxu0 %v3986
      %v4176 = vpop.f32.mrb[0].mxu0
      %v4177 = vadd.f32 0.0, %v4176
      %v4178 = vpop.f32.mrb[0].mxu0
      %v4179 = vpop.f32.mrb[0].mxu0
      %v4180 = vadd.f32 0.0, %v4179
      %v4181 = vpop.f32.mrb[0].mxu0
      %4182 = vmatprep.mubr.bf16.mxu0 0
      %4183 = vmatmul.mubr.bf16.gmra.mrb[0].mxu0 %v3988
      %v4184 = vpop.f32.mrb[0].mxu0
      %v4185 = vadd.f32 0.0, %v4184
      %v4186 = vpop.f32.mrb[0].mxu0
      %v4187 = vpop.f32.mrb[0].mxu0
      %v4188 = vadd.f32 0.0, %v4187
      %v4189 = vpop.f32.mrb[0].mxu0
      %4190 = vmatprep.mubr.bf16.mxu0 0
      %4191 = vmatmul.mubr.bf16.gmra.mrb[0].mxu0 %v3990
      %v4192 = vpop.f32.mrb[0].mxu0
      %v4193 = vadd.f32 0.0, %v4192
      %v4194 = vpop.f32.mrb[0].mxu0
      %v4195 = vpop.f32.mrb[0].mxu0
      %v4196 = vadd.f32 0.0, %v4195
      %v4197 = vpop.f32.mrb[0].mxu0
      %4198 = vmatprep.mubr.bf16.mxu0 0
      %4199 = vmatmul.mubr.bf16.gmra.mrb[0].mxu0 %v3992
      %v4200 = vpop.f32.mrb[0].mxu0
      %v4201 = vadd.f32 0.0, %v4200
      %v4202 = vpop.f32.mrb[0].mxu0
      %v4203 = vpop.f32.mrb[0].mxu0
      %v4204 = vadd.f32 0.0, %v4203
      %v4205 = vpop.f32.mrb[0].mxu0
      %4206 = vmatprep.mubr.bf16.mxu0 0
      %4207 = vmatmul.mubr.bf16.gmra.mrb[0].mxu0 %v3994
      %v4208 = vpop.f32.mrb[0].mxu0
      %v4209 = vadd.f32 0.0, %v4208
      %v4210 = vpop.f32.mrb[0].mxu0
      %v4211 = vpop.f32.mrb[0].mxu0
      %v4212 = vadd.f32 0.0, %v4211
      %v4213 = vpop.f32.mrb[0].mxu0
      %4214 = vmatprep.mubr.bf16.mxu0 0
      %4215 = vmatmul.mubr.bf16.gmra.mrb[0].mxu0 %v3996
      %v4216 = vpop.f32.mrb[0].mxu0
      %v4217 = vadd.f32 0.0, %v4216
      %v4218 = vpop.f32.mrb[0].mxu0
      %v4219 = vpop.f32.mrb[0].mxu0
      %v4220 = vadd.f32 0.0, %v4219
      %v4221 = vpop.f32.mrb[0].mxu0
      %4222 = vdwg.mxu0
      %v4223 = vld [vmem:[%s5] sm:$0x1]
      %v4225 = vlaneseq
      %v4226 = vshrl.u32 %v4225, 7
      %v4227 = vsub.s32 0, %v4226
      %v4228 = vrot.slane %v4223, %v4227
      %v4230 = vmul.f32 %v4097, %v4228
      %v4231 = vmul.f32 %v4100, %v4228
      %v4232 = vmul.f32 %v4105, %v4228
      %v4233 = vmul.f32 %v4108, %v4228
      %v4234 = vmul.f32 %v4113, %v4228
      %v4235 = vmul.f32 %v4116, %v4228
      %v4236 = vmul.f32 %v4121, %v4228
      %v4237 = vmul.f32 %v4124, %v4228
      %v4238 = vmul.f32 %v4129, %v4228
      %v4239 = vmul.f32 %v4132, %v4228
      %v4240 = vmul.f32 %v4137, %v4228
      %v4241 = vmul.f32 %v4140, %v4228
      %v4242 = vmul.f32 %v4145, %v4228
      %v4243 = vmul.f32 %v4148, %v4228
      %v4244 = vmul.f32 %v4153, %v4228
      %v4245 = vmul.f32 %v4156, %v4228
      %v4246 = vmul.f32 %v4161, %v4228
      %v4247 = vmul.f32 %v4164, %v4228
      %v4248 = vmul.f32 %v4169, %v4228
      %v4249 = vmul.f32 %v4172, %v4228
      %v4250 = vmul.f32 %v4177, %v4228
      %v4251 = vmul.f32 %v4180, %v4228
      %v4252 = vmul.f32 %v4185, %v4228
      %v4253 = vmul.f32 %v4188, %v4228
      %v4254 = vmul.f32 %v4193, %v4228
      %v4255 = vmul.f32 %v4196, %v4228
      %v4256 = vmul.f32 %v4201, %v4228
      %v4257 = vmul.f32 %v4204, %v4228
      %v4258 = vmul.f32 %v4209, %v4228
      %v4259 = vmul.f32 %v4212, %v4228
      %v4260 = vmul.f32 %v4217, %v4228
      %v4261 = vmul.f32 %v4220, %v4228
      %v4262 = vld [vmem:[%s6] sm:$0x1]
      %v4264 = vlaneseq
      %v4265 = vshrl.u32 %v4264, 7
      %v4266 = vsub.s32 0, %v4265
      %v4267 = vrot.slane %v4262, %v4266
      %v4269 = vadd.f32 %v4230, %v4267
      %v4270 = vadd.f32 %v4231, %v4267
      %v4271 = vadd.f32 %v4232, %v4267
      %v4272 = vadd.f32 %v4233, %v4267
      %v4273 = vadd.f32 %v4234, %v4267
      %v4274 = vadd.f32 %v4235, %v4267
      %v4275 = vadd.f32 %v4236, %v4267
      %v4276 = vadd.f32 %v4237, %v4267
      %v4277 = vadd.f32 %v4238, %v4267
      %v4278 = vadd.f32 %v4239, %v4267
      %v4279 = vadd.f32 %v4240, %v4267
      %v4280 = vadd.f32 %v4241, %v4267
      %v4281 = vadd.f32 %v4242, %v4267
      %v4282 = vadd.f32 %v4243, %v4267
      %v4283 = vadd.f32 %v4244, %v4267
      %v4284 = vadd.f32 %v4245, %v4267
      %v4285 = vadd.f32 %v4246, %v4267
      %v4286 = vadd.f32 %v4247, %v4267
      %v4287 = vadd.f32 %v4248, %v4267
      %v4288 = vadd.f32 %v4249, %v4267
      %v4289 = vadd.f32 %v4250, %v4267
      %v4290 = vadd.f32 %v4251, %v4267
      %v4291 = vadd.f32 %v4252, %v4267
      %v4292 = vadd.f32 %v4253, %v4267
      %v4293 = vadd.f32 %v4254, %v4267
      %v4294 = vadd.f32 %v4255, %v4267
      %v4295 = vadd.f32 %v4256, %v4267
      %v4296 = vadd.f32 %v4257, %v4267
      %v4297 = vadd.f32 %v4258, %v4267
      %v4298 = vadd.f32 %v4259, %v4267
      %v4299 = vadd.f32 %v4260, %v4267
      %v4300 = vadd.f32 %v4261, %v4267
      %v4301 = vld [vmem:[%s273] sm:$0xff]
      %v4302 = vld [vmem:[%s273 + $0x8] sm:$0xff]
      %v4303 = vld [vmem:[%s273 + $0x10] sm:$0xff]
      %v4304 = vld [vmem:[%s273 + $0x18] sm:$0xff]
      %v4305 = vld [vmem:[%s273 + $0x20] sm:$0xff]
      %v4306 = vld [vmem:[%s273 + $0x28] sm:$0xff]
      %v4307 = vld [vmem:[%s273 + $0x30] sm:$0xff]
      %v4308 = vld [vmem:[%s273 + $0x38] sm:$0xff]
      %v4309 = vld [vmem:[%s273 + $0x40] sm:$0xff]
      %v4310 = vld [vmem:[%s273 + $0x48] sm:$0xff]
      %v4311 = vld [vmem:[%s273 + $0x50] sm:$0xff]
      %v4312 = vld [vmem:[%s273 + $0x58] sm:$0xff]
      %v4313 = vld [vmem:[%s273 + $0x60] sm:$0xff]
      %v4314 = vld [vmem:[%s273 + $0x68] sm:$0xff]
      %v4315 = vld [vmem:[%s273 + $0x70] sm:$0xff]
      %v4316 = vld [vmem:[%s273 + $0x78] sm:$0xff]
      %v4317 = vld [vmem:[%s273 + $0x80] sm:$0xff]
      %v4318 = vld [vmem:[%s273 + $0x88] sm:$0xff]
      %v4319 = vld [vmem:[%s273 + $0x90] sm:$0xff]
      %v4320 = vld [vmem:[%s273 + $0x98] sm:$0xff]
      %v4321 = vld [vmem:[%s273 + $0xa0] sm:$0xff]
      %v4322 = vld [vmem:[%s273 + $0xa8] sm:$0xff]
      %v4323 = vld [vmem:[%s273 + $0xb0] sm:$0xff]
      %v4324 = vld [vmem:[%s273 + $0xb8] sm:$0xff]
      %v4325 = vld [vmem:[%s273 + $0xc0] sm:$0xff]
      %v4326 = vld [vmem:[%s273 + $0xc8] sm:$0xff]
      %v4327 = vld [vmem:[%s273 + $0xd0] sm:$0xff]
      %v4328 = vld [vmem:[%s273 + $0xd8] sm:$0xff]
      %v4329 = vld [vmem:[%s273 + $0xe0] sm:$0xff]
      %v4330 = vld [vmem:[%s273 + $0xe8] sm:$0xff]
      %v4331 = vld [vmem:[%s273 + $0xf0] sm:$0xff]
      %v4332 = vld [vmem:[%s273 + $0xf8] sm:$0xff]
      %v4333 = vsel %vm1753, %v4301, 0.0
      %v4334 = vsel %vm1753, %v4302, 0.0
      %v4335 = vsel %vm1753, %v4303, 0.0
      %v4336 = vsel %vm1753, %v4304, 0.0
      %v4337 = vsel %vm1753, %v4305, 0.0
      %v4338 = vsel %vm1753, %v4306, 0.0
      %v4339 = vsel %vm1753, %v4307, 0.0
      %v4340 = vsel %vm1753, %v4308, 0.0
      %v4341 = vsel %vm1753, %v4309, 0.0
      %v4342 = vsel %vm1753, %v4310, 0.0
      %v4343 = vsel %vm1753, %v4311, 0.0
      %v4344 = vsel %vm1753, %v4312, 0.0
      %v4345 = vsel %vm1753, %v4313, 0.0
      %v4346 = vsel %vm1753, %v4314, 0.0
      %v4347 = vsel %vm1753, %v4315, 0.0
      %v4348 = vsel %vm1753, %v4316, 0.0
      %v4349 = vsel %vm1753, %v4317, 0.0
      %v4350 = vsel %vm1753, %v4318, 0.0
      %v4351 = vsel %vm1753, %v4319, 0.0
      %v4352 = vsel %vm1753, %v4320, 0.0
      %v4353 = vsel %vm1753, %v4321, 0.0
      %v4354 = vsel %vm1753, %v4322, 0.0
      %v4355 = vsel %vm1753, %v4323, 0.0
      %v4356 = vsel %vm1753, %v4324, 0.0
      %v4357 = vsel %vm1753, %v4325, 0.0
      %v4358 = vsel %vm1753, %v4326, 0.0
      %v4359 = vsel %vm1753, %v4327, 0.0
      %v4360 = vsel %vm1753, %v4328, 0.0
      %v4361 = vsel %vm1753, %v4329, 0.0
      %v4362 = vsel %vm1753, %v4330, 0.0
      %v4363 = vsel %vm1753, %v4331, 0.0
      %v4364 = vsel %vm1753, %v4332, 0.0
      %v4365 = vadd.f32 %v4269, %v4333
      %v4366 = vadd.f32 %v4270, %v4334
      %v4367 = vadd.f32 %v4271, %v4335
      %v4368 = vadd.f32 %v4272, %v4336
      %v4369 = vadd.f32 %v4273, %v4337
      %v4370 = vadd.f32 %v4274, %v4338
      %v4371 = vadd.f32 %v4275, %v4339
      %v4372 = vadd.f32 %v4276, %v4340
      %v4373 = vadd.f32 %v4277, %v4341
      %v4374 = vadd.f32 %v4278, %v4342
      %v4375 = vadd.f32 %v4279, %v4343
      %v4376 = vadd.f32 %v4280, %v4344
      %v4377 = vadd.f32 %v4281, %v4345
      %v4378 = vadd.f32 %v4282, %v4346
      %v4379 = vadd.f32 %v4283, %v4347
      %v4380 = vadd.f32 %v4284, %v4348
      %v4381 = vadd.f32 %v4285, %v4349
      %v4382 = vadd.f32 %v4286, %v4350
      %v4383 = vadd.f32 %v4287, %v4351
      %v4384 = vadd.f32 %v4288, %v4352
      %v4385 = vadd.f32 %v4289, %v4353
      %v4386 = vadd.f32 %v4290, %v4354
      %v4387 = vadd.f32 %v4291, %v4355
      %v4388 = vadd.f32 %v4292, %v4356
      %v4389 = vadd.f32 %v4293, %v4357
      %v4390 = vadd.f32 %v4294, %v4358
      %v4391 = vadd.f32 %v4295, %v4359
      %v4392 = vadd.f32 %v4296, %v4360
      %v4393 = vadd.f32 %v4297, %v4361
      %v4394 = vadd.f32 %v4298, %v4362
      %v4395 = vadd.f32 %v4299, %v4363
      %v4396 = vadd.f32 %v4300, %v4364
      %v4397 = vmax.f32 %v4365, 0.0
      %v4398 = vmax.f32 %v4366, 0.0
      %v4399 = vmax.f32 %v4367, 0.0
      %v4400 = vmax.f32 %v4368, 0.0
      %v4401 = vmax.f32 %v4369, 0.0
      %v4402 = vmax.f32 %v4370, 0.0
      %v4403 = vmax.f32 %v4371, 0.0
      %v4404 = vmax.f32 %v4372, 0.0
      %v4405 = vmax.f32 %v4373, 0.0
      %v4406 = vmax.f32 %v4374, 0.0
      %v4407 = vmax.f32 %v4375, 0.0
      %v4408 = vmax.f32 %v4376, 0.0
      %v4409 = vmax.f32 %v4377, 0.0
      %v4410 = vmax.f32 %v4378, 0.0
      %v4411 = vmax.f32 %v4379, 0.0
      %v4412 = vmax.f32 %v4380, 0.0
      %v4413 = vmax.f32 %v4381, 0.0
      %v4414 = vmax.f32 %v4382, 0.0
      %v4415 = vmax.f32 %v4383, 0.0
      %v4416 = vmax.f32 %v4384, 0.0
      %v4417 = vmax.f32 %v4385, 0.0
      %v4418 = vmax.f32 %v4386, 0.0
      %v4419 = vmax.f32 %v4387, 0.0
      %v4420 = vmax.f32 %v4388, 0.0
      %v4421 = vmax.f32 %v4389, 0.0
      %v4422 = vmax.f32 %v4390, 0.0
      %v4423 = vmax.f32 %v4391, 0.0
      %v4424 = vmax.f32 %v4392, 0.0
      %v4425 = vmax.f32 %v4393, 0.0
      %v4426 = vmax.f32 %v4394, 0.0
      %v4427 = vmax.f32 %v4395, 0.0
      %v4428 = vmax.f32 %v4396, 0.0
      %4429 = vst [vmem:[%s278] sm:$0xff] %v4397
      %4430 = vst [vmem:[%s278 + $0x8] sm:$0xff] %v4398
      %4431 = vst [vmem:[%s278 + $0x10] sm:$0xff] %v4399
      %4432 = vst [vmem:[%s278 + $0x18] sm:$0xff] %v4400
      %4433 = vst [vmem:[%s278 + $0x20] sm:$0xff] %v4401
      %4434 = vst [vmem:[%s278 + $0x28] sm:$0xff] %v4402
      %4435 = vst [vmem:[%s278 + $0x30] sm:$0xff] %v4403
      %4436 = vst [vmem:[%s278 + $0x38] sm:$0xff] %v4404
      %4437 = vst [vmem:[%s278 + $0x40] sm:$0xff] %v4405
      %4438 = vst [vmem:[%s278 + $0x48] sm:$0xff] %v4406
      %4439 = vst [vmem:[%s278 + $0x50] sm:$0xff] %v4407
      %4440 = vst [vmem:[%s278 + $0x58] sm:$0xff] %v4408
      %4441 = vst [vmem:[%s278 + $0x60] sm:$0xff] %v4409
      %4442 = vst [vmem:[%s278 + $0x68] sm:$0xff] %v4410
      %4443 = vst [vmem:[%s278 + $0x70] sm:$0xff] %v4411
      %4444 = vst [vmem:[%s278 + $0x78] sm:$0xff] %v4412
      %4445 = vst [vmem:[%s278 + $0x80] sm:$0xff] %v4413
      %4446 = vst [vmem:[%s278 + $0x88] sm:$0xff] %v4414
      %4447 = vst [vmem:[%s278 + $0x90] sm:$0xff] %v4415
      %4448 = vst [vmem:[%s278 + $0x98] sm:$0xff] %v4416
      %4449 = vst [vmem:[%s278 + $0xa0] sm:$0xff] %v4417
      %4450 = vst [vmem:[%s278 + $0xa8] sm:$0xff] %v4418
      %4451 = vst [vmem:[%s278 + $0xb0] sm:$0xff] %v4419
      %4452 = vst [vmem:[%s278 + $0xb8] sm:$0xff] %v4420
      %4453 = vst [vmem:[%s278 + $0xc0] sm:$0xff] %v4421
      %4454 = vst [vmem:[%s278 + $0xc8] sm:$0xff] %v4422
      %4455 = vst [vmem:[%s278 + $0xd0] sm:$0xff] %v4423
      %4456 = vst [vmem:[%s278 + $0xd8] sm:$0xff] %v4424
      %4457 = vst [vmem:[%s278 + $0xe0] sm:$0xff] %v4425
      %4458 = vst [vmem:[%s278 + $0xe8] sm:$0xff] %v4426
      %4459 = vst [vmem:[%s278 + $0xf0] sm:$0xff] %v4427
      %4460 = vst [vmem:[%s278 + $0xf8] sm:$0xff] %v4428
      %p4461 = scmp.lt.s32.totalorder %s18, 1
      %s4462 = scalar_select %p4461, %s18, 1
      %s4463 = smul.addr %s4462, 32
      %s4464 = smul.addr %s4463, 8
      %s4465 = scalar_lea.vmem %s7, %s4464
      // Predicated region
      $region49: #{basic_block_pallas.1} parent=47 // pred_check
        %p4466 = pneg %p188
      $region50: #{basic_block_pallas.1} parent=47 // pred_check_branch
        %4468 = sbr.rel (%p4466) target = $region52
      $region51: #{basic_block_pallas.1} parent=47 // pred_region
        _
      $region52: #{basic_block_pallas.1} parent=47 // pred_fallthru
        _
    $region48: #{basic_block_pallas.1} parent=5 // pred_fallthru
      _
    %p4469 = scmp.le.s32.totalorder 2, %s13
    // Predicated region
    $region53: #{basic_block_pallas.1} parent=5 // pred_check
      %p4470 = pneg %p4469
    $region54: #{basic_block_pallas.1} parent=5 // pred_check_branch
      %4472 = sbr.rel (%p4470) target = $region56
    $region55: #{basic_block_pallas.1} parent=5 // pred_region
      %s4473 = ssub.s32 %s13, 2
      // Predicated region
      $region57: #{basic_block_pallas.1} parent=55 // pred_check
        %p4474 = pneg %p194
      $region58: #{basic_block_pallas.1} parent=55 // pred_check_branch
        %4476 = sbr.rel (%p4474) target = $region60
      $region59: #{basic_block_pallas.1} parent=55 // pred_region
        %p4477 = scmp.lt.s32.totalorder %s19, 1
        %s4478 = scalar_select %p4477, %s19, 1
        %s4479 = smul.addr %s4478, 32
        %s4480 = smul.addr %s4479, 8
        %s4481 = scalar_lea.vmem %s7, %s4480
      $region60: #{basic_block_pallas.1} parent=55 // pred_fallthru
        _
    $region56: #{basic_block_pallas.1} parent=5 // pred_fallthru
      _
  $region6: #{basic_block_pallas.1} parent=0 // loop_footer
    %s17 = sadd.s32 1, %s13
  $region7: #{basic_block_pallas.1} parent=0 // loop_footer_branch
    %12 = sbr.rel target = $region3
  $region8: #{basic_block_pallas.1} parent=0 // loop_exit
    _

</llo_original>
